<compile_context>
chip_gen: v6e
topology: v6e:2x2x1
jax: 0.10.0
libtpu: 0.0.40
codegen_flags: <defaults>
</compile_context>

<pallas_src>
import jax
import jax.numpy as jnp
from jax.experimental import pallas as pl
from jax.experimental.pallas import tpu as pltpu

# (in_features, out_features) for fc1..fc10, matching the PyTorch module.
LAYER_DIMS = [
    (3 * 32 * 32, 100),
    (100, 200),
    (200, 300),
    (300, 300),
    (300, 200),
    (200, 300),
    (300, 50),
    (50, 75),
    (75, 100),
    (100, 10),
]
NUM_LAYERS = len(LAYER_DIMS)


def _round_up(x, m):
    return (x + m - 1) // m * m


# Padded (lane-aligned) dims used inside the kernel.
PADDED_DIMS = [(_round_up(i, 128), _round_up(o, 128)) for i, o in LAYER_DIMS]
IN_PAD = PADDED_DIMS[0][0]      # 3072 (already a multiple of 128)
OUT_PAD = PADDED_DIMS[-1][1]    # 128
OUT_TRUE = LAYER_DIMS[-1][1]    # 10


def dnn2_kernel(x_ref, *refs):
    """Fused forward: 10 x (bf16 matmul w/ f32 accum + f32 bias), ReLU after 1..9.

    refs = (w1, b1, ..., w10, b10, out_ref).  Weights are bf16 (in_pad, out_pad),
    biases are f32 (1, out_pad), x tile is f32 (TB, 3072) -> cast to bf16 in-kernel.
    """
    out_ref = refs[-1]
    param_refs = refs[:-1]

    # Cast to bf16 inside the kernel (VPU, hidden under input DMA); avoids a
    # separate f32->bf16 XLA pass over the input in HBM.
    h = x_ref[...].astype(jnp.bfloat16)  # (TB, IN_PAD)
    for layer in range(NUM_LAYERS):
        w = param_refs[2 * layer][...]          # bf16 (in_pad, out_pad)
        b = param_refs[2 * layer + 1][...]      # f32  (1, out_pad)
        acc = jnp.dot(h, w, preferred_element_type=jnp.float32) + b
        if layer < NUM_LAYERS - 1:
            h = jnp.maximum(acc, 0.0).astype(jnp.bfloat16)  # ReLU, back to bf16 for MXU
        else:
            h = acc
        # Dropout(p=0.25) is identity in eval mode -> no-op.
    out_ref[...] = h.astype(out_ref.dtype)


@jax.jit
def dnn2_forward(x_nchw, padded_params):
    """x_nchw: (B, 3, 32, 32) float32; padded_params: [w1,b1,...,w10,b10] (padded/bf16)."""
    B = x_nchw.shape[0]
    x_flat = x_nchw.reshape(B, -1)  # free reshape (contiguous NCHW), stays f32

    # Batch tile: 256 rows when possible (fills MXU M dim, amortizes per-step
    # overhead); 128 for mid batches; otherwise the smallest (8,)-aligned tile.
    if B >= 256:
        tb = 256
    elif B >= 128:
        tb = 128
    else:
        tb = _round_up(B, 8)
    b_pad = _round_up(B, tb)
    if b_pad != B:
        x_flat = jnp.pad(x_flat, ((0, b_pad - B), (0, 0)))
    grid = (b_pad // tb,)

    x_spec = pl.BlockSpec((tb, IN_PAD), lambda i: (i, 0))
    out_spec = pl.BlockSpec((tb, OUT_PAD), lambda i: (i, 0))
    param_specs = []
    for (ip, op) in PADDED_DIMS:
        # Constant block index -> weights/biases stay resident in VMEM across batch tiles.
        param_specs.append(pl.BlockSpec((ip, op), lambda i: (0, 0)))
        param_specs.append(pl.BlockSpec((1, op), lambda i: (0, 0)))

    flops = 2 * b_pad * sum(ip * op for ip, op in PADDED_DIMS)
    bytes_accessed = (
        sum(ip * op * 2 + op * 4 for ip, op in PADDED_DIMS)  # bf16 weights + f32 biases
        + b_pad * IN_PAD * 4                                  # f32 input (cast in-kernel)
        + b_pad * OUT_PAD * 4                                 # f32 output
    )

    out_padded = pl.pallas_call(
        dnn2_kernel,
        out_shape=jax.ShapeDtypeStruct((b_pad, OUT_PAD), jnp.float32),
        grid_spec=pltpu.PrefetchScalarGridSpec(
            num_scalar_prefetch=0,
            grid=grid,
            in_specs=[x_spec] + param_specs,
            out_specs=out_spec,
        ),
        compiler_params=pltpu.CompilerParams(
            dimension_semantics=("parallel",),   # batch tiles independent -> megacore
            vmem_limit_bytes=32 << 20,           # ~10 MB live; leaves headroom on v7x
        ),
        cost_estimate=pl.CostEstimate(
            flops=flops, transcendentals=0, bytes_accessed=bytes_accessed),
    )(x_flat, *padded_params)

    return out_padded[:B, :OUT_TRUE]


def init_params(key):
    """Deterministic init mimicking PyTorch nn.Linear default U(-1/sqrt(in), 1/sqrt(in)).

    Weights stored as (in, out) == transpose of PyTorch's (out, in)."""
    params = []
    for (fan_in, fan_out) in LAYER_DIMS:
        key, kw, kb = jax.random.split(key, 3)
        bound = 1.0 / jnp.sqrt(jnp.float32(fan_in))
        w = jax.random.uniform(kw, (fan_in, fan_out), jnp.float32, -bound, bound)
        b = jax.random.uniform(kb, (fan_out,), jnp.float32, -bound, bound)
        params += [w, b]
    return params


def prepare_params(params):
    """One-time host-side prep: zero-pad to 128 multiples, weights -> bf16, biases -> (1,N) f32."""
    prepared = []
    for layer, (fan_in, fan_out) in enumerate(LAYER_DIMS):
        ip, op = PADDED_DIMS[layer]
        w = params[2 * layer]
        b = params[2 * layer + 1]
        w_pad = jnp.zeros((ip, op), jnp.bfloat16).at[:fan_in, :fan_out].set(
            w.astype(jnp.bfloat16))
        b_pad = jnp.zeros((1, op), jnp.float32).at[0, :fan_out].set(b)
        prepared += [w_pad, b_pad]
    return prepared


def reference_forward_bf16(x_nchw, params):
    """Plain-JAX reference matching the kernel's numerics (bf16 operands, f32 accum)."""
    h = x_nchw.reshape(x_nchw.shape[0], -1).astype(jnp.bfloat16)
    for layer in range(NUM_LAYERS):
        w, b = params[2 * layer], params[2 * layer + 1]
        acc = jnp.dot(h, w.astype(jnp.bfloat16),
                      preferred_element_type=jnp.float32) + b[None, :]
        if layer < NUM_LAYERS - 1:
            h = jnp.maximum(acc, 0.0).astype(jnp.bfloat16)
        else:
            h = acc
    return h


if __name__ == "__main__":
    key = jax.random.PRNGKey(0)
    key, kx = jax.random.split(key)

    params = init_params(key)
    padded_params = prepare_params(params)

    # Small deterministic test (single batch tile).
    B = 4
    x = jax.random.normal(kx, (B, 3, 32, 32), jnp.float32)
    out = jax.block_until_ready(dnn2_forward(x, padded_params))
    ref = reference_forward_bf16(x, params)
    assert out.shape == (B, 10), out.shape
    assert jnp.allclose(out, ref, atol=1e-2, rtol=1e-2), "mismatch vs reference (B=4)"

    # Multi-tile grid path (weights stay VMEM-resident across batch tiles, tb=256).
    B2 = 512
    key, kx2 = jax.random.split(key)
    x2 = jax.random.normal(kx2, (B2, 3, 32, 32), jnp.float32)
    out2 = jax.block_until_ready(dnn2_forward(x2, padded_params))
    ref2 = reference_forward_bf16(x2, params)
    assert out2.shape == (B2, 10), out2.shape
    assert jnp.allclose(out2, ref2, atol=1e-2, rtol=1e-2), "mismatch vs reference (B=512)"

    print("KERNEL_OK")
</pallas_src>

<mosaic_0001>
module attributes {stable_mosaic.version = 11 : i64} {
  func.func @dnn2_kernel(%arg0: i32, %arg1: memref<8x3072xf32, #tpu.memory_space<vmem>>, %arg2: memref<3072x128xbf16, #tpu.memory_space<vmem>>, %arg3: memref<1x128xf32, #tpu.memory_space<vmem>>, %arg4: memref<128x256xbf16, #tpu.memory_space<vmem>>, %arg5: memref<1x256xf32, #tpu.memory_space<vmem>>, %arg6: memref<256x384xbf16, #tpu.memory_space<vmem>>, %arg7: memref<1x384xf32, #tpu.memory_space<vmem>>, %arg8: memref<384x384xbf16, #tpu.memory_space<vmem>>, %arg9: memref<1x384xf32, #tpu.memory_space<vmem>>, %arg10: memref<384x256xbf16, #tpu.memory_space<vmem>>, %arg11: memref<1x256xf32, #tpu.memory_space<vmem>>, %arg12: memref<256x384xbf16, #tpu.memory_space<vmem>>, %arg13: memref<1x384xf32, #tpu.memory_space<vmem>>, %arg14: memref<384x128xbf16, #tpu.memory_space<vmem>>, %arg15: memref<1x128xf32, #tpu.memory_space<vmem>>, %arg16: memref<128x128xbf16, #tpu.memory_space<vmem>>, %arg17: memref<1x128xf32, #tpu.memory_space<vmem>>, %arg18: memref<128x128xbf16, #tpu.memory_space<vmem>>, %arg19: memref<1x128xf32, #tpu.memory_space<vmem>>, %arg20: memref<128x128xbf16, #tpu.memory_space<vmem>>, %arg21: memref<1x128xf32, #tpu.memory_space<vmem>>, %arg22: memref<8x128xf32, #tpu.memory_space<vmem>>) attributes {dimension_semantics = [#tpu.dimension_semantics<parallel>], iteration_bounds = array<i64: 1>, scalar_prefetch = 0 : i64, scratch_operands = 0 : i64, tpu.core_type = #tpu.core_type<tc>, window_params = [{transform_indices = @transform_0, window_bounds = array<i64: 8, 3072>}, {pipeline_mode = #tpu.pipeline_mode<synchronous>, transform_indices = @transform_1, window_bounds = array<i64: 3072, 128>}, {pipeline_mode = #tpu.pipeline_mode<synchronous>, transform_indices = @transform_2, window_bounds = array<i64: 1, 128>}, {pipeline_mode = #tpu.pipeline_mode<synchronous>, transform_indices = @transform_3, window_bounds = array<i64: 128, 256>}, {pipeline_mode = #tpu.pipeline_mode<synchronous>, transform_indices = @transform_4, window_bounds = array<i64: 1, 256>}, {pipeline_mode = #tpu.pipeline_mode<synchronous>, transform_indices = @transform_5, window_bounds = array<i64: 256, 384>}, {pipeline_mode = #tpu.pipeline_mode<synchronous>, transform_indices = @transform_6, window_bounds = array<i64: 1, 384>}, {pipeline_mode = #tpu.pipeline_mode<synchronous>, transform_indices = @transform_7, window_bounds = array<i64: 384, 384>}, {pipeline_mode = #tpu.pipeline_mode<synchronous>, transform_indices = @transform_8, window_bounds = array<i64: 1, 384>}, {pipeline_mode = #tpu.pipeline_mode<synchronous>, transform_indices = @transform_9, window_bounds = array<i64: 384, 256>}, {pipeline_mode = #tpu.pipeline_mode<synchronous>, transform_indices = @transform_10, window_bounds = array<i64: 1, 256>}, {pipeline_mode = #tpu.pipeline_mode<synchronous>, transform_indices = @transform_11, window_bounds = array<i64: 256, 384>}, {pipeline_mode = #tpu.pipeline_mode<synchronous>, transform_indices = @transform_12, window_bounds = array<i64: 1, 384>}, {pipeline_mode = #tpu.pipeline_mode<synchronous>, transform_indices = @transform_13, window_bounds = array<i64: 384, 128>}, {pipeline_mode = #tpu.pipeline_mode<synchronous>, transform_indices = @transform_14, window_bounds = array<i64: 1, 128>}, {pipeline_mode = #tpu.pipeline_mode<synchronous>, transform_indices = @transform_15, window_bounds = array<i64: 128, 128>}, {pipeline_mode = #tpu.pipeline_mode<synchronous>, transform_indices = @transform_16, window_bounds = array<i64: 1, 128>}, {pipeline_mode = #tpu.pipeline_mode<synchronous>, transform_indices = @transform_17, window_bounds = array<i64: 128, 128>}, {pipeline_mode = #tpu.pipeline_mode<synchronous>, transform_indices = @transform_18, window_bounds = array<i64: 1, 128>}, {pipeline_mode = #tpu.pipeline_mode<synchronous>, transform_indices = @transform_19, window_bounds = array<i64: 128, 128>}, {pipeline_mode = #tpu.pipeline_mode<synchronous>, transform_indices = @transform_20, window_bounds = array<i64: 1, 128>}, {transform_indices = @transform_21, window_bounds = array<i64: 8, 128>}]} {
    %c0 = arith.constant 0 : index
    %c0_0 = arith.constant 0 : index
    %0 = vector.load %arg1[%c0, %c0_0] : memref<8x3072xf32, #tpu.memory_space<vmem>>, vector<8x3072xf32>
    %1 = arith.truncf %0 : vector<8x3072xf32> to vector<8x3072xbf16>
    %c0_1 = arith.constant 0 : index
    %c0_2 = arith.constant 0 : index
    %2 = vector.load %arg2[%c0_1, %c0_2] : memref<3072x128xbf16, #tpu.memory_space<vmem>>, vector<3072x128xbf16>
    %c0_3 = arith.constant 0 : index
    %c0_4 = arith.constant 0 : index
    %3 = vector.load %arg3[%c0_3, %c0_4] : memref<1x128xf32, #tpu.memory_space<vmem>>, vector<1x128xf32>
    %cst = arith.constant dense<0.000000e+00> : vector<8x128xf32>
    %4 = tpu.matmul %1, %2, %cst {dimension_numbers = #tpu.dot_dimension_numbers<[1], [0], [0], [1], [0, 0, 1, 1], [], []>} : vector<8x3072xbf16>, vector<3072x128xbf16>, vector<8x128xf32> -> vector<8x128xf32>
    %5 = vector.broadcast %3 : vector<1x128xf32> to vector<8x128xf32>
    %6 = arith.addf %4, %5 : vector<8x128xf32>
    %cst_5 = arith.constant 0.000000e+00 : f32
    %7 = vector.broadcast %cst_5 : f32 to vector<8x128xf32>
    %8 = arith.maximumf %6, %7 : vector<8x128xf32>
    %9 = arith.truncf %8 : vector<8x128xf32> to vector<8x128xbf16>
    %c0_6 = arith.constant 0 : index
    %c0_7 = arith.constant 0 : index
    %10 = vector.load %arg4[%c0_6, %c0_7] : memref<128x256xbf16, #tpu.memory_space<vmem>>, vector<128x256xbf16>
    %c0_8 = arith.constant 0 : index
    %c0_9 = arith.constant 0 : index
    %11 = vector.load %arg5[%c0_8, %c0_9] : memref<1x256xf32, #tpu.memory_space<vmem>>, vector<1x256xf32>
    %cst_10 = arith.constant dense<0.000000e+00> : vector<8x256xf32>
    %12 = tpu.matmul %9, %10, %cst_10 {dimension_numbers = #tpu.dot_dimension_numbers<[1], [0], [0], [1], [0, 0, 1, 1], [], []>} : vector<8x128xbf16>, vector<128x256xbf16>, vector<8x256xf32> -> vector<8x256xf32>
    %13 = vector.broadcast %11 : vector<1x256xf32> to vector<8x256xf32>
    %14 = arith.addf %12, %13 : vector<8x256xf32>
    %cst_11 = arith.constant 0.000000e+00 : f32
    %15 = vector.broadcast %cst_11 : f32 to vector<8x256xf32>
    %16 = arith.maximumf %14, %15 : vector<8x256xf32>
    %17 = arith.truncf %16 : vector<8x256xf32> to vector<8x256xbf16>
    %c0_12 = arith.constant 0 : index
    %c0_13 = arith.constant 0 : index
    %18 = vector.load %arg6[%c0_12, %c0_13] : memref<256x384xbf16, #tpu.memory_space<vmem>>, vector<256x384xbf16>
    %c0_14 = arith.constant 0 : index
    %c0_15 = arith.constant 0 : index
    %19 = vector.load %arg7[%c0_14, %c0_15] : memref<1x384xf32, #tpu.memory_space<vmem>>, vector<1x384xf32>
    %cst_16 = arith.constant dense<0.000000e+00> : vector<8x384xf32>
    %20 = tpu.matmul %17, %18, %cst_16 {dimension_numbers = #tpu.dot_dimension_numbers<[1], [0], [0], [1], [0, 0, 1, 1], [], []>} : vector<8x256xbf16>, vector<256x384xbf16>, vector<8x384xf32> -> vector<8x384xf32>
    %21 = vector.broadcast %19 : vector<1x384xf32> to vector<8x384xf32>
    %22 = arith.addf %20, %21 : vector<8x384xf32>
    %cst_17 = arith.constant 0.000000e+00 : f32
    %23 = vector.broadcast %cst_17 : f32 to vector<8x384xf32>
    %24 = arith.maximumf %22, %23 : vector<8x384xf32>
    %25 = arith.truncf %24 : vector<8x384xf32> to vector<8x384xbf16>
    %c0_18 = arith.constant 0 : index
    %c0_19 = arith.constant 0 : index
    %26 = vector.load %arg8[%c0_18, %c0_19] : memref<384x384xbf16, #tpu.memory_space<vmem>>, vector<384x384xbf16>
    %c0_20 = arith.constant 0 : index
    %c0_21 = arith.constant 0 : index
    %27 = vector.load %arg9[%c0_20, %c0_21] : memref<1x384xf32, #tpu.memory_space<vmem>>, vector<1x384xf32>
    %cst_22 = arith.constant dense<0.000000e+00> : vector<8x384xf32>
    %28 = tpu.matmul %25, %26, %cst_22 {dimension_numbers = #tpu.dot_dimension_numbers<[1], [0], [0], [1], [0, 0, 1, 1], [], []>} : vector<8x384xbf16>, vector<384x384xbf16>, vector<8x384xf32> -> vector<8x384xf32>
    %29 = vector.broadcast %27 : vector<1x384xf32> to vector<8x384xf32>
    %30 = arith.addf %28, %29 : vector<8x384xf32>
    %cst_23 = arith.constant 0.000000e+00 : f32
    %31 = vector.broadcast %cst_23 : f32 to vector<8x384xf32>
    %32 = arith.maximumf %30, %31 : vector<8x384xf32>
    %33 = arith.truncf %32 : vector<8x384xf32> to vector<8x384xbf16>
    %c0_24 = arith.constant 0 : index
    %c0_25 = arith.constant 0 : index
    %34 = vector.load %arg10[%c0_24, %c0_25] : memref<384x256xbf16, #tpu.memory_space<vmem>>, vector<384x256xbf16>
    %c0_26 = arith.constant 0 : index
    %c0_27 = arith.constant 0 : index
    %35 = vector.load %arg11[%c0_26, %c0_27] : memref<1x256xf32, #tpu.memory_space<vmem>>, vector<1x256xf32>
    %cst_28 = arith.constant dense<0.000000e+00> : vector<8x256xf32>
    %36 = tpu.matmul %33, %34, %cst_28 {dimension_numbers = #tpu.dot_dimension_numbers<[1], [0], [0], [1], [0, 0, 1, 1], [], []>} : vector<8x384xbf16>, vector<384x256xbf16>, vector<8x256xf32> -> vector<8x256xf32>
    %37 = vector.broadcast %35 : vector<1x256xf32> to vector<8x256xf32>
    %38 = arith.addf %36, %37 : vector<8x256xf32>
    %cst_29 = arith.constant 0.000000e+00 : f32
    %39 = vector.broadcast %cst_29 : f32 to vector<8x256xf32>
    %40 = arith.maximumf %38, %39 : vector<8x256xf32>
    %41 = arith.truncf %40 : vector<8x256xf32> to vector<8x256xbf16>
    %c0_30 = arith.constant 0 : index
    %c0_31 = arith.constant 0 : index
    %42 = vector.load %arg12[%c0_30, %c0_31] : memref<256x384xbf16, #tpu.memory_space<vmem>>, vector<256x384xbf16>
    %c0_32 = arith.constant 0 : index
    %c0_33 = arith.constant 0 : index
    %43 = vector.load %arg13[%c0_32, %c0_33] : memref<1x384xf32, #tpu.memory_space<vmem>>, vector<1x384xf32>
    %cst_34 = arith.constant dense<0.000000e+00> : vector<8x384xf32>
    %44 = tpu.matmul %41, %42, %cst_34 {dimension_numbers = #tpu.dot_dimension_numbers<[1], [0], [0], [1], [0, 0, 1, 1], [], []>} : vector<8x256xbf16>, vector<256x384xbf16>, vector<8x384xf32> -> vector<8x384xf32>
    %45 = vector.broadcast %43 : vector<1x384xf32> to vector<8x384xf32>
    %46 = arith.addf %44, %45 : vector<8x384xf32>
    %cst_35 = arith.constant 0.000000e+00 : f32
    %47 = vector.broadcast %cst_35 : f32 to vector<8x384xf32>
    %48 = arith.maximumf %46, %47 : vector<8x384xf32>
    %49 = arith.truncf %48 : vector<8x384xf32> to vector<8x384xbf16>
    %c0_36 = arith.constant 0 : index
    %c0_37 = arith.constant 0 : index
    %50 = vector.load %arg14[%c0_36, %c0_37] : memref<384x128xbf16, #tpu.memory_space<vmem>>, vector<384x128xbf16>
    %c0_38 = arith.constant 0 : index
    %c0_39 = arith.constant 0 : index
    %51 = vector.load %arg15[%c0_38, %c0_39] : memref<1x128xf32, #tpu.memory_space<vmem>>, vector<1x128xf32>
    %cst_40 = arith.constant dense<0.000000e+00> : vector<8x128xf32>
    %52 = tpu.matmul %49, %50, %cst_40 {dimension_numbers = #tpu.dot_dimension_numbers<[1], [0], [0], [1], [0, 0, 1, 1], [], []>} : vector<8x384xbf16>, vector<384x128xbf16>, vector<8x128xf32> -> vector<8x128xf32>
    %53 = vector.broadcast %51 : vector<1x128xf32> to vector<8x128xf32>
    %54 = arith.addf %52, %53 : vector<8x128xf32>
    %cst_41 = arith.constant 0.000000e+00 : f32
    %55 = vector.broadcast %cst_41 : f32 to vector<8x128xf32>
    %56 = arith.maximumf %54, %55 : vector<8x128xf32>
    %57 = arith.truncf %56 : vector<8x128xf32> to vector<8x128xbf16>
    %c0_42 = arith.constant 0 : index
    %c0_43 = arith.constant 0 : index
    %58 = vector.load %arg16[%c0_42, %c0_43] : memref<128x128xbf16, #tpu.memory_space<vmem>>, vector<128x128xbf16>
    %c0_44 = arith.constant 0 : index
    %c0_45 = arith.constant 0 : index
    %59 = vector.load %arg17[%c0_44, %c0_45] : memref<1x128xf32, #tpu.memory_space<vmem>>, vector<1x128xf32>
    %cst_46 = arith.constant dense<0.000000e+00> : vector<8x128xf32>
    %60 = tpu.matmul %57, %58, %cst_46 {dimension_numbers = #tpu.dot_dimension_numbers<[1], [0], [0], [1], [0, 0, 1, 1], [], []>} : vector<8x128xbf16>, vector<128x128xbf16>, vector<8x128xf32> -> vector<8x128xf32>
    %61 = vector.broadcast %59 : vector<1x128xf32> to vector<8x128xf32>
    %62 = arith.addf %60, %61 : vector<8x128xf32>
    %cst_47 = arith.constant 0.000000e+00 : f32
    %63 = vector.broadcast %cst_47 : f32 to vector<8x128xf32>
    %64 = arith.maximumf %62, %63 : vector<8x128xf32>
    %65 = arith.truncf %64 : vector<8x128xf32> to vector<8x128xbf16>
    %c0_48 = arith.constant 0 : index
    %c0_49 = arith.constant 0 : index
    %66 = vector.load %arg18[%c0_48, %c0_49] : memref<128x128xbf16, #tpu.memory_space<vmem>>, vector<128x128xbf16>
    %c0_50 = arith.constant 0 : index
    %c0_51 = arith.constant 0 : index
    %67 = vector.load %arg19[%c0_50, %c0_51] : memref<1x128xf32, #tpu.memory_space<vmem>>, vector<1x128xf32>
    %cst_52 = arith.constant dense<0.000000e+00> : vector<8x128xf32>
    %68 = tpu.matmul %65, %66, %cst_52 {dimension_numbers = #tpu.dot_dimension_numbers<[1], [0], [0], [1], [0, 0, 1, 1], [], []>} : vector<8x128xbf16>, vector<128x128xbf16>, vector<8x128xf32> -> vector<8x128xf32>
    %69 = vector.broadcast %67 : vector<1x128xf32> to vector<8x128xf32>
    %70 = arith.addf %68, %69 : vector<8x128xf32>
    %cst_53 = arith.constant 0.000000e+00 : f32
    %71 = vector.broadcast %cst_53 : f32 to vector<8x128xf32>
    %72 = arith.maximumf %70, %71 : vector<8x128xf32>
    %73 = arith.truncf %72 : vector<8x128xf32> to vector<8x128xbf16>
    %c0_54 = arith.constant 0 : index
    %c0_55 = arith.constant 0 : index
    %74 = vector.load %arg20[%c0_54, %c0_55] : memref<128x128xbf16, #tpu.memory_space<vmem>>, vector<128x128xbf16>
    %c0_56 = arith.constant 0 : index
    %c0_57 = arith.constant 0 : index
    %75 = vector.load %arg21[%c0_56, %c0_57] : memref<1x128xf32, #tpu.memory_space<vmem>>, vector<1x128xf32>
    %cst_58 = arith.constant dense<0.000000e+00> : vector<8x128xf32>
    %76 = tpu.matmul %73, %74, %cst_58 {dimension_numbers = #tpu.dot_dimension_numbers<[1], [0], [0], [1], [0, 0, 1, 1], [], []>} : vector<8x128xbf16>, vector<128x128xbf16>, vector<8x128xf32> -> vector<8x128xf32>
    %77 = vector.broadcast %75 : vector<1x128xf32> to vector<8x128xf32>
    %78 = arith.addf %76, %77 : vector<8x128xf32>
    %c0_59 = arith.constant 0 : index
    %c0_60 = arith.constant 0 : index
    %79 = vector.load %arg22[%c0_59, %c0_60] : memref<8x128xf32, #tpu.memory_space<vmem>>, vector<8x128xf32>
    tpu.vector_store %arg22[%c0_59, %c0_60], %78 {strides = array<i32>} : memref<8x128xf32, #tpu.memory_space<vmem>>, vector<8x128xf32>,
    return
  }
  func.func @transform_0(%arg0: i32) -> (i32, i32) {
    %c0_i32 = arith.constant 0 : i32
    %c0_i32_0 = arith.constant 0 : i32
    return %arg0, %c0_i32 : i32, i32
  }
  func.func @transform_1(%arg0: i32) -> (i32, i32) {
    %c0_i32 = arith.constant 0 : i32
    %c0_i32_0 = arith.constant 0 : i32
    %c0_i32_1 = arith.constant 0 : i32
    return %c0_i32, %c0_i32_0 : i32, i32
  }
  func.func @transform_2(%arg0: i32) -> (i32, i32) {
    %c0_i32 = arith.constant 0 : i32
    %c0_i32_0 = arith.constant 0 : i32
    %c0_i32_1 = arith.constant 0 : i32
    return %c0_i32, %c0_i32_0 : i32, i32
  }
  func.func @transform_3(%arg0: i32) -> (i32, i32) {
    %c0_i32 = arith.constant 0 : i32
    %c0_i32_0 = arith.constant 0 : i32
    %c0_i32_1 = arith.constant 0 : i32
    return %c0_i32, %c0_i32_0 : i32, i32
  }
  func.func @transform_4(%arg0: i32) -> (i32, i32) {
    %c0_i32 = arith.constant 0 : i32
    %c0_i32_0 = arith.constant 0 : i32
    %c0_i32_1 = arith.constant 0 : i32
    return %c0_i32, %c0_i32_0 : i32, i32
  }
  func.func @transform_5(%arg0: i32) -> (i32, i32) {
    %c0_i32 = arith.constant 0 : i32
    %c0_i32_0 = arith.constant 0 : i32
    %c0_i32_1 = arith.constant 0 : i32
    return %c0_i32, %c0_i32_0 : i32, i32
  }
  func.func @transform_6(%arg0: i32) -> (i32, i32) {
    %c0_i32 = arith.constant 0 : i32
    %c0_i32_0 = arith.constant 0 : i32
    %c0_i32_1 = arith.constant 0 : i32
    return %c0_i32, %c0_i32_0 : i32, i32
  }
  func.func @transform_7(%arg0: i32) -> (i32, i32) {
    %c0_i32 = arith.constant 0 : i32
    %c0_i32_0 = arith.constant 0 : i32
    %c0_i32_1 = arith.constant 0 : i32
    return %c0_i32, %c0_i32_0 : i32, i32
  }
  func.func @transform_8(%arg0: i32) -> (i32, i32) {
    %c0_i32 = arith.constant 0 : i32
    %c0_i32_0 = arith.constant 0 : i32
    %c0_i32_1 = arith.constant 0 : i32
    return %c0_i32, %c0_i32_0 : i32, i32
  }
  func.func @transform_9(%arg0: i32) -> (i32, i32) {
    %c0_i32 = arith.constant 0 : i32
    %c0_i32_0 = arith.constant 0 : i32
    %c0_i32_1 = arith.constant 0 : i32
    return %c0_i32, %c0_i32_0 : i32, i32
  }
  func.func @transform_10(%arg0: i32) -> (i32, i32) {
    %c0_i32 = arith.constant 0 : i32
    %c0_i32_0 = arith.constant 0 : i32
    %c0_i32_1 = arith.constant 0 : i32
    return %c0_i32, %c0_i32_0 : i32, i32
  }
  func.func @transform_11(%arg0: i32) -> (i32, i32) {
    %c0_i32 = arith.constant 0 : i32
    %c0_i32_0 = arith.constant 0 : i32
    %c0_i32_1 = arith.constant 0 : i32
    return %c0_i32, %c0_i32_0 : i32, i32
  }
  func.func @transform_12(%arg0: i32) -> (i32, i32) {
    %c0_i32 = arith.constant 0 : i32
    %c0_i32_0 = arith.constant 0 : i32
    %c0_i32_1 = arith.constant 0 : i32
    return %c0_i32, %c0_i32_0 : i32, i32
  }
  func.func @transform_13(%arg0: i32) -> (i32, i32) {
    %c0_i32 = arith.constant 0 : i32
    %c0_i32_0 = arith.constant 0 : i32
    %c0_i32_1 = arith.constant 0 : i32
    return %c0_i32, %c0_i32_0 : i32, i32
  }
  func.func @transform_14(%arg0: i32) -> (i32, i32) {
    %c0_i32 = arith.constant 0 : i32
    %c0_i32_0 = arith.constant 0 : i32
    %c0_i32_1 = arith.constant 0 : i32
    return %c0_i32, %c0_i32_0 : i32, i32
  }
  func.func @transform_15(%arg0: i32) -> (i32, i32) {
    %c0_i32 = arith.constant 0 : i32
    %c0_i32_0 = arith.constant 0 : i32
    %c0_i32_1 = arith.constant 0 : i32
    return %c0_i32, %c0_i32_0 : i32, i32
  }
  func.func @transform_16(%arg0: i32) -> (i32, i32) {
    %c0_i32 = arith.constant 0 : i32
    %c0_i32_0 = arith.constant 0 : i32
    %c0_i32_1 = arith.constant 0 : i32
    return %c0_i32, %c0_i32_0 : i32, i32
  }
  func.func @transform_17(%arg0: i32) -> (i32, i32) {
    %c0_i32 = arith.constant 0 : i32
    %c0_i32_0 = arith.constant 0 : i32
    %c0_i32_1 = arith.constant 0 : i32
    return %c0_i32, %c0_i32_0 : i32, i32
  }
  func.func @transform_18(%arg0: i32) -> (i32, i32) {
    %c0_i32 = arith.constant 0 : i32
    %c0_i32_0 = arith.constant 0 : i32
    %c0_i32_1 = arith.constant 0 : i32
    return %c0_i32, %c0_i32_0 : i32, i32
  }
  func.func @transform_19(%arg0: i32) -> (i32, i32) {
    %c0_i32 = arith.constant 0 : i32
    %c0_i32_0 = arith.constant 0 : i32
    %c0_i32_1 = arith.constant 0 : i32
    return %c0_i32, %c0_i32_0 : i32, i32
  }
  func.func @transform_20(%arg0: i32) -> (i32, i32) {
    %c0_i32 = arith.constant 0 : i32
    %c0_i32_0 = arith.constant 0 : i32
    %c0_i32_1 = arith.constant 0 : i32
    return %c0_i32, %c0_i32_0 : i32, i32
  }
  func.func @transform_21(%arg0: i32) -> (i32, i32) {
    %c0_i32 = arith.constant 0 : i32
    %c0_i32_0 = arith.constant 0 : i32
    return %arg0, %c0_i32 : i32, i32
  }
}

</mosaic_0001>

<llo_original>
// kernel: dnn2_forward.1
$region0: #{dnn2_forward.1}
  #allocation0 [shape = 'u32[]', space=smem, size = 0x4, offset = 0x4, fixed_abs, tag = 'smem constant byte address 0x4 - core index']
  #allocation1 [shape = 'u32[144,128]{1,0:T(1,128)}', space=vmem, size = 0x12000, scoped, tag = 'internal scratch']
  %s0 = inlined_call_operand.vmem [shape: f32[8,3072], index: 0, kind: input, shape index: {}]
  %s1 = inlined_call_operand.hbm [shape: bf16[3072,128], index: 1, kind: input, shape index: {}]
  %s2 = inlined_call_operand.hbm [shape: f32[1,128], index: 2, kind: input, shape index: {}]
  %s3 = inlined_call_operand.hbm [shape: bf16[128,256], index: 3, kind: input, shape index: {}]
  %s4 = inlined_call_operand.vmem [shape: f32[1,256], index: 4, kind: input, shape index: {}]
  %s5 = inlined_call_operand.hbm [shape: bf16[256,384], index: 5, kind: input, shape index: {}]
  %s6 = inlined_call_operand.vmem [shape: f32[1,384], index: 6, kind: input, shape index: {}]
  %s7 = inlined_call_operand.vmem [shape: bf16[384,384], index: 7, kind: input, shape index: {}]
  %s8 = inlined_call_operand.vmem [shape: f32[1,384], index: 8, kind: input, shape index: {}]
  %s9 = inlined_call_operand.hbm [shape: bf16[384,256], index: 9, kind: input, shape index: {}]
  %s10 = inlined_call_operand.vmem [shape: f32[1,256], index: 10, kind: input, shape index: {}]
  %s11 = inlined_call_operand.hbm [shape: bf16[256,384], index: 11, kind: input, shape index: {}]
  %s12 = inlined_call_operand.vmem [shape: f32[1,384], index: 12, kind: input, shape index: {}]
  %s13 = inlined_call_operand.vmem [shape: bf16[384,128], index: 13, kind: input, shape index: {}]
  %s14 = inlined_call_operand.vmem [shape: f32[1,128], index: 14, kind: input, shape index: {}]
  %s15 = inlined_call_operand.hbm [shape: bf16[128,128], index: 15, kind: input, shape index: {}]
  %s16 = inlined_call_operand.vmem [shape: f32[1,128], index: 16, kind: input, shape index: {}]
  %s17 = inlined_call_operand.hbm [shape: bf16[128,128], index: 17, kind: input, shape index: {}]
  %s18 = inlined_call_operand.vmem [shape: f32[1,128], index: 18, kind: input, shape index: {}]
  %s19 = inlined_call_operand.hbm [shape: bf16[128,128], index: 19, kind: input, shape index: {}]
  %s20 = inlined_call_operand.vmem [shape: f32[1,128], index: 20, kind: input, shape index: {}]
  %s21 = inlined_call_operand.vmem [shape: f32[8,128], index: 21, kind: output, shape index: {}]
  %s22 = sld [smem:[#allocation0]]
  $region130: #{dnn2_forward.1} parent=0
    _
  %s24 = ssub.s32 1, %s22
  %s25 = scalar_select 0, %s24, %s22
  $region1: #{dnn2_forward.1} parent=0
    #allocation2 [shape = 'u8[786432]{0}', space=vmem, size = 0xc0000, scoped, tag = 'input window, operand 1, single buffered']
    #allocation3 [shape = 's32[1]{0}', space=sflag, size = 0x4, scoped, tag = 'scoped memory for dnn2_forward.1']
    #allocation4 [shape = 'u8[512]{0}', space=vmem, size = 0x400, scoped, tag = 'input window, operand 2, single buffered']
    #allocation5 [shape = 's32[1]{0}', space=sflag, size = 0x4, scoped, tag = 'scoped memory for dnn2_forward.1']
    #allocation6 [shape = 'u8[65536]{0}', space=vmem, size = 0x10000, scoped, tag = 'input window, operand 3, single buffered']
    #allocation7 [shape = 'u8[196608]{0}', space=vmem, size = 0x30000, scoped, tag = 'input window, operand 5, single buffered']
    #allocation8 [shape = 's32[1]{0}', space=sflag, size = 0x4, scoped, tag = 'scoped memory for dnn2_forward.1']
    #allocation9 [shape = 'u8[196608]{0}', space=vmem, size = 0x30000, scoped, tag = 'input window, operand 9, single buffered']
    #allocation10 [shape = 'u8[196608]{0}', space=vmem, size = 0x30000, scoped, tag = 'input window, operand 11, single buffered']
    #allocation11 [shape = 's32[1]{0}', space=sflag, size = 0x4, scoped, tag = 'scoped memory for dnn2_forward.1']
    #allocation12 [shape = 'u8[32768]{0}', space=vmem, size = 0x8000, scoped, tag = 'input window, operand 15, single buffered']
    #allocation13 [shape = 'u8[32768]{0}', space=vmem, size = 0x8000, scoped, tag = 'input window, operand 17, single buffered']
    #allocation14 [shape = 's32[1]{0}', space=sflag, size = 0x4, scoped, tag = 'scoped memory for dnn2_forward.1']
    #allocation15 [shape = 'u8[32768]{0}', space=vmem, size = 0x8000, scoped, tag = 'input window, operand 19, single buffered']
    %26 = vsyncpa [#allocation3], 0
    %27 = vsyncpa [#allocation5], 0
    %28 = vsyncpa [#allocation8], 0
    %29 = vsyncpa [#allocation11], 0
    %30 = vsyncpa [#allocation14], 0
    // Predicated region
    $region2: #{dnn2_forward.1} parent=1 // pred_check
      _
    $region3: #{dnn2_forward.1} parent=1 // pred_check_branch
      %32 = sbr.rel (0) target = $region5
    $region4: #{dnn2_forward.1} parent=1 // pred_region
      _
    $region5: #{dnn2_forward.1} parent=1 // pred_fallthru
      _
    // Predicated region
    $region6: #{dnn2_forward.1} parent=1 // pred_check
      _
    $region7: #{dnn2_forward.1} parent=1 // pred_check_branch
      %34 = sbr.rel (0) target = $region9
    $region8: #{dnn2_forward.1} parent=1 // pred_region
      %s36 = ssub.s32 24576, 24576
      %37 = vsyncadd [#allocation3], %s36
      %s38 = sshll.u32 [#allocation2], 4
      %s39 = int_to_ptr.vmem [resolvable:$true] %s38
      %44 = dma.hbm_to_vmem [thread:$0]  %s1, 24576, %s39, [#allocation3], 64, 64, 4
    $region9: #{dnn2_forward.1} parent=1 // pred_fallthru
      _
    // Predicated region
    $region10: #{dnn2_forward.1} parent=1 // pred_check
      _
    $region11: #{dnn2_forward.1} parent=1 // pred_check_branch
      %46 = sbr.rel (0) target = $region13
    $region12: #{dnn2_forward.1} parent=1 // pred_region
      %s48 = ssub.s32 16, 16
      %49 = vsyncadd [#allocation5], %s48
      %s51 = sshll.u32 [#allocation4], 4
      %s52 = int_to_ptr.vmem [resolvable:$true] %s51
      %54 = dma.hbm_to_vmem [thread:$0]  %s2, 16, %s52, [#allocation5]
    $region13: #{dnn2_forward.1} parent=1 // pred_fallthru
      _
    // Predicated region
    $region14: #{dnn2_forward.1} parent=1 // pred_check
      _
    $region15: #{dnn2_forward.1} parent=1 // pred_check_branch
      %56 = sbr.rel (0) target = $region17
    $region16: #{dnn2_forward.1} parent=1 // pred_region
      %s58 = ssub.s32 2048, 2048
      %59 = vsyncadd [#allocation5], %s58
      %s60 = sshll.u32 [#allocation6], 4
      %s61 = int_to_ptr.vmem [resolvable:$true] %s60
      %66 = dma.hbm_to_vmem [thread:$0]  %s3, 2048, %s61, [#allocation5], 128, 128, 8
    $region17: #{dnn2_forward.1} parent=1 // pred_fallthru
      _
    // Predicated region
    $region18: #{dnn2_forward.1} parent=1 // pred_check
      _
    $region19: #{dnn2_forward.1} parent=1 // pred_check_branch
      %68 = sbr.rel (0) target = $region21
    $region20: #{dnn2_forward.1} parent=1 // pred_region
      _
    $region21: #{dnn2_forward.1} parent=1 // pred_fallthru
      _
    // Predicated region
    $region22: #{dnn2_forward.1} parent=1 // pred_check
      _
    $region23: #{dnn2_forward.1} parent=1 // pred_check_branch
      %70 = sbr.rel (0) target = $region25
    $region24: #{dnn2_forward.1} parent=1 // pred_region
      %s72 = ssub.s32 6144, 6144
      %73 = vsyncadd [#allocation8], %s72
      %s74 = sshll.u32 [#allocation7], 4
      %s75 = int_to_ptr.vmem [resolvable:$true] %s74
      %80 = dma.hbm_to_vmem [thread:$0]  %s5, 6144, %s75, [#allocation8], 192, 192, 12
    $region25: #{dnn2_forward.1} parent=1 // pred_fallthru
      _
    // Predicated region
    $region26: #{dnn2_forward.1} parent=1 // pred_check
      _
    $region27: #{dnn2_forward.1} parent=1 // pred_check_branch
      %82 = sbr.rel (0) target = $region29
    $region28: #{dnn2_forward.1} parent=1 // pred_region
      _
    $region29: #{dnn2_forward.1} parent=1 // pred_fallthru
      _
    // Predicated region
    $region30: #{dnn2_forward.1} parent=1 // pred_check
      _
    $region31: #{dnn2_forward.1} parent=1 // pred_check_branch
      %84 = sbr.rel (0) target = $region33
    $region32: #{dnn2_forward.1} parent=1 // pred_region
      _
    $region33: #{dnn2_forward.1} parent=1 // pred_fallthru
      _
    // Predicated region
    $region34: #{dnn2_forward.1} parent=1 // pred_check
      _
    $region35: #{dnn2_forward.1} parent=1 // pred_check_branch
      %86 = sbr.rel (0) target = $region37
    $region36: #{dnn2_forward.1} parent=1 // pred_region
      _
    $region37: #{dnn2_forward.1} parent=1 // pred_fallthru
      _
    // Predicated region
    $region38: #{dnn2_forward.1} parent=1 // pred_check
      _
    $region39: #{dnn2_forward.1} parent=1 // pred_check_branch
      %88 = sbr.rel (0) target = $region41
    $region40: #{dnn2_forward.1} parent=1 // pred_region
      %s90 = ssub.s32 6144, 6144
      %91 = vsyncadd [#allocation8], %s90
      %s92 = sshll.u32 [#allocation9], 4
      %s93 = int_to_ptr.vmem [resolvable:$true] %s92
      %98 = dma.hbm_to_vmem [thread:$0]  %s9, 6144, %s93, [#allocation8], 128, 128, 8
    $region41: #{dnn2_forward.1} parent=1 // pred_fallthru
      _
    // Predicated region
    $region42: #{dnn2_forward.1} parent=1 // pred_check
      _
    $region43: #{dnn2_forward.1} parent=1 // pred_check_branch
      %100 = sbr.rel (0) target = $region45
    $region44: #{dnn2_forward.1} parent=1 // pred_region
      _
    $region45: #{dnn2_forward.1} parent=1 // pred_fallthru
      _
    // Predicated region
    $region46: #{dnn2_forward.1} parent=1 // pred_check
      _
    $region47: #{dnn2_forward.1} parent=1 // pred_check_branch
      %102 = sbr.rel (0) target = $region49
    $region48: #{dnn2_forward.1} parent=1 // pred_region
      %s104 = ssub.s32 6144, 6144
      %105 = vsyncadd [#allocation11], %s104
      %s106 = sshll.u32 [#allocation10], 4
      %s107 = int_to_ptr.vmem [resolvable:$true] %s106
      %112 = dma.hbm_to_vmem [thread:$0]  %s11, 6144, %s107, [#allocation11], 192, 192, 12
    $region49: #{dnn2_forward.1} parent=1 // pred_fallthru
      _
    // Predicated region
    $region50: #{dnn2_forward.1} parent=1 // pred_check
      _
    $region51: #{dnn2_forward.1} parent=1 // pred_check_branch
      %114 = sbr.rel (0) target = $region53
    $region52: #{dnn2_forward.1} parent=1 // pred_region
      _
    $region53: #{dnn2_forward.1} parent=1 // pred_fallthru
      _
    // Predicated region
    $region54: #{dnn2_forward.1} parent=1 // pred_check
      _
    $region55: #{dnn2_forward.1} parent=1 // pred_check_branch
      %116 = sbr.rel (0) target = $region57
    $region56: #{dnn2_forward.1} parent=1 // pred_region
      _
    $region57: #{dnn2_forward.1} parent=1 // pred_fallthru
      _
    // Predicated region
    $region58: #{dnn2_forward.1} parent=1 // pred_check
      _
    $region59: #{dnn2_forward.1} parent=1 // pred_check_branch
      %118 = sbr.rel (0) target = $region61
    $region60: #{dnn2_forward.1} parent=1 // pred_region
      _
    $region61: #{dnn2_forward.1} parent=1 // pred_fallthru
      _
    // Predicated region
    $region62: #{dnn2_forward.1} parent=1 // pred_check
      _
    $region63: #{dnn2_forward.1} parent=1 // pred_check_branch
      %120 = sbr.rel (0) target = $region65
    $region64: #{dnn2_forward.1} parent=1 // pred_region
      %s122 = ssub.s32 1024, 1024
      %123 = vsyncadd [#allocation11], %s122
      %s124 = sshll.u32 [#allocation12], 4
      %s125 = int_to_ptr.vmem [resolvable:$true] %s124
      %130 = dma.hbm_to_vmem [thread:$0]  %s15, 1024, %s125, [#allocation11], 64, 64, 4
    $region65: #{dnn2_forward.1} parent=1 // pred_fallthru
      _
    // Predicated region
    $region66: #{dnn2_forward.1} parent=1 // pred_check
      _
    $region67: #{dnn2_forward.1} parent=1 // pred_check_branch
      %132 = sbr.rel (0) target = $region69
    $region68: #{dnn2_forward.1} parent=1 // pred_region
      _
    $region69: #{dnn2_forward.1} parent=1 // pred_fallthru
      _
    // Predicated region
    $region70: #{dnn2_forward.1} parent=1 // pred_check
      _
    $region71: #{dnn2_forward.1} parent=1 // pred_check_branch
      %134 = sbr.rel (0) target = $region73
    $region72: #{dnn2_forward.1} parent=1 // pred_region
      %s136 = ssub.s32 1024, 1024
      %137 = vsyncadd [#allocation14], %s136
      %s138 = sshll.u32 [#allocation13], 4
      %s139 = int_to_ptr.vmem [resolvable:$true] %s138
      %144 = dma.hbm_to_vmem [thread:$0]  %s17, 1024, %s139, [#allocation14], 64, 64, 4
    $region73: #{dnn2_forward.1} parent=1 // pred_fallthru
      _
    // Predicated region
    $region74: #{dnn2_forward.1} parent=1 // pred_check
      _
    $region75: #{dnn2_forward.1} parent=1 // pred_check_branch
      %146 = sbr.rel (0) target = $region77
    $region76: #{dnn2_forward.1} parent=1 // pred_region
      _
    $region77: #{dnn2_forward.1} parent=1 // pred_fallthru
      _
    // Predicated region
    $region78: #{dnn2_forward.1} parent=1 // pred_check
      _
    $region79: #{dnn2_forward.1} parent=1 // pred_check_branch
      %148 = sbr.rel (0) target = $region81
    $region80: #{dnn2_forward.1} parent=1 // pred_region
      %s150 = ssub.s32 1024, 1024
      %151 = vsyncadd [#allocation14], %s150
      %s152 = sshll.u32 [#allocation15], 4
      %s153 = int_to_ptr.vmem [resolvable:$true] %s152
      %158 = dma.hbm_to_vmem [thread:$0]  %s19, 1024, %s153, [#allocation14], 64, 64, 4
    $region81: #{dnn2_forward.1} parent=1 // pred_fallthru
      _
    // Predicated region
    $region82: #{dnn2_forward.1} parent=1 // pred_check
      _
    $region83: #{dnn2_forward.1} parent=1 // pred_check_branch
      %160 = sbr.rel (0) target = $region85
    $region84: #{dnn2_forward.1} parent=1 // pred_region
      _
    $region85: #{dnn2_forward.1} parent=1 // pred_fallthru
      _
    // Predicated region
    $region86: #{dnn2_forward.1} parent=1 // pred_check
      _
    $region87: #{dnn2_forward.1} parent=1 // pred_check_branch
      %162 = sbr.rel (0) target = $region89
    $region88: #{dnn2_forward.1} parent=1 // pred_region
      %163 = dma.done [#allocation3], 24576
    $region89: #{dnn2_forward.1} parent=1 // pred_fallthru
      _
    // Predicated region
    $region90: #{dnn2_forward.1} parent=1 // pred_check
      _
    $region91: #{dnn2_forward.1} parent=1 // pred_check_branch
      %165 = sbr.rel (0) target = $region93
    $region92: #{dnn2_forward.1} parent=1 // pred_region
      %166 = dma.done [#allocation5], 16
    $region93: #{dnn2_forward.1} parent=1 // pred_fallthru
      _
    // Predicated region
    $region94: #{dnn2_forward.1} parent=1 // pred_check
      _
    $region95: #{dnn2_forward.1} parent=1 // pred_check_branch
      %168 = sbr.rel (0) target = $region97
    $region96: #{dnn2_forward.1} parent=1 // pred_region
      %169 = dma.done [#allocation5], 2048
    $region97: #{dnn2_forward.1} parent=1 // pred_fallthru
      _
    // Predicated region
    $region98: #{dnn2_forward.1} parent=1 // pred_check
      _
    $region99: #{dnn2_forward.1} parent=1 // pred_check_branch
      %171 = sbr.rel (0) target = $region101
    $region100: #{dnn2_forward.1} parent=1 // pred_region
      %172 = dma.done [#allocation8], 6144
    $region101: #{dnn2_forward.1} parent=1 // pred_fallthru
      _
    // Predicated region
    $region102: #{dnn2_forward.1} parent=1 // pred_check
      _
    $region103: #{dnn2_forward.1} parent=1 // pred_check_branch
      %174 = sbr.rel (0) target = $region105
    $region104: #{dnn2_forward.1} parent=1 // pred_region
      %175 = dma.done [#allocation8], 6144
    $region105: #{dnn2_forward.1} parent=1 // pred_fallthru
      _
    // Predicated region
    $region106: #{dnn2_forward.1} parent=1 // pred_check
      _
    $region107: #{dnn2_forward.1} parent=1 // pred_check_branch
      %177 = sbr.rel (0) target = $region109
    $region108: #{dnn2_forward.1} parent=1 // pred_region
      %178 = dma.done [#allocation11], 6144
    $region109: #{dnn2_forward.1} parent=1 // pred_fallthru
      _
    // Predicated region
    $region110: #{dnn2_forward.1} parent=1 // pred_check
      _
    $region111: #{dnn2_forward.1} parent=1 // pred_check_branch
      %180 = sbr.rel (0) target = $region113
    $region112: #{dnn2_forward.1} parent=1 // pred_region
      %181 = dma.done [#allocation11], 1024
    $region113: #{dnn2_forward.1} parent=1 // pred_fallthru
      _
    // Predicated region
    $region114: #{dnn2_forward.1} parent=1 // pred_check
      _
    $region115: #{dnn2_forward.1} parent=1 // pred_check_branch
      %183 = sbr.rel (0) target = $region117
    $region116: #{dnn2_forward.1} parent=1 // pred_region
      %184 = dma.done [#allocation14], 1024
    $region117: #{dnn2_forward.1} parent=1 // pred_fallthru
      _
    // Predicated region
    $region118: #{dnn2_forward.1} parent=1 // pred_check
      _
    $region119: #{dnn2_forward.1} parent=1 // pred_check_branch
      %186 = sbr.rel (0) target = $region121
    $region120: #{dnn2_forward.1} parent=1 // pred_region
      %187 = dma.done [#allocation14], 1024
    $region121: #{dnn2_forward.1} parent=1 // pred_fallthru
      _
    %v189 = vld [vmem:[%s0] sm:$0xff]
    %v190 = vld [vmem:[%s0 + $0x8] sm:$0xff]
    %v191 = vld [vmem:[%s0 + $0x10] sm:$0xff]
    %v192 = vld [vmem:[%s0 + $0x18] sm:$0xff]
    %v193 = vld [vmem:[%s0 + $0x20] sm:$0xff]
    %v194 = vld [vmem:[%s0 + $0x28] sm:$0xff]
    %v195 = vld [vmem:[%s0 + $0x30] sm:$0xff]
    %v196 = vld [vmem:[%s0 + $0x38] sm:$0xff]
    %v197 = vld [vmem:[%s0 + $0x40] sm:$0xff]
    %v198 = vld [vmem:[%s0 + $0x48] sm:$0xff]
    %v199 = vld [vmem:[%s0 + $0x50] sm:$0xff]
    %v200 = vld [vmem:[%s0 + $0x58] sm:$0xff]
    %v201 = vld [vmem:[%s0 + $0x60] sm:$0xff]
    %v202 = vld [vmem:[%s0 + $0x68] sm:$0xff]
    %v203 = vld [vmem:[%s0 + $0x70] sm:$0xff]
    %v204 = vld [vmem:[%s0 + $0x78] sm:$0xff]
    %v205 = vld [vmem:[%s0 + $0x80] sm:$0xff]
    %v206 = vld [vmem:[%s0 + $0x88] sm:$0xff]
    %v207 = vld [vmem:[%s0 + $0x90] sm:$0xff]
    %v208 = vld [vmem:[%s0 + $0x98] sm:$0xff]
    %v209 = vld [vmem:[%s0 + $0xa0] sm:$0xff]
    %v210 = vld [vmem:[%s0 + $0xa8] sm:$0xff]
    %v211 = vld [vmem:[%s0 + $0xb0] sm:$0xff]
    %v212 = vld [vmem:[%s0 + $0xb8] sm:$0xff]
    %v213 = vpack.c.bf16 %v189, %v189
    %v214 = vpack.c.bf16 %v190, %v190
    %v215 = vpack.c.bf16 %v191, %v191
    %v216 = vpack.c.bf16 %v192, %v192
    %v217 = vpack.c.bf16 %v193, %v193
    %v218 = vpack.c.bf16 %v194, %v194
    %v219 = vpack.c.bf16 %v195, %v195
    %v220 = vpack.c.bf16 %v196, %v196
    %v221 = vpack.c.bf16 %v197, %v197
    %v222 = vpack.c.bf16 %v198, %v198
    %v223 = vpack.c.bf16 %v199, %v199
    %v224 = vpack.c.bf16 %v200, %v200
    %v225 = vpack.c.bf16 %v201, %v201
    %v226 = vpack.c.bf16 %v202, %v202
    %v227 = vpack.c.bf16 %v203, %v203
    %v228 = vpack.c.bf16 %v204, %v204
    %v229 = vpack.c.bf16 %v205, %v205
    %v230 = vpack.c.bf16 %v206, %v206
    %v231 = vpack.c.bf16 %v207, %v207
    %v232 = vpack.c.bf16 %v208, %v208
    %v233 = vpack.c.bf16 %v209, %v209
    %v234 = vpack.c.bf16 %v210, %v210
    %v235 = vpack.c.bf16 %v211, %v211
    %v236 = vpack.c.bf16 %v212, %v212
    %v237 = vld [vmem:[#allocation2] sm:$0xf]
    %v238 = vld [vmem:[#allocation2 + $0x4] sm:$0xf]
    %v239 = vld [vmem:[#allocation2 + $0x8] sm:$0xf]
    %v240 = vld [vmem:[#allocation2 + $0xc] sm:$0xf]
    %v241 = vld [vmem:[#allocation2 + $0x10] sm:$0xf]
    %v242 = vld [vmem:[#allocation2 + $0x14] sm:$0xf]
    %v243 = vld [vmem:[#allocation2 + $0x18] sm:$0xf]
    %v244 = vld [vmem:[#allocation2 + $0x1c] sm:$0xf]
    %v245 = vld [vmem:[#allocation2 + $0x20] sm:$0xf]
    %v246 = vld [vmem:[#allocation2 + $0x24] sm:$0xf]
    %v247 = vld [vmem:[#allocation2 + $0x28] sm:$0xf]
    %v248 = vld [vmem:[#allocation2 + $0x2c] sm:$0xf]
    %v249 = vld [vmem:[#allocation2 + $0x30] sm:$0xf]
    %v250 = vld [vmem:[#allocation2 + $0x34] sm:$0xf]
    %v251 = vld [vmem:[#allocation2 + $0x38] sm:$0xf]
    %v252 = vld [vmem:[#allocation2 + $0x3c] sm:$0xf]
    %v253 = vld [vmem:[#allocation2 + $0x40] sm:$0xf]
    %v254 = vld [vmem:[#allocation2 + $0x44] sm:$0xf]
    %v255 = vld [vmem:[#allocation2 + $0x48] sm:$0xf]
    %v256 = vld [vmem:[#allocation2 + $0x4c] sm:$0xf]
    %v257 = vld [vmem:[#allocation2 + $0x50] sm:$0xf]
    %v258 = vld [vmem:[#allocation2 + $0x54] sm:$0xf]
    %v259 = vld [vmem:[#allocation2 + $0x58] sm:$0xf]
    %v260 = vld [vmem:[#allocation2 + $0x5c] sm:$0xf]
    %v261 = vld [vmem:[#allocation2 + $0x60] sm:$0xf]
    %v262 = vld [vmem:[#allocation2 + $0x64] sm:$0xf]
    %v263 = vld [vmem:[#allocation2 + $0x68] sm:$0xf]
    %v264 = vld [vmem:[#allocation2 + $0x6c] sm:$0xf]
    %v265 = vld [vmem:[#allocation2 + $0x70] sm:$0xf]
    %v266 = vld [vmem:[#allocation2 + $0x74] sm:$0xf]
    %v267 = vld [vmem:[#allocation2 + $0x78] sm:$0xf]
    %v268 = vld [vmem:[#allocation2 + $0x7c] sm:$0xf]
    %v269 = vld [vmem:[#allocation2 + $0x80] sm:$0xf]
    %v270 = vld [vmem:[#allocation2 + $0x84] sm:$0xf]
    %v271 = vld [vmem:[#allocation2 + $0x88] sm:$0xf]
    %v272 = vld [vmem:[#allocation2 + $0x8c] sm:$0xf]
    %v273 = vld [vmem:[#allocation2 + $0x90] sm:$0xf]
    %v274 = vld [vmem:[#allocation2 + $0x94] sm:$0xf]
    %v275 = vld [vmem:[#allocation2 + $0x98] sm:$0xf]
    %v276 = vld [vmem:[#allocation2 + $0x9c] sm:$0xf]
    %v277 = vld [vmem:[#allocation2 + $0xa0] sm:$0xf]
    %v278 = vld [vmem:[#allocation2 + $0xa4] sm:$0xf]
    %v279 = vld [vmem:[#allocation2 + $0xa8] sm:$0xf]
    %v280 = vld [vmem:[#allocation2 + $0xac] sm:$0xf]
    %v281 = vld [vmem:[#allocation2 + $0xb0] sm:$0xf]
    %v282 = vld [vmem:[#allocation2 + $0xb4] sm:$0xf]
    %v283 = vld [vmem:[#allocation2 + $0xb8] sm:$0xf]
    %v284 = vld [vmem:[#allocation2 + $0xbc] sm:$0xf]
    %v285 = vld [vmem:[#allocation2 + $0xc0] sm:$0xf]
    %v286 = vld [vmem:[#allocation2 + $0xc4] sm:$0xf]
    %v287 = vld [vmem:[#allocation2 + $0xc8] sm:$0xf]
    %v288 = vld [vmem:[#allocation2 + $0xcc] sm:$0xf]
    %v289 = vld [vmem:[#allocation2 + $0xd0] sm:$0xf]
    %v290 = vld [vmem:[#allocation2 + $0xd4] sm:$0xf]
    %v291 = vld [vmem:[#allocation2 + $0xd8] sm:$0xf]
    %v292 = vld [vmem:[#allocation2 + $0xdc] sm:$0xf]
    %v293 = vld [vmem:[#allocation2 + $0xe0] sm:$0xf]
    %v294 = vld [vmem:[#allocation2 + $0xe4] sm:$0xf]
    %v295 = vld [vmem:[#allocation2 + $0xe8] sm:$0xf]
    %v296 = vld [vmem:[#allocation2 + $0xec] sm:$0xf]
    %v297 = vld [vmem:[#allocation2 + $0xf0] sm:$0xf]
    %v298 = vld [vmem:[#allocation2 + $0xf4] sm:$0xf]
    %v299 = vld [vmem:[#allocation2 + $0xf8] sm:$0xf]
    %v300 = vld [vmem:[#allocation2 + $0xfc] sm:$0xf]
    %v301 = vld [vmem:[#allocation2 + $0x100] sm:$0xf]
    %v302 = vld [vmem:[#allocation2 + $0x104] sm:$0xf]
    %v303 = vld [vmem:[#allocation2 + $0x108] sm:$0xf]
    %v304 = vld [vmem:[#allocation2 + $0x10c] sm:$0xf]
    %v305 = vld [vmem:[#allocation2 + $0x110] sm:$0xf]
    %v306 = vld [vmem:[#allocation2 + $0x114] sm:$0xf]
    %v307 = vld [vmem:[#allocation2 + $0x118] sm:$0xf]
    %v308 = vld [vmem:[#allocation2 + $0x11c] sm:$0xf]
    %v309 = vld [vmem:[#allocation2 + $0x120] sm:$0xf]
    %v310 = vld [vmem:[#allocation2 + $0x124] sm:$0xf]
    %v311 = vld [vmem:[#allocation2 + $0x128] sm:$0xf]
    %v312 = vld [vmem:[#allocation2 + $0x12c] sm:$0xf]
    %v313 = vld [vmem:[#allocation2 + $0x130] sm:$0xf]
    %v314 = vld [vmem:[#allocation2 + $0x134] sm:$0xf]
    %v315 = vld [vmem:[#allocation2 + $0x138] sm:$0xf]
    %v316 = vld [vmem:[#allocation2 + $0x13c] sm:$0xf]
    %v317 = vld [vmem:[#allocation2 + $0x140] sm:$0xf]
    %v318 = vld [vmem:[#allocation2 + $0x144] sm:$0xf]
    %v319 = vld [vmem:[#allocation2 + $0x148] sm:$0xf]
    %v320 = vld [vmem:[#allocation2 + $0x14c] sm:$0xf]
    %v321 = vld [vmem:[#allocation2 + $0x150] sm:$0xf]
    %v322 = vld [vmem:[#allocation2 + $0x154] sm:$0xf]
    %v323 = vld [vmem:[#allocation2 + $0x158] sm:$0xf]
    %v324 = vld [vmem:[#allocation2 + $0x15c] sm:$0xf]
    %v325 = vld [vmem:[#allocation2 + $0x160] sm:$0xf]
    %v326 = vld [vmem:[#allocation2 + $0x164] sm:$0xf]
    %v327 = vld [vmem:[#allocation2 + $0x168] sm:$0xf]
    %v328 = vld [vmem:[#allocation2 + $0x16c] sm:$0xf]
    %v329 = vld [vmem:[#allocation2 + $0x170] sm:$0xf]
    %v330 = vld [vmem:[#allocation2 + $0x174] sm:$0xf]
    %v331 = vld [vmem:[#allocation2 + $0x178] sm:$0xf]
    %v332 = vld [vmem:[#allocation2 + $0x17c] sm:$0xf]
    %v333 = vld [vmem:[#allocation2 + $0x180] sm:$0xf]
    %v334 = vld [vmem:[#allocation2 + $0x184] sm:$0xf]
    %v335 = vld [vmem:[#allocation2 + $0x188] sm:$0xf]
    %v336 = vld [vmem:[#allocation2 + $0x18c] sm:$0xf]
    %v337 = vld [vmem:[#allocation2 + $0x190] sm:$0xf]
    %v338 = vld [vmem:[#allocation2 + $0x194] sm:$0xf]
    %v339 = vld [vmem:[#allocation2 + $0x198] sm:$0xf]
    %v340 = vld [vmem:[#allocation2 + $0x19c] sm:$0xf]
    %v341 = vld [vmem:[#allocation2 + $0x1a0] sm:$0xf]
    %v342 = vld [vmem:[#allocation2 + $0x1a4] sm:$0xf]
    %v343 = vld [vmem:[#allocation2 + $0x1a8] sm:$0xf]
    %v344 = vld [vmem:[#allocation2 + $0x1ac] sm:$0xf]
    %v345 = vld [vmem:[#allocation2 + $0x1b0] sm:$0xf]
    %v346 = vld [vmem:[#allocation2 + $0x1b4] sm:$0xf]
    %v347 = vld [vmem:[#allocation2 + $0x1b8] sm:$0xf]
    %v348 = vld [vmem:[#allocation2 + $0x1bc] sm:$0xf]
    %v349 = vld [vmem:[#allocation2 + $0x1c0] sm:$0xf]
    %v350 = vld [vmem:[#allocation2 + $0x1c4] sm:$0xf]
    %v351 = vld [vmem:[#allocation2 + $0x1c8] sm:$0xf]
    %v352 = vld [vmem:[#allocation2 + $0x1cc] sm:$0xf]
    %v353 = vld [vmem:[#allocation2 + $0x1d0] sm:$0xf]
    %v354 = vld [vmem:[#allocation2 + $0x1d4] sm:$0xf]
    %v355 = vld [vmem:[#allocation2 + $0x1d8] sm:$0xf]
    %v356 = vld [vmem:[#allocation2 + $0x1dc] sm:$0xf]
    %v357 = vld [vmem:[#allocation2 + $0x1e0] sm:$0xf]
    %v358 = vld [vmem:[#allocation2 + $0x1e4] sm:$0xf]
    %v359 = vld [vmem:[#allocation2 + $0x1e8] sm:$0xf]
    %v360 = vld [vmem:[#allocation2 + $0x1ec] sm:$0xf]
    %v361 = vld [vmem:[#allocation2 + $0x1f0] sm:$0xf]
    %v362 = vld [vmem:[#allocation2 + $0x1f4] sm:$0xf]
    %v363 = vld [vmem:[#allocation2 + $0x1f8] sm:$0xf]
    %v364 = vld [vmem:[#allocation2 + $0x1fc] sm:$0xf]
    %v365 = vld [vmem:[#allocation2 + $0x200] sm:$0xf]
    %v366 = vld [vmem:[#allocation2 + $0x204] sm:$0xf]
    %v367 = vld [vmem:[#allocation2 + $0x208] sm:$0xf]
    %v368 = vld [vmem:[#allocation2 + $0x20c] sm:$0xf]
    %v369 = vld [vmem:[#allocation2 + $0x210] sm:$0xf]
    %v370 = vld [vmem:[#allocation2 + $0x214] sm:$0xf]
    %v371 = vld [vmem:[#allocation2 + $0x218] sm:$0xf]
    %v372 = vld [vmem:[#allocation2 + $0x21c] sm:$0xf]
    %v373 = vld [vmem:[#allocation2 + $0x220] sm:$0xf]
    %v374 = vld [vmem:[#allocation2 + $0x224] sm:$0xf]
    %v375 = vld [vmem:[#allocation2 + $0x228] sm:$0xf]
    %v376 = vld [vmem:[#allocation2 + $0x22c] sm:$0xf]
    %v377 = vld [vmem:[#allocation2 + $0x230] sm:$0xf]
    %v378 = vld [vmem:[#allocation2 + $0x234] sm:$0xf]
    %v379 = vld [vmem:[#allocation2 + $0x238] sm:$0xf]
    %v380 = vld [vmem:[#allocation2 + $0x23c] sm:$0xf]
    %v381 = vld [vmem:[#allocation2 + $0x240] sm:$0xf]
    %v382 = vld [vmem:[#allocation2 + $0x244] sm:$0xf]
    %v383 = vld [vmem:[#allocation2 + $0x248] sm:$0xf]
    %v384 = vld [vmem:[#allocation2 + $0x24c] sm:$0xf]
    %v385 = vld [vmem:[#allocation2 + $0x250] sm:$0xf]
    %v386 = vld [vmem:[#allocation2 + $0x254] sm:$0xf]
    %v387 = vld [vmem:[#allocation2 + $0x258] sm:$0xf]
    %v388 = vld [vmem:[#allocation2 + $0x25c] sm:$0xf]
    %v389 = vld [vmem:[#allocation2 + $0x260] sm:$0xf]
    %v390 = vld [vmem:[#allocation2 + $0x264] sm:$0xf]
    %v391 = vld [vmem:[#allocation2 + $0x268] sm:$0xf]
    %v392 = vld [vmem:[#allocation2 + $0x26c] sm:$0xf]
    %v393 = vld [vmem:[#allocation2 + $0x270] sm:$0xf]
    %v394 = vld [vmem:[#allocation2 + $0x274] sm:$0xf]
    %v395 = vld [vmem:[#allocation2 + $0x278] sm:$0xf]
    %v396 = vld [vmem:[#allocation2 + $0x27c] sm:$0xf]
    %v397 = vld [vmem:[#allocation2 + $0x280] sm:$0xf]
    %v398 = vld [vmem:[#allocation2 + $0x284] sm:$0xf]
    %v399 = vld [vmem:[#allocation2 + $0x288] sm:$0xf]
    %v400 = vld [vmem:[#allocation2 + $0x28c] sm:$0xf]
    %v401 = vld [vmem:[#allocation2 + $0x290] sm:$0xf]
    %v402 = vld [vmem:[#allocation2 + $0x294] sm:$0xf]
    %v403 = vld [vmem:[#allocation2 + $0x298] sm:$0xf]
    %v404 = vld [vmem:[#allocation2 + $0x29c] sm:$0xf]
    %v405 = vld [vmem:[#allocation2 + $0x2a0] sm:$0xf]
    %v406 = vld [vmem:[#allocation2 + $0x2a4] sm:$0xf]
    %v407 = vld [vmem:[#allocation2 + $0x2a8] sm:$0xf]
    %v408 = vld [vmem:[#allocation2 + $0x2ac] sm:$0xf]
    %v409 = vld [vmem:[#allocation2 + $0x2b0] sm:$0xf]
    %v410 = vld [vmem:[#allocation2 + $0x2b4] sm:$0xf]
    %v411 = vld [vmem:[#allocation2 + $0x2b8] sm:$0xf]
    %v412 = vld [vmem:[#allocation2 + $0x2bc] sm:$0xf]
    %v413 = vld [vmem:[#allocation2 + $0x2c0] sm:$0xf]
    %v414 = vld [vmem:[#allocation2 + $0x2c4] sm:$0xf]
    %v415 = vld [vmem:[#allocation2 + $0x2c8] sm:$0xf]
    %v416 = vld [vmem:[#allocation2 + $0x2cc] sm:$0xf]
    %v417 = vld [vmem:[#allocation2 + $0x2d0] sm:$0xf]
    %v418 = vld [vmem:[#allocation2 + $0x2d4] sm:$0xf]
    %v419 = vld [vmem:[#allocation2 + $0x2d8] sm:$0xf]
    %v420 = vld [vmem:[#allocation2 + $0x2dc] sm:$0xf]
    %v421 = vld [vmem:[#allocation2 + $0x2e0] sm:$0xf]
    %v422 = vld [vmem:[#allocation2 + $0x2e4] sm:$0xf]
    %v423 = vld [vmem:[#allocation2 + $0x2e8] sm:$0xf]
    %v424 = vld [vmem:[#allocation2 + $0x2ec] sm:$0xf]
    %v425 = vld [vmem:[#allocation2 + $0x2f0] sm:$0xf]
    %v426 = vld [vmem:[#allocation2 + $0x2f4] sm:$0xf]
    %v427 = vld [vmem:[#allocation2 + $0x2f8] sm:$0xf]
    %v428 = vld [vmem:[#allocation2 + $0x2fc] sm:$0xf]
    %v429 = vld [vmem:[#allocation2 + $0x300] sm:$0xf]
    %v430 = vld [vmem:[#allocation2 + $0x304] sm:$0xf]
    %v431 = vld [vmem:[#allocation2 + $0x308] sm:$0xf]
    %v432 = vld [vmem:[#allocation2 + $0x30c] sm:$0xf]
    %v433 = vld [vmem:[#allocation2 + $0x310] sm:$0xf]
    %v434 = vld [vmem:[#allocation2 + $0x314] sm:$0xf]
    %v435 = vld [vmem:[#allocation2 + $0x318] sm:$0xf]
    %v436 = vld [vmem:[#allocation2 + $0x31c] sm:$0xf]
    %v437 = vld [vmem:[#allocation2 + $0x320] sm:$0xf]
    %v438 = vld [vmem:[#allocation2 + $0x324] sm:$0xf]
    %v439 = vld [vmem:[#allocation2 + $0x328] sm:$0xf]
    %v440 = vld [vmem:[#allocation2 + $0x32c] sm:$0xf]
    %v441 = vld [vmem:[#allocation2 + $0x330] sm:$0xf]
    %v442 = vld [vmem:[#allocation2 + $0x334] sm:$0xf]
    %v443 = vld [vmem:[#allocation2 + $0x338] sm:$0xf]
    %v444 = vld [vmem:[#allocation2 + $0x33c] sm:$0xf]
    %v445 = vld [vmem:[#allocation2 + $0x340] sm:$0xf]
    %v446 = vld [vmem:[#allocation2 + $0x344] sm:$0xf]
    %v447 = vld [vmem:[#allocation2 + $0x348] sm:$0xf]
    %v448 = vld [vmem:[#allocation2 + $0x34c] sm:$0xf]
    %v449 = vld [vmem:[#allocation2 + $0x350] sm:$0xf]
    %v450 = vld [vmem:[#allocation2 + $0x354] sm:$0xf]
    %v451 = vld [vmem:[#allocation2 + $0x358] sm:$0xf]
    %v452 = vld [vmem:[#allocation2 + $0x35c] sm:$0xf]
    %v453 = vld [vmem:[#allocation2 + $0x360] sm:$0xf]
    %v454 = vld [vmem:[#allocation2 + $0x364] sm:$0xf]
    %v455 = vld [vmem:[#allocation2 + $0x368] sm:$0xf]
    %v456 = vld [vmem:[#allocation2 + $0x36c] sm:$0xf]
    %v457 = vld [vmem:[#allocation2 + $0x370] sm:$0xf]
    %v458 = vld [vmem:[#allocation2 + $0x374] sm:$0xf]
    %v459 = vld [vmem:[#allocation2 + $0x378] sm:$0xf]
    %v460 = vld [vmem:[#allocation2 + $0x37c] sm:$0xf]
    %v461 = vld [vmem:[#allocation2 + $0x380] sm:$0xf]
    %v462 = vld [vmem:[#allocation2 + $0x384] sm:$0xf]
    %v463 = vld [vmem:[#allocation2 + $0x388] sm:$0xf]
    %v464 = vld [vmem:[#allocation2 + $0x38c] sm:$0xf]
    %v465 = vld [vmem:[#allocation2 + $0x390] sm:$0xf]
    %v466 = vld [vmem:[#allocation2 + $0x394] sm:$0xf]
    %v467 = vld [vmem:[#allocation2 + $0x398] sm:$0xf]
    %v468 = vld [vmem:[#allocation2 + $0x39c] sm:$0xf]
    %v469 = vld [vmem:[#allocation2 + $0x3a0] sm:$0xf]
    %v470 = vld [vmem:[#allocation2 + $0x3a4] sm:$0xf]
    %v471 = vld [vmem:[#allocation2 + $0x3a8] sm:$0xf]
    %v472 = vld [vmem:[#allocation2 + $0x3ac] sm:$0xf]
    %v473 = vld [vmem:[#allocation2 + $0x3b0] sm:$0xf]
    %v474 = vld [vmem:[#allocation2 + $0x3b4] sm:$0xf]
    %v475 = vld [vmem:[#allocation2 + $0x3b8] sm:$0xf]
    %v476 = vld [vmem:[#allocation2 + $0x3bc] sm:$0xf]
    %v477 = vld [vmem:[#allocation2 + $0x3c0] sm:$0xf]
    %v478 = vld [vmem:[#allocation2 + $0x3c4] sm:$0xf]
    %v479 = vld [vmem:[#allocation2 + $0x3c8] sm:$0xf]
    %v480 = vld [vmem:[#allocation2 + $0x3cc] sm:$0xf]
    %v481 = vld [vmem:[#allocation2 + $0x3d0] sm:$0xf]
    %v482 = vld [vmem:[#allocation2 + $0x3d4] sm:$0xf]
    %v483 = vld [vmem:[#allocation2 + $0x3d8] sm:$0xf]
    %v484 = vld [vmem:[#allocation2 + $0x3dc] sm:$0xf]
    %v485 = vld [vmem:[#allocation2 + $0x3e0] sm:$0xf]
    %v486 = vld [vmem:[#allocation2 + $0x3e4] sm:$0xf]
    %v487 = vld [vmem:[#allocation2 + $0x3e8] sm:$0xf]
    %v488 = vld [vmem:[#allocation2 + $0x3ec] sm:$0xf]
    %v489 = vld [vmem:[#allocation2 + $0x3f0] sm:$0xf]
    %v490 = vld [vmem:[#allocation2 + $0x3f4] sm:$0xf]
    %v491 = vld [vmem:[#allocation2 + $0x3f8] sm:$0xf]
    %v492 = vld [vmem:[#allocation2 + $0x3fc] sm:$0xf]
    %v493 = vld [vmem:[#allocation2 + $0x400] sm:$0xf]
    %v494 = vld [vmem:[#allocation2 + $0x404] sm:$0xf]
    %v495 = vld [vmem:[#allocation2 + $0x408] sm:$0xf]
    %v496 = vld [vmem:[#allocation2 + $0x40c] sm:$0xf]
    %v497 = vld [vmem:[#allocation2 + $0x410] sm:$0xf]
    %v498 = vld [vmem:[#allocation2 + $0x414] sm:$0xf]
    %v499 = vld [vmem:[#allocation2 + $0x418] sm:$0xf]
    %v500 = vld [vmem:[#allocation2 + $0x41c] sm:$0xf]
    %v501 = vld [vmem:[#allocation2 + $0x420] sm:$0xf]
    %v502 = vld [vmem:[#allocation2 + $0x424] sm:$0xf]
    %v503 = vld [vmem:[#allocation2 + $0x428] sm:$0xf]
    %v504 = vld [vmem:[#allocation2 + $0x42c] sm:$0xf]
    %v505 = vld [vmem:[#allocation2 + $0x430] sm:$0xf]
    %v506 = vld [vmem:[#allocation2 + $0x434] sm:$0xf]
    %v507 = vld [vmem:[#allocation2 + $0x438] sm:$0xf]
    %v508 = vld [vmem:[#allocation2 + $0x43c] sm:$0xf]
    %v509 = vld [vmem:[#allocation2 + $0x440] sm:$0xf]
    %v510 = vld [vmem:[#allocation2 + $0x444] sm:$0xf]
    %v511 = vld [vmem:[#allocation2 + $0x448] sm:$0xf]
    %v512 = vld [vmem:[#allocation2 + $0x44c] sm:$0xf]
    %v513 = vld [vmem:[#allocation2 + $0x450] sm:$0xf]
    %v514 = vld [vmem:[#allocation2 + $0x454] sm:$0xf]
    %v515 = vld [vmem:[#allocation2 + $0x458] sm:$0xf]
    %v516 = vld [vmem:[#allocation2 + $0x45c] sm:$0xf]
    %v517 = vld [vmem:[#allocation2 + $0x460] sm:$0xf]
    %v518 = vld [vmem:[#allocation2 + $0x464] sm:$0xf]
    %v519 = vld [vmem:[#allocation2 + $0x468] sm:$0xf]
    %v520 = vld [vmem:[#allocation2 + $0x46c] sm:$0xf]
    %v521 = vld [vmem:[#allocation2 + $0x470] sm:$0xf]
    %v522 = vld [vmem:[#allocation2 + $0x474] sm:$0xf]
    %v523 = vld [vmem:[#allocation2 + $0x478] sm:$0xf]
    %v524 = vld [vmem:[#allocation2 + $0x47c] sm:$0xf]
    %v525 = vld [vmem:[#allocation2 + $0x480] sm:$0xf]
    %v526 = vld [vmem:[#allocation2 + $0x484] sm:$0xf]
    %v527 = vld [vmem:[#allocation2 + $0x488] sm:$0xf]
    %v528 = vld [vmem:[#allocation2 + $0x48c] sm:$0xf]
    %v529 = vld [vmem:[#allocation2 + $0x490] sm:$0xf]
    %v530 = vld [vmem:[#allocation2 + $0x494] sm:$0xf]
    %v531 = vld [vmem:[#allocation2 + $0x498] sm:$0xf]
    %v532 = vld [vmem:[#allocation2 + $0x49c] sm:$0xf]
    %v533 = vld [vmem:[#allocation2 + $0x4a0] sm:$0xf]
    %v534 = vld [vmem:[#allocation2 + $0x4a4] sm:$0xf]
    %v535 = vld [vmem:[#allocation2 + $0x4a8] sm:$0xf]
    %v536 = vld [vmem:[#allocation2 + $0x4ac] sm:$0xf]
    %v537 = vld [vmem:[#allocation2 + $0x4b0] sm:$0xf]
    %v538 = vld [vmem:[#allocation2 + $0x4b4] sm:$0xf]
    %v539 = vld [vmem:[#allocation2 + $0x4b8] sm:$0xf]
    %v540 = vld [vmem:[#allocation2 + $0x4bc] sm:$0xf]
    %v541 = vld [vmem:[#allocation2 + $0x4c0] sm:$0xf]
    %v542 = vld [vmem:[#allocation2 + $0x4c4] sm:$0xf]
    %v543 = vld [vmem:[#allocation2 + $0x4c8] sm:$0xf]
    %v544 = vld [vmem:[#allocation2 + $0x4cc] sm:$0xf]
    %v545 = vld [vmem:[#allocation2 + $0x4d0] sm:$0xf]
    %v546 = vld [vmem:[#allocation2 + $0x4d4] sm:$0xf]
    %v547 = vld [vmem:[#allocation2 + $0x4d8] sm:$0xf]
    %v548 = vld [vmem:[#allocation2 + $0x4dc] sm:$0xf]
    %v549 = vld [vmem:[#allocation2 + $0x4e0] sm:$0xf]
    %v550 = vld [vmem:[#allocation2 + $0x4e4] sm:$0xf]
    %v551 = vld [vmem:[#allocation2 + $0x4e8] sm:$0xf]
    %v552 = vld [vmem:[#allocation2 + $0x4ec] sm:$0xf]
    %v553 = vld [vmem:[#allocation2 + $0x4f0] sm:$0xf]
    %v554 = vld [vmem:[#allocation2 + $0x4f4] sm:$0xf]
    %v555 = vld [vmem:[#allocation2 + $0x4f8] sm:$0xf]
    %v556 = vld [vmem:[#allocation2 + $0x4fc] sm:$0xf]
    %v557 = vld [vmem:[#allocation2 + $0x500] sm:$0xf]
    %v558 = vld [vmem:[#allocation2 + $0x504] sm:$0xf]
    %v559 = vld [vmem:[#allocation2 + $0x508] sm:$0xf]
    %v560 = vld [vmem:[#allocation2 + $0x50c] sm:$0xf]
    %v561 = vld [vmem:[#allocation2 + $0x510] sm:$0xf]
    %v562 = vld [vmem:[#allocation2 + $0x514] sm:$0xf]
    %v563 = vld [vmem:[#allocation2 + $0x518] sm:$0xf]
    %v564 = vld [vmem:[#allocation2 + $0x51c] sm:$0xf]
    %v565 = vld [vmem:[#allocation2 + $0x520] sm:$0xf]
    %v566 = vld [vmem:[#allocation2 + $0x524] sm:$0xf]
    %v567 = vld [vmem:[#allocation2 + $0x528] sm:$0xf]
    %v568 = vld [vmem:[#allocation2 + $0x52c] sm:$0xf]
    %v569 = vld [vmem:[#allocation2 + $0x530] sm:$0xf]
    %v570 = vld [vmem:[#allocation2 + $0x534] sm:$0xf]
    %v571 = vld [vmem:[#allocation2 + $0x538] sm:$0xf]
    %v572 = vld [vmem:[#allocation2 + $0x53c] sm:$0xf]
    %v573 = vld [vmem:[#allocation2 + $0x540] sm:$0xf]
    %v574 = vld [vmem:[#allocation2 + $0x544] sm:$0xf]
    %v575 = vld [vmem:[#allocation2 + $0x548] sm:$0xf]
    %v576 = vld [vmem:[#allocation2 + $0x54c] sm:$0xf]
    %v577 = vld [vmem:[#allocation2 + $0x550] sm:$0xf]
    %v578 = vld [vmem:[#allocation2 + $0x554] sm:$0xf]
    %v579 = vld [vmem:[#allocation2 + $0x558] sm:$0xf]
    %v580 = vld [vmem:[#allocation2 + $0x55c] sm:$0xf]
    %v581 = vld [vmem:[#allocation2 + $0x560] sm:$0xf]
    %v582 = vld [vmem:[#allocation2 + $0x564] sm:$0xf]
    %v583 = vld [vmem:[#allocation2 + $0x568] sm:$0xf]
    %v584 = vld [vmem:[#allocation2 + $0x56c] sm:$0xf]
    %v585 = vld [vmem:[#allocation2 + $0x570] sm:$0xf]
    %v586 = vld [vmem:[#allocation2 + $0x574] sm:$0xf]
    %v587 = vld [vmem:[#allocation2 + $0x578] sm:$0xf]
    %v588 = vld [vmem:[#allocation2 + $0x57c] sm:$0xf]
    %v589 = vld [vmem:[#allocation2 + $0x580] sm:$0xf]
    %v590 = vld [vmem:[#allocation2 + $0x584] sm:$0xf]
    %v591 = vld [vmem:[#allocation2 + $0x588] sm:$0xf]
    %v592 = vld [vmem:[#allocation2 + $0x58c] sm:$0xf]
    %v593 = vld [vmem:[#allocation2 + $0x590] sm:$0xf]
    %v594 = vld [vmem:[#allocation2 + $0x594] sm:$0xf]
    %v595 = vld [vmem:[#allocation2 + $0x598] sm:$0xf]
    %v596 = vld [vmem:[#allocation2 + $0x59c] sm:$0xf]
    %v597 = vld [vmem:[#allocation2 + $0x5a0] sm:$0xf]
    %v598 = vld [vmem:[#allocation2 + $0x5a4] sm:$0xf]
    %v599 = vld [vmem:[#allocation2 + $0x5a8] sm:$0xf]
    %v600 = vld [vmem:[#allocation2 + $0x5ac] sm:$0xf]
    %v601 = vld [vmem:[#allocation2 + $0x5b0] sm:$0xf]
    %v602 = vld [vmem:[#allocation2 + $0x5b4] sm:$0xf]
    %v603 = vld [vmem:[#allocation2 + $0x5b8] sm:$0xf]
    %v604 = vld [vmem:[#allocation2 + $0x5bc] sm:$0xf]
    %v605 = vld [vmem:[#allocation2 + $0x5c0] sm:$0xf]
    %v606 = vld [vmem:[#allocation2 + $0x5c4] sm:$0xf]
    %v607 = vld [vmem:[#allocation2 + $0x5c8] sm:$0xf]
    %v608 = vld [vmem:[#allocation2 + $0x5cc] sm:$0xf]
    %v609 = vld [vmem:[#allocation2 + $0x5d0] sm:$0xf]
    %v610 = vld [vmem:[#allocation2 + $0x5d4] sm:$0xf]
    %v611 = vld [vmem:[#allocation2 + $0x5d8] sm:$0xf]
    %v612 = vld [vmem:[#allocation2 + $0x5dc] sm:$0xf]
    %v613 = vld [vmem:[#allocation2 + $0x5e0] sm:$0xf]
    %v614 = vld [vmem:[#allocation2 + $0x5e4] sm:$0xf]
    %v615 = vld [vmem:[#allocation2 + $0x5e8] sm:$0xf]
    %v616 = vld [vmem:[#allocation2 + $0x5ec] sm:$0xf]
    %v617 = vld [vmem:[#allocation2 + $0x5f0] sm:$0xf]
    %v618 = vld [vmem:[#allocation2 + $0x5f4] sm:$0xf]
    %v619 = vld [vmem:[#allocation2 + $0x5f8] sm:$0xf]
    %v620 = vld [vmem:[#allocation2 + $0x5fc] sm:$0xf]
    %v621 = vld [vmem:[#allocation4] sm:$0x1]
    %v623 = vlaneseq
    %v624 = vshrl.u32 %v623, 7
    %v625 = vsub.s32 0, %v624
    %v626 = vrot.slane %v621, %v625
    %v1012 = vunpack.c.l.b16 %v237
    %v1013 = vunpack.c.l.b16 %v238
    %v1014 = vunpack.c.l.b16 %v239
    %v1015 = vunpack.c.l.b16 %v240
    %v1016 = vunpack.c.l.b16 %v241
    %v1017 = vunpack.c.l.b16 %v242
    %v1018 = vunpack.c.l.b16 %v243
    %v1019 = vunpack.c.l.b16 %v244
    %v1020 = vunpack.c.l.b16 %v245
    %v1021 = vunpack.c.l.b16 %v246
    %v1022 = vunpack.c.l.b16 %v247
    %v1023 = vunpack.c.l.b16 %v248
    %v1024 = vunpack.c.l.b16 %v249
    %v1025 = vunpack.c.l.b16 %v250
    %v1026 = vunpack.c.l.b16 %v251
    %v1027 = vunpack.c.l.b16 %v252
    %v1028 = vunpack.c.l.b16 %v253
    %v1029 = vunpack.c.l.b16 %v254
    %v1030 = vunpack.c.l.b16 %v255
    %v1031 = vunpack.c.l.b16 %v256
    %v1032 = vunpack.c.l.b16 %v257
    %v1033 = vunpack.c.l.b16 %v258
    %v1034 = vunpack.c.l.b16 %v259
    %v1035 = vunpack.c.l.b16 %v260
    %v1036 = vunpack.c.l.b16 %v261
    %v1037 = vunpack.c.l.b16 %v262
    %v1038 = vunpack.c.l.b16 %v263
    %v1039 = vunpack.c.l.b16 %v264
    %v1040 = vunpack.c.l.b16 %v265
    %v1041 = vunpack.c.l.b16 %v266
    %v1042 = vunpack.c.l.b16 %v267
    %v1043 = vunpack.c.l.b16 %v268
    %v1044 = vunpack.c.l.b16 %v269
    %v1045 = vunpack.c.l.b16 %v270
    %v1046 = vunpack.c.l.b16 %v271
    %v1047 = vunpack.c.l.b16 %v272
    %v1048 = vunpack.c.l.b16 %v273
    %v1049 = vunpack.c.l.b16 %v274
    %v1050 = vunpack.c.l.b16 %v275
    %v1051 = vunpack.c.l.b16 %v276
    %v1052 = vunpack.c.l.b16 %v277
    %v1053 = vunpack.c.l.b16 %v278
    %v1054 = vunpack.c.l.b16 %v279
    %v1055 = vunpack.c.l.b16 %v280
    %v1056 = vunpack.c.l.b16 %v281
    %v1057 = vunpack.c.l.b16 %v282
    %v1058 = vunpack.c.l.b16 %v283
    %v1059 = vunpack.c.l.b16 %v284
    %v1060 = vunpack.c.l.b16 %v285
    %v1061 = vunpack.c.l.b16 %v286
    %v1062 = vunpack.c.l.b16 %v287
    %v1063 = vunpack.c.l.b16 %v288
    %v1064 = vunpack.c.l.b16 %v289
    %v1065 = vunpack.c.l.b16 %v290
    %v1066 = vunpack.c.l.b16 %v291
    %v1067 = vunpack.c.l.b16 %v292
    %v1068 = vunpack.c.l.b16 %v293
    %v1069 = vunpack.c.l.b16 %v294
    %v1070 = vunpack.c.l.b16 %v295
    %v1071 = vunpack.c.l.b16 %v296
    %v1072 = vunpack.c.l.b16 %v297
    %v1073 = vunpack.c.l.b16 %v298
    %v1074 = vunpack.c.l.b16 %v299
    %v1075 = vunpack.c.l.b16 %v300
    %v1076 = vunpack.c.l.b16 %v301
    %v1077 = vunpack.c.l.b16 %v302
    %v1078 = vunpack.c.l.b16 %v303
    %v1079 = vunpack.c.l.b16 %v304
    %v1080 = vunpack.c.l.b16 %v305
    %v1081 = vunpack.c.l.b16 %v306
    %v1082 = vunpack.c.l.b16 %v307
    %v1083 = vunpack.c.l.b16 %v308
    %v1084 = vunpack.c.l.b16 %v309
    %v1085 = vunpack.c.l.b16 %v310
    %v1086 = vunpack.c.l.b16 %v311
    %v1087 = vunpack.c.l.b16 %v312
    %v1088 = vunpack.c.l.b16 %v313
    %v1089 = vunpack.c.l.b16 %v314
    %v1090 = vunpack.c.l.b16 %v315
    %v1091 = vunpack.c.l.b16 %v316
    %v1092 = vunpack.c.l.b16 %v317
    %v1093 = vunpack.c.l.b16 %v318
    %v1094 = vunpack.c.l.b16 %v319
    %v1095 = vunpack.c.l.b16 %v320
    %v1096 = vunpack.c.l.b16 %v321
    %v1097 = vunpack.c.l.b16 %v322
    %v1098 = vunpack.c.l.b16 %v323
    %v1099 = vunpack.c.l.b16 %v324
    %v1100 = vunpack.c.l.b16 %v325
    %v1101 = vunpack.c.l.b16 %v326
    %v1102 = vunpack.c.l.b16 %v327
    %v1103 = vunpack.c.l.b16 %v328
    %v1104 = vunpack.c.l.b16 %v329
    %v1105 = vunpack.c.l.b16 %v330
    %v1106 = vunpack.c.l.b16 %v331
    %v1107 = vunpack.c.l.b16 %v332
    %v1108 = vunpack.c.l.b16 %v333
    %v1109 = vunpack.c.l.b16 %v334
    %v1110 = vunpack.c.l.b16 %v335
    %v1111 = vunpack.c.l.b16 %v336
    %v1112 = vunpack.c.l.b16 %v337
    %v1113 = vunpack.c.l.b16 %v338
    %v1114 = vunpack.c.l.b16 %v339
    %v1115 = vunpack.c.l.b16 %v340
    %v1116 = vunpack.c.l.b16 %v341
    %v1117 = vunpack.c.l.b16 %v342
    %v1118 = vunpack.c.l.b16 %v343
    %v1119 = vunpack.c.l.b16 %v344
    %v1120 = vunpack.c.l.b16 %v345
    %v1121 = vunpack.c.l.b16 %v346
    %v1122 = vunpack.c.l.b16 %v347
    %v1123 = vunpack.c.l.b16 %v348
    %v1124 = vunpack.c.l.b16 %v349
    %v1125 = vunpack.c.l.b16 %v350
    %v1126 = vunpack.c.l.b16 %v351
    %v1127 = vunpack.c.l.b16 %v352
    %v1128 = vunpack.c.l.b16 %v353
    %v1129 = vunpack.c.l.b16 %v354
    %v1130 = vunpack.c.l.b16 %v355
    %v1131 = vunpack.c.l.b16 %v356
    %v1132 = vunpack.c.l.b16 %v357
    %v1133 = vunpack.c.l.b16 %v358
    %v1134 = vunpack.c.l.b16 %v359
    %v1135 = vunpack.c.l.b16 %v360
    %v1136 = vunpack.c.l.b16 %v361
    %v1137 = vunpack.c.l.b16 %v362
    %v1138 = vunpack.c.l.b16 %v363
    %v1139 = vunpack.c.l.b16 %v364
    %v1140 = vunpack.c.l.b16 %v365
    %v1141 = vunpack.c.l.b16 %v366
    %v1142 = vunpack.c.l.b16 %v367
    %v1143 = vunpack.c.l.b16 %v368
    %v1144 = vunpack.c.l.b16 %v369
    %v1145 = vunpack.c.l.b16 %v370
    %v1146 = vunpack.c.l.b16 %v371
    %v1147 = vunpack.c.l.b16 %v372
    %v1148 = vunpack.c.l.b16 %v373
    %v1149 = vunpack.c.l.b16 %v374
    %v1150 = vunpack.c.l.b16 %v375
    %v1151 = vunpack.c.l.b16 %v376
    %v1152 = vunpack.c.l.b16 %v377
    %v1153 = vunpack.c.l.b16 %v378
    %v1154 = vunpack.c.l.b16 %v379
    %v1155 = vunpack.c.l.b16 %v380
    %v1156 = vunpack.c.l.b16 %v381
    %v1157 = vunpack.c.l.b16 %v382
    %v1158 = vunpack.c.l.b16 %v383
    %v1159 = vunpack.c.l.b16 %v384
    %v1160 = vunpack.c.l.b16 %v385
    %v1161 = vunpack.c.l.b16 %v386
    %v1162 = vunpack.c.l.b16 %v387
    %v1163 = vunpack.c.l.b16 %v388
    %v1164 = vunpack.c.l.b16 %v389
    %v1165 = vunpack.c.l.b16 %v390
    %v1166 = vunpack.c.l.b16 %v391
    %v1167 = vunpack.c.l.b16 %v392
    %v1168 = vunpack.c.l.b16 %v393
    %v1169 = vunpack.c.l.b16 %v394
    %v1170 = vunpack.c.l.b16 %v395
    %v1171 = vunpack.c.l.b16 %v396
    %v1172 = vunpack.c.l.b16 %v397
    %v1173 = vunpack.c.l.b16 %v398
    %v1174 = vunpack.c.l.b16 %v399
    %v1175 = vunpack.c.l.b16 %v400
    %v1176 = vunpack.c.l.b16 %v401
    %v1177 = vunpack.c.l.b16 %v402
    %v1178 = vunpack.c.l.b16 %v403
    %v1179 = vunpack.c.l.b16 %v404
    %v1180 = vunpack.c.l.b16 %v405
    %v1181 = vunpack.c.l.b16 %v406
    %v1182 = vunpack.c.l.b16 %v407
    %v1183 = vunpack.c.l.b16 %v408
    %v1184 = vunpack.c.l.b16 %v409
    %v1185 = vunpack.c.l.b16 %v410
    %v1186 = vunpack.c.l.b16 %v411
    %v1187 = vunpack.c.l.b16 %v412
    %v1188 = vunpack.c.l.b16 %v413
    %v1189 = vunpack.c.l.b16 %v414
    %v1190 = vunpack.c.l.b16 %v415
    %v1191 = vunpack.c.l.b16 %v416
    %v1192 = vunpack.c.l.b16 %v417
    %v1193 = vunpack.c.l.b16 %v418
    %v1194 = vunpack.c.l.b16 %v419
    %v1195 = vunpack.c.l.b16 %v420
    %v1196 = vunpack.c.l.b16 %v421
    %v1197 = vunpack.c.l.b16 %v422
    %v1198 = vunpack.c.l.b16 %v423
    %v1199 = vunpack.c.l.b16 %v424
    %v1200 = vunpack.c.l.b16 %v425
    %v1201 = vunpack.c.l.b16 %v426
    %v1202 = vunpack.c.l.b16 %v427
    %v1203 = vunpack.c.l.b16 %v428
    %v1204 = vunpack.c.l.b16 %v429
    %v1205 = vunpack.c.l.b16 %v430
    %v1206 = vunpack.c.l.b16 %v431
    %v1207 = vunpack.c.l.b16 %v432
    %v1208 = vunpack.c.l.b16 %v433
    %v1209 = vunpack.c.l.b16 %v434
    %v1210 = vunpack.c.l.b16 %v435
    %v1211 = vunpack.c.l.b16 %v436
    %v1212 = vunpack.c.l.b16 %v437
    %v1213 = vunpack.c.l.b16 %v438
    %v1214 = vunpack.c.l.b16 %v439
    %v1215 = vunpack.c.l.b16 %v440
    %v1216 = vunpack.c.l.b16 %v441
    %v1217 = vunpack.c.l.b16 %v442
    %v1218 = vunpack.c.l.b16 %v443
    %v1219 = vunpack.c.l.b16 %v444
    %v1220 = vunpack.c.l.b16 %v445
    %v1221 = vunpack.c.l.b16 %v446
    %v1222 = vunpack.c.l.b16 %v447
    %v1223 = vunpack.c.l.b16 %v448
    %v1224 = vunpack.c.l.b16 %v449
    %v1225 = vunpack.c.l.b16 %v450
    %v1226 = vunpack.c.l.b16 %v451
    %v1227 = vunpack.c.l.b16 %v452
    %v1228 = vunpack.c.l.b16 %v453
    %v1229 = vunpack.c.l.b16 %v454
    %v1230 = vunpack.c.l.b16 %v455
    %v1231 = vunpack.c.l.b16 %v456
    %v1232 = vunpack.c.l.b16 %v457
    %v1233 = vunpack.c.l.b16 %v458
    %v1234 = vunpack.c.l.b16 %v459
    %v1235 = vunpack.c.l.b16 %v460
    %v1236 = vunpack.c.l.b16 %v461
    %v1237 = vunpack.c.l.b16 %v462
    %v1238 = vunpack.c.l.b16 %v463
    %v1239 = vunpack.c.l.b16 %v464
    %v1240 = vunpack.c.l.b16 %v465
    %v1241 = vunpack.c.l.b16 %v466
    %v1242 = vunpack.c.l.b16 %v467
    %v1243 = vunpack.c.l.b16 %v468
    %v1244 = vunpack.c.l.b16 %v469
    %v1245 = vunpack.c.l.b16 %v470
    %v1246 = vunpack.c.l.b16 %v471
    %v1247 = vunpack.c.l.b16 %v472
    %v1248 = vunpack.c.l.b16 %v473
    %v1249 = vunpack.c.l.b16 %v474
    %v1250 = vunpack.c.l.b16 %v475
    %v1251 = vunpack.c.l.b16 %v476
    %v1252 = vunpack.c.l.b16 %v477
    %v1253 = vunpack.c.l.b16 %v478
    %v1254 = vunpack.c.l.b16 %v479
    %v1255 = vunpack.c.l.b16 %v480
    %v1256 = vunpack.c.l.b16 %v481
    %v1257 = vunpack.c.l.b16 %v482
    %v1258 = vunpack.c.l.b16 %v483
    %v1259 = vunpack.c.l.b16 %v484
    %v1260 = vunpack.c.l.b16 %v485
    %v1261 = vunpack.c.l.b16 %v486
    %v1262 = vunpack.c.l.b16 %v487
    %v1263 = vunpack.c.l.b16 %v488
    %v1264 = vunpack.c.l.b16 %v489
    %v1265 = vunpack.c.l.b16 %v490
    %v1266 = vunpack.c.l.b16 %v491
    %v1267 = vunpack.c.l.b16 %v492
    %v1268 = vunpack.c.l.b16 %v493
    %v1269 = vunpack.c.l.b16 %v494
    %v1270 = vunpack.c.l.b16 %v495
    %v1271 = vunpack.c.l.b16 %v496
    %v1272 = vunpack.c.l.b16 %v497
    %v1273 = vunpack.c.l.b16 %v498
    %v1274 = vunpack.c.l.b16 %v499
    %v1275 = vunpack.c.l.b16 %v500
    %v1276 = vunpack.c.l.b16 %v501
    %v1277 = vunpack.c.l.b16 %v502
    %v1278 = vunpack.c.l.b16 %v503
    %v1279 = vunpack.c.l.b16 %v504
    %v1280 = vunpack.c.l.b16 %v505
    %v1281 = vunpack.c.l.b16 %v506
    %v1282 = vunpack.c.l.b16 %v507
    %v1283 = vunpack.c.l.b16 %v508
    %v1284 = vunpack.c.l.b16 %v509
    %v1285 = vunpack.c.l.b16 %v510
    %v1286 = vunpack.c.l.b16 %v511
    %v1287 = vunpack.c.l.b16 %v512
    %v1288 = vunpack.c.l.b16 %v513
    %v1289 = vunpack.c.l.b16 %v514
    %v1290 = vunpack.c.l.b16 %v515
    %v1291 = vunpack.c.l.b16 %v516
    %v1292 = vunpack.c.l.b16 %v517
    %v1293 = vunpack.c.l.b16 %v518
    %v1294 = vunpack.c.l.b16 %v519
    %v1295 = vunpack.c.l.b16 %v520
    %v1296 = vunpack.c.l.b16 %v521
    %v1297 = vunpack.c.l.b16 %v522
    %v1298 = vunpack.c.l.b16 %v523
    %v1299 = vunpack.c.l.b16 %v524
    %v1300 = vunpack.c.l.b16 %v525
    %v1301 = vunpack.c.l.b16 %v526
    %v1302 = vunpack.c.l.b16 %v527
    %v1303 = vunpack.c.l.b16 %v528
    %v1304 = vunpack.c.l.b16 %v529
    %v1305 = vunpack.c.l.b16 %v530
    %v1306 = vunpack.c.l.b16 %v531
    %v1307 = vunpack.c.l.b16 %v532
    %v1308 = vunpack.c.l.b16 %v533
    %v1309 = vunpack.c.l.b16 %v534
    %v1310 = vunpack.c.l.b16 %v535
    %v1311 = vunpack.c.l.b16 %v536
    %v1312 = vunpack.c.l.b16 %v537
    %v1313 = vunpack.c.l.b16 %v538
    %v1314 = vunpack.c.l.b16 %v539
    %v1315 = vunpack.c.l.b16 %v540
    %v1316 = vunpack.c.l.b16 %v541
    %v1317 = vunpack.c.l.b16 %v542
    %v1318 = vunpack.c.l.b16 %v543
    %v1319 = vunpack.c.l.b16 %v544
    %v1320 = vunpack.c.l.b16 %v545
    %v1321 = vunpack.c.l.b16 %v546
    %v1322 = vunpack.c.l.b16 %v547
    %v1323 = vunpack.c.l.b16 %v548
    %v1324 = vunpack.c.l.b16 %v549
    %v1325 = vunpack.c.l.b16 %v550
    %v1326 = vunpack.c.l.b16 %v551
    %v1327 = vunpack.c.l.b16 %v552
    %v1328 = vunpack.c.l.b16 %v553
    %v1329 = vunpack.c.l.b16 %v554
    %v1330 = vunpack.c.l.b16 %v555
    %v1331 = vunpack.c.l.b16 %v556
    %v1332 = vunpack.c.l.b16 %v557
    %v1333 = vunpack.c.l.b16 %v558
    %v1334 = vunpack.c.l.b16 %v559
    %v1335 = vunpack.c.l.b16 %v560
    %v1336 = vunpack.c.l.b16 %v561
    %v1337 = vunpack.c.l.b16 %v562
    %v1338 = vunpack.c.l.b16 %v563
    %v1339 = vunpack.c.l.b16 %v564
    %v1340 = vunpack.c.l.b16 %v565
    %v1341 = vunpack.c.l.b16 %v566
    %v1342 = vunpack.c.l.b16 %v567
    %v1343 = vunpack.c.l.b16 %v568
    %v1344 = vunpack.c.l.b16 %v569
    %v1345 = vunpack.c.l.b16 %v570
    %v1346 = vunpack.c.l.b16 %v571
    %v1347 = vunpack.c.l.b16 %v572
    %v1348 = vunpack.c.l.b16 %v573
    %v1349 = vunpack.c.l.b16 %v574
    %v1350 = vunpack.c.l.b16 %v575
    %v1351 = vunpack.c.l.b16 %v576
    %v1352 = vunpack.c.l.b16 %v577
    %v1353 = vunpack.c.l.b16 %v578
    %v1354 = vunpack.c.l.b16 %v579
    %v1355 = vunpack.c.l.b16 %v580
    %v1356 = vunpack.c.l.b16 %v581
    %v1357 = vunpack.c.l.b16 %v582
    %v1358 = vunpack.c.l.b16 %v583
    %v1359 = vunpack.c.l.b16 %v584
    %v1360 = vunpack.c.l.b16 %v585
    %v1361 = vunpack.c.l.b16 %v586
    %v1362 = vunpack.c.l.b16 %v587
    %v1363 = vunpack.c.l.b16 %v588
    %v1364 = vunpack.c.l.b16 %v589
    %v1365 = vunpack.c.l.b16 %v590
    %v1366 = vunpack.c.l.b16 %v591
    %v1367 = vunpack.c.l.b16 %v592
    %v1368 = vunpack.c.l.b16 %v593
    %v1369 = vunpack.c.l.b16 %v594
    %v1370 = vunpack.c.l.b16 %v595
    %v1371 = vunpack.c.l.b16 %v596
    %v1372 = vunpack.c.l.b16 %v597
    %v1373 = vunpack.c.l.b16 %v598
    %v1374 = vunpack.c.l.b16 %v599
    %v1375 = vunpack.c.l.b16 %v600
    %v1376 = vunpack.c.l.b16 %v601
    %v1377 = vunpack.c.l.b16 %v602
    %v1378 = vunpack.c.l.b16 %v603
    %v1379 = vunpack.c.l.b16 %v604
    %v1380 = vunpack.c.l.b16 %v605
    %v1381 = vunpack.c.l.b16 %v606
    %v1382 = vunpack.c.l.b16 %v607
    %v1383 = vunpack.c.l.b16 %v608
    %v1384 = vunpack.c.l.b16 %v609
    %v1385 = vunpack.c.l.b16 %v610
    %v1386 = vunpack.c.l.b16 %v611
    %v1387 = vunpack.c.l.b16 %v612
    %v1388 = vunpack.c.l.b16 %v613
    %v1389 = vunpack.c.l.b16 %v614
    %v1390 = vunpack.c.l.b16 %v615
    %v1391 = vunpack.c.l.b16 %v616
    %v1392 = vunpack.c.l.b16 %v617
    %v1393 = vunpack.c.l.b16 %v618
    %v1394 = vunpack.c.l.b16 %v619
    %v1395 = vunpack.c.l.b16 %v620
    %v1396 = vpack.c.b16 %v1013, %v1012
    %v1397 = vpack.c.b16 %v1015, %v1014
    %v1398 = vpack.c.b16 %v1017, %v1016
    %v1399 = vpack.c.b16 %v1019, %v1018
    %v1400 = vpack.c.b16 %v1021, %v1020
    %v1401 = vpack.c.b16 %v1023, %v1022
    %v1402 = vpack.c.b16 %v1025, %v1024
    %v1403 = vpack.c.b16 %v1027, %v1026
    %v1404 = vpack.c.b16 %v1029, %v1028
    %v1405 = vpack.c.b16 %v1031, %v1030
    %v1406 = vpack.c.b16 %v1033, %v1032
    %v1407 = vpack.c.b16 %v1035, %v1034
    %v1408 = vpack.c.b16 %v1037, %v1036
    %v1409 = vpack.c.b16 %v1039, %v1038
    %v1410 = vpack.c.b16 %v1041, %v1040
    %v1411 = vpack.c.b16 %v1043, %v1042
    %v1412 = vpack.c.b16 %v1045, %v1044
    %v1413 = vpack.c.b16 %v1047, %v1046
    %v1414 = vpack.c.b16 %v1049, %v1048
    %v1415 = vpack.c.b16 %v1051, %v1050
    %v1416 = vpack.c.b16 %v1053, %v1052
    %v1417 = vpack.c.b16 %v1055, %v1054
    %v1418 = vpack.c.b16 %v1057, %v1056
    %v1419 = vpack.c.b16 %v1059, %v1058
    %v1420 = vpack.c.b16 %v1061, %v1060
    %v1421 = vpack.c.b16 %v1063, %v1062
    %v1422 = vpack.c.b16 %v1065, %v1064
    %v1423 = vpack.c.b16 %v1067, %v1066
    %v1424 = vpack.c.b16 %v1069, %v1068
    %v1425 = vpack.c.b16 %v1071, %v1070
    %v1426 = vpack.c.b16 %v1073, %v1072
    %v1427 = vpack.c.b16 %v1075, %v1074
    %v1428 = vpack.c.b16 %v1077, %v1076
    %v1429 = vpack.c.b16 %v1079, %v1078
    %v1430 = vpack.c.b16 %v1081, %v1080
    %v1431 = vpack.c.b16 %v1083, %v1082
    %v1432 = vpack.c.b16 %v1085, %v1084
    %v1433 = vpack.c.b16 %v1087, %v1086
    %v1434 = vpack.c.b16 %v1089, %v1088
    %v1435 = vpack.c.b16 %v1091, %v1090
    %v1436 = vpack.c.b16 %v1093, %v1092
    %v1437 = vpack.c.b16 %v1095, %v1094
    %v1438 = vpack.c.b16 %v1097, %v1096
    %v1439 = vpack.c.b16 %v1099, %v1098
    %v1440 = vpack.c.b16 %v1101, %v1100
    %v1441 = vpack.c.b16 %v1103, %v1102
    %v1442 = vpack.c.b16 %v1105, %v1104
    %v1443 = vpack.c.b16 %v1107, %v1106
    %v1444 = vpack.c.b16 %v1109, %v1108
    %v1445 = vpack.c.b16 %v1111, %v1110
    %v1446 = vpack.c.b16 %v1113, %v1112
    %v1447 = vpack.c.b16 %v1115, %v1114
    %v1448 = vpack.c.b16 %v1117, %v1116
    %v1449 = vpack.c.b16 %v1119, %v1118
    %v1450 = vpack.c.b16 %v1121, %v1120
    %v1451 = vpack.c.b16 %v1123, %v1122
    %v1452 = vpack.c.b16 %v1125, %v1124
    %v1453 = vpack.c.b16 %v1127, %v1126
    %v1454 = vpack.c.b16 %v1129, %v1128
    %v1455 = vpack.c.b16 %v1131, %v1130
    %v1456 = vpack.c.b16 %v1133, %v1132
    %v1457 = vpack.c.b16 %v1135, %v1134
    %v1458 = vpack.c.b16 %v1137, %v1136
    %v1459 = vpack.c.b16 %v1139, %v1138
    %v1460 = vpack.c.b16 %v1141, %v1140
    %v1461 = vpack.c.b16 %v1143, %v1142
    %v1462 = vpack.c.b16 %v1145, %v1144
    %v1463 = vpack.c.b16 %v1147, %v1146
    %v1464 = vpack.c.b16 %v1149, %v1148
    %v1465 = vpack.c.b16 %v1151, %v1150
    %v1466 = vpack.c.b16 %v1153, %v1152
    %v1467 = vpack.c.b16 %v1155, %v1154
    %v1468 = vpack.c.b16 %v1157, %v1156
    %v1469 = vpack.c.b16 %v1159, %v1158
    %v1470 = vpack.c.b16 %v1161, %v1160
    %v1471 = vpack.c.b16 %v1163, %v1162
    %v1472 = vpack.c.b16 %v1165, %v1164
    %v1473 = vpack.c.b16 %v1167, %v1166
    %v1474 = vpack.c.b16 %v1169, %v1168
    %v1475 = vpack.c.b16 %v1171, %v1170
    %v1476 = vpack.c.b16 %v1173, %v1172
    %v1477 = vpack.c.b16 %v1175, %v1174
    %v1478 = vpack.c.b16 %v1177, %v1176
    %v1479 = vpack.c.b16 %v1179, %v1178
    %v1480 = vpack.c.b16 %v1181, %v1180
    %v1481 = vpack.c.b16 %v1183, %v1182
    %v1482 = vpack.c.b16 %v1185, %v1184
    %v1483 = vpack.c.b16 %v1187, %v1186
    %v1484 = vpack.c.b16 %v1189, %v1188
    %v1485 = vpack.c.b16 %v1191, %v1190
    %v1486 = vpack.c.b16 %v1193, %v1192
    %v1487 = vpack.c.b16 %v1195, %v1194
    %v1488 = vpack.c.b16 %v1197, %v1196
    %v1489 = vpack.c.b16 %v1199, %v1198
    %v1490 = vpack.c.b16 %v1201, %v1200
    %v1491 = vpack.c.b16 %v1203, %v1202
    %v1492 = vpack.c.b16 %v1205, %v1204
    %v1493 = vpack.c.b16 %v1207, %v1206
    %v1494 = vpack.c.b16 %v1209, %v1208
    %v1495 = vpack.c.b16 %v1211, %v1210
    %v1496 = vpack.c.b16 %v1213, %v1212
    %v1497 = vpack.c.b16 %v1215, %v1214
    %v1498 = vpack.c.b16 %v1217, %v1216
    %v1499 = vpack.c.b16 %v1219, %v1218
    %v1500 = vpack.c.b16 %v1221, %v1220
    %v1501 = vpack.c.b16 %v1223, %v1222
    %v1502 = vpack.c.b16 %v1225, %v1224
    %v1503 = vpack.c.b16 %v1227, %v1226
    %v1504 = vpack.c.b16 %v1229, %v1228
    %v1505 = vpack.c.b16 %v1231, %v1230
    %v1506 = vpack.c.b16 %v1233, %v1232
    %v1507 = vpack.c.b16 %v1235, %v1234
    %v1508 = vpack.c.b16 %v1237, %v1236
    %v1509 = vpack.c.b16 %v1239, %v1238
    %v1510 = vpack.c.b16 %v1241, %v1240
    %v1511 = vpack.c.b16 %v1243, %v1242
    %v1512 = vpack.c.b16 %v1245, %v1244
    %v1513 = vpack.c.b16 %v1247, %v1246
    %v1514 = vpack.c.b16 %v1249, %v1248
    %v1515 = vpack.c.b16 %v1251, %v1250
    %v1516 = vpack.c.b16 %v1253, %v1252
    %v1517 = vpack.c.b16 %v1255, %v1254
    %v1518 = vpack.c.b16 %v1257, %v1256
    %v1519 = vpack.c.b16 %v1259, %v1258
    %v1520 = vpack.c.b16 %v1261, %v1260
    %v1521 = vpack.c.b16 %v1263, %v1262
    %v1522 = vpack.c.b16 %v1265, %v1264
    %v1523 = vpack.c.b16 %v1267, %v1266
    %v1524 = vpack.c.b16 %v1269, %v1268
    %v1525 = vpack.c.b16 %v1271, %v1270
    %v1526 = vpack.c.b16 %v1273, %v1272
    %v1527 = vpack.c.b16 %v1275, %v1274
    %v1528 = vpack.c.b16 %v1277, %v1276
    %v1529 = vpack.c.b16 %v1279, %v1278
    %v1530 = vpack.c.b16 %v1281, %v1280
    %v1531 = vpack.c.b16 %v1283, %v1282
    %v1532 = vpack.c.b16 %v1285, %v1284
    %v1533 = vpack.c.b16 %v1287, %v1286
    %v1534 = vpack.c.b16 %v1289, %v1288
    %v1535 = vpack.c.b16 %v1291, %v1290
    %v1536 = vpack.c.b16 %v1293, %v1292
    %v1537 = vpack.c.b16 %v1295, %v1294
    %v1538 = vpack.c.b16 %v1297, %v1296
    %v1539 = vpack.c.b16 %v1299, %v1298
    %v1540 = vpack.c.b16 %v1301, %v1300
    %v1541 = vpack.c.b16 %v1303, %v1302
    %v1542 = vpack.c.b16 %v1305, %v1304
    %v1543 = vpack.c.b16 %v1307, %v1306
    %v1544 = vpack.c.b16 %v1309, %v1308
    %v1545 = vpack.c.b16 %v1311, %v1310
    %v1546 = vpack.c.b16 %v1313, %v1312
    %v1547 = vpack.c.b16 %v1315, %v1314
    %v1548 = vpack.c.b16 %v1317, %v1316
    %v1549 = vpack.c.b16 %v1319, %v1318
    %v1550 = vpack.c.b16 %v1321, %v1320
    %v1551 = vpack.c.b16 %v1323, %v1322
    %v1552 = vpack.c.b16 %v1325, %v1324
    %v1553 = vpack.c.b16 %v1327, %v1326
    %v1554 = vpack.c.b16 %v1329, %v1328
    %v1555 = vpack.c.b16 %v1331, %v1330
    %v1556 = vpack.c.b16 %v1333, %v1332
    %v1557 = vpack.c.b16 %v1335, %v1334
    %v1558 = vpack.c.b16 %v1337, %v1336
    %v1559 = vpack.c.b16 %v1339, %v1338
    %v1560 = vpack.c.b16 %v1341, %v1340
    %v1561 = vpack.c.b16 %v1343, %v1342
    %v1562 = vpack.c.b16 %v1345, %v1344
    %v1563 = vpack.c.b16 %v1347, %v1346
    %v1564 = vpack.c.b16 %v1349, %v1348
    %v1565 = vpack.c.b16 %v1351, %v1350
    %v1566 = vpack.c.b16 %v1353, %v1352
    %v1567 = vpack.c.b16 %v1355, %v1354
    %v1568 = vpack.c.b16 %v1357, %v1356
    %v1569 = vpack.c.b16 %v1359, %v1358
    %v1570 = vpack.c.b16 %v1361, %v1360
    %v1571 = vpack.c.b16 %v1363, %v1362
    %v1572 = vpack.c.b16 %v1365, %v1364
    %v1573 = vpack.c.b16 %v1367, %v1366
    %v1574 = vpack.c.b16 %v1369, %v1368
    %v1575 = vpack.c.b16 %v1371, %v1370
    %v1576 = vpack.c.b16 %v1373, %v1372
    %v1577 = vpack.c.b16 %v1375, %v1374
    %v1578 = vpack.c.b16 %v1377, %v1376
    %v1579 = vpack.c.b16 %v1379, %v1378
    %v1580 = vpack.c.b16 %v1381, %v1380
    %v1581 = vpack.c.b16 %v1383, %v1382
    %v1582 = vpack.c.b16 %v1385, %v1384
    %v1583 = vpack.c.b16 %v1387, %v1386
    %v1584 = vpack.c.b16 %v1389, %v1388
    %v1585 = vpack.c.b16 %v1391, %v1390
    %v1586 = vpack.c.b16 %v1393, %v1392
    %v1587 = vpack.c.b16 %v1395, %v1394
    %1780 = vmatprep.subr.bf16.mxu0 0
    %1781 = vmatpush1.bf16.msra.mxu0 %v1403
    %1782 = vmatprep.subr.bf16.mxu0 0
    %1783 = vmatpush1.bf16.msra.mxu0 %v1402
    %1784 = vmatprep.subr.bf16.mxu0 0
    %1785 = vmatpush1.bf16.msra.mxu0 %v1401
    %1786 = vmatprep.subr.bf16.mxu0 0
    %1787 = vmatpush1.bf16.msra.mxu0 %v1400
    %1788 = vmatprep.subr.bf16.mxu0 0
    %1789 = vmatpush1.bf16.msra.mxu0 %v1399
    %1790 = vmatprep.subr.bf16.mxu0 0
    %1791 = vmatpush1.bf16.msra.mxu0 %v1398
    %1792 = vmatprep.subr.bf16.mxu0 0
    %1793 = vmatpush1.bf16.msra.mxu0 %v1397
    %1794 = vmatprep.subr.bf16.mxu0 0
    %1795 = vmatpush1.bf16.msra.mxu0 %v1396
    %1796 = vmatprep.subr.bf16.mxu0 0
    %1797 = vmatpush2.bf16.msra.mxu0 %v1411
    %1798 = vmatprep.subr.bf16.mxu0 0
    %1799 = vmatpush2.bf16.msra.mxu0 %v1410
    %1800 = vmatprep.subr.bf16.mxu0 0
    %1801 = vmatpush2.bf16.msra.mxu0 %v1409
    %1802 = vmatprep.subr.bf16.mxu0 0
    %1803 = vmatpush2.bf16.msra.mxu0 %v1408
    %1804 = vmatprep.subr.bf16.mxu0 0
    %1805 = vmatpush2.bf16.msra.mxu0 %v1407
    %1806 = vmatprep.subr.bf16.mxu0 0
    %1807 = vmatpush2.bf16.msra.mxu0 %v1406
    %1808 = vmatprep.subr.bf16.mxu0 0
    %1809 = vmatpush2.bf16.msra.mxu0 %v1405
    %1810 = vmatprep.subr.bf16.mxu0 0
    %1811 = vmatpush2.bf16.msra.mxu0 %v1404
    %1812 = vmatprep.mubr.bf16.mxu0 %v214
    %1813 = vmatmul.mubr.bf16.gmra.mxu0 %v213
    %v1814 = vpop.f32.mrf.mxu0
    %v1815 = vadd.f32 %v626, %v1814
    %v1816 = vpop.f32.mrf.mxu0
    %v1817 = vpop.f32.mrf.mxu0
    %v1818 = vpop.f32.mrf.mxu0
    %1819 = vdwg.mxu0
    %1820 = vmatprep.subr.bf16.mxu0 0
    %1821 = vmatpush1.bf16.msra.mxu0 %v1419
    %1822 = vmatprep.subr.bf16.mxu0 0
    %1823 = vmatpush1.bf16.msra.mxu0 %v1418
    %1824 = vmatprep.subr.bf16.mxu0 0
    %1825 = vmatpush1.bf16.msra.mxu0 %v1417
    %1826 = vmatprep.subr.bf16.mxu0 0
    %1827 = vmatpush1.bf16.msra.mxu0 %v1416
    %1828 = vmatprep.subr.bf16.mxu0 0
    %1829 = vmatpush1.bf16.msra.mxu0 %v1415
    %1830 = vmatprep.subr.bf16.mxu0 0
    %1831 = vmatpush1.bf16.msra.mxu0 %v1414
    %1832 = vmatprep.subr.bf16.mxu0 0
    %1833 = vmatpush1.bf16.msra.mxu0 %v1413
    %1834 = vmatprep.subr.bf16.mxu0 0
    %1835 = vmatpush1.bf16.msra.mxu0 %v1412
    %1836 = vmatprep.subr.bf16.mxu0 0
    %1837 = vmatpush2.bf16.msra.mxu0 %v1427
    %1838 = vmatprep.subr.bf16.mxu0 0
    %1839 = vmatpush2.bf16.msra.mxu0 %v1426
    %1840 = vmatprep.subr.bf16.mxu0 0
    %1841 = vmatpush2.bf16.msra.mxu0 %v1425
    %1842 = vmatprep.subr.bf16.mxu0 0
    %1843 = vmatpush2.bf16.msra.mxu0 %v1424
    %1844 = vmatprep.subr.bf16.mxu0 0
    %1845 = vmatpush2.bf16.msra.mxu0 %v1423
    %1846 = vmatprep.subr.bf16.mxu0 0
    %1847 = vmatpush2.bf16.msra.mxu0 %v1422
    %1848 = vmatprep.subr.bf16.mxu0 0
    %1849 = vmatpush2.bf16.msra.mxu0 %v1421
    %1850 = vmatprep.subr.bf16.mxu0 0
    %1851 = vmatpush2.bf16.msra.mxu0 %v1420
    %1852 = vmatprep.mubr.bf16.mxu0 %v216
    %1853 = vmatmul.mubr.bf16.gmra.mxu0 %v215
    %v1854 = vpop.f32.mrf.mxu0
    %v1855 = vadd.f32 %v1815, %v1854
    %v1856 = vpop.f32.mrf.mxu0
    %v1857 = vpop.f32.mrf.mxu0
    %v1858 = vpop.f32.mrf.mxu0
    %1859 = vdwg.mxu0
    %1860 = vmatprep.subr.bf16.mxu0 0
    %1861 = vmatpush1.bf16.msra.mxu0 %v1435
    %1862 = vmatprep.subr.bf16.mxu0 0
    %1863 = vmatpush1.bf16.msra.mxu0 %v1434
    %1864 = vmatprep.subr.bf16.mxu0 0
    %1865 = vmatpush1.bf16.msra.mxu0 %v1433
    %1866 = vmatprep.subr.bf16.mxu0 0
    %1867 = vmatpush1.bf16.msra.mxu0 %v1432
    %1868 = vmatprep.subr.bf16.mxu0 0
    %1869 = vmatpush1.bf16.msra.mxu0 %v1431
    %1870 = vmatprep.subr.bf16.mxu0 0
    %1871 = vmatpush1.bf16.msra.mxu0 %v1430
    %1872 = vmatprep.subr.bf16.mxu0 0
    %1873 = vmatpush1.bf16.msra.mxu0 %v1429
    %1874 = vmatprep.subr.bf16.mxu0 0
    %1875 = vmatpush1.bf16.msra.mxu0 %v1428
    %1876 = vmatprep.subr.bf16.mxu0 0
    %1877 = vmatpush2.bf16.msra.mxu0 %v1443
    %1878 = vmatprep.subr.bf16.mxu0 0
    %1879 = vmatpush2.bf16.msra.mxu0 %v1442
    %1880 = vmatprep.subr.bf16.mxu0 0
    %1881 = vmatpush2.bf16.msra.mxu0 %v1441
    %1882 = vmatprep.subr.bf16.mxu0 0
    %1883 = vmatpush2.bf16.msra.mxu0 %v1440
    %1884 = vmatprep.subr.bf16.mxu0 0
    %1885 = vmatpush2.bf16.msra.mxu0 %v1439
    %1886 = vmatprep.subr.bf16.mxu0 0
    %1887 = vmatpush2.bf16.msra.mxu0 %v1438
    %1888 = vmatprep.subr.bf16.mxu0 0
    %1889 = vmatpush2.bf16.msra.mxu0 %v1437
    %1890 = vmatprep.subr.bf16.mxu0 0
    %1891 = vmatpush2.bf16.msra.mxu0 %v1436
    %1892 = vmatprep.mubr.bf16.mxu0 %v218
    %1893 = vmatmul.mubr.bf16.gmra.mxu0 %v217
    %v1894 = vpop.f32.mrf.mxu0
    %v1895 = vadd.f32 %v1855, %v1894
    %v1896 = vpop.f32.mrf.mxu0
    %v1897 = vpop.f32.mrf.mxu0
    %v1898 = vpop.f32.mrf.mxu0
    %1899 = vdwg.mxu0
    %1900 = vmatprep.subr.bf16.mxu0 0
    %1901 = vmatpush1.bf16.msra.mxu0 %v1451
    %1902 = vmatprep.subr.bf16.mxu0 0
    %1903 = vmatpush1.bf16.msra.mxu0 %v1450
    %1904 = vmatprep.subr.bf16.mxu0 0
    %1905 = vmatpush1.bf16.msra.mxu0 %v1449
    %1906 = vmatprep.subr.bf16.mxu0 0
    %1907 = vmatpush1.bf16.msra.mxu0 %v1448
    %1908 = vmatprep.subr.bf16.mxu0 0
    %1909 = vmatpush1.bf16.msra.mxu0 %v1447
    %1910 = vmatprep.subr.bf16.mxu0 0
    %1911 = vmatpush1.bf16.msra.mxu0 %v1446
    %1912 = vmatprep.subr.bf16.mxu0 0
    %1913 = vmatpush1.bf16.msra.mxu0 %v1445
    %1914 = vmatprep.subr.bf16.mxu0 0
    %1915 = vmatpush1.bf16.msra.mxu0 %v1444
    %1916 = vmatprep.subr.bf16.mxu0 0
    %1917 = vmatpush2.bf16.msra.mxu0 %v1459
    %1918 = vmatprep.subr.bf16.mxu0 0
    %1919 = vmatpush2.bf16.msra.mxu0 %v1458
    %1920 = vmatprep.subr.bf16.mxu0 0
    %1921 = vmatpush2.bf16.msra.mxu0 %v1457
    %1922 = vmatprep.subr.bf16.mxu0 0
    %1923 = vmatpush2.bf16.msra.mxu0 %v1456
    %1924 = vmatprep.subr.bf16.mxu0 0
    %1925 = vmatpush2.bf16.msra.mxu0 %v1455
    %1926 = vmatprep.subr.bf16.mxu0 0
    %1927 = vmatpush2.bf16.msra.mxu0 %v1454
    %1928 = vmatprep.subr.bf16.mxu0 0
    %1929 = vmatpush2.bf16.msra.mxu0 %v1453
    %1930 = vmatprep.subr.bf16.mxu0 0
    %1931 = vmatpush2.bf16.msra.mxu0 %v1452
    %1932 = vmatprep.mubr.bf16.mxu0 %v220
    %1933 = vmatmul.mubr.bf16.gmra.mxu0 %v219
    %v1934 = vpop.f32.mrf.mxu0
    %v1935 = vadd.f32 %v1895, %v1934
    %v1936 = vpop.f32.mrf.mxu0
    %v1937 = vpop.f32.mrf.mxu0
    %v1938 = vpop.f32.mrf.mxu0
    %1939 = vdwg.mxu0
    %1940 = vmatprep.subr.bf16.mxu0 0
    %1941 = vmatpush1.bf16.msra.mxu0 %v1467
    %1942 = vmatprep.subr.bf16.mxu0 0
    %1943 = vmatpush1.bf16.msra.mxu0 %v1466
    %1944 = vmatprep.subr.bf16.mxu0 0
    %1945 = vmatpush1.bf16.msra.mxu0 %v1465
    %1946 = vmatprep.subr.bf16.mxu0 0
    %1947 = vmatpush1.bf16.msra.mxu0 %v1464
    %1948 = vmatprep.subr.bf16.mxu0 0
    %1949 = vmatpush1.bf16.msra.mxu0 %v1463
    %1950 = vmatprep.subr.bf16.mxu0 0
    %1951 = vmatpush1.bf16.msra.mxu0 %v1462
    %1952 = vmatprep.subr.bf16.mxu0 0
    %1953 = vmatpush1.bf16.msra.mxu0 %v1461
    %1954 = vmatprep.subr.bf16.mxu0 0
    %1955 = vmatpush1.bf16.msra.mxu0 %v1460
    %1956 = vmatprep.subr.bf16.mxu0 0
    %1957 = vmatpush2.bf16.msra.mxu0 %v1475
    %1958 = vmatprep.subr.bf16.mxu0 0
    %1959 = vmatpush2.bf16.msra.mxu0 %v1474
    %1960 = vmatprep.subr.bf16.mxu0 0
    %1961 = vmatpush2.bf16.msra.mxu0 %v1473
    %1962 = vmatprep.subr.bf16.mxu0 0
    %1963 = vmatpush2.bf16.msra.mxu0 %v1472
    %1964 = vmatprep.subr.bf16.mxu0 0
    %1965 = vmatpush2.bf16.msra.mxu0 %v1471
    %1966 = vmatprep.subr.bf16.mxu0 0
    %1967 = vmatpush2.bf16.msra.mxu0 %v1470
    %1968 = vmatprep.subr.bf16.mxu0 0
    %1969 = vmatpush2.bf16.msra.mxu0 %v1469
    %1970 = vmatprep.subr.bf16.mxu0 0
    %1971 = vmatpush2.bf16.msra.mxu0 %v1468
    %1972 = vmatprep.mubr.bf16.mxu0 %v222
    %1973 = vmatmul.mubr.bf16.gmra.mxu0 %v221
    %v1974 = vpop.f32.mrf.mxu0
    %v1975 = vadd.f32 %v1935, %v1974
    %v1976 = vpop.f32.mrf.mxu0
    %v1977 = vpop.f32.mrf.mxu0
    %v1978 = vpop.f32.mrf.mxu0
    %1979 = vdwg.mxu0
    %1980 = vmatprep.subr.bf16.mxu0 0
    %1981 = vmatpush1.bf16.msra.mxu0 %v1483
    %1982 = vmatprep.subr.bf16.mxu0 0
    %1983 = vmatpush1.bf16.msra.mxu0 %v1482
    %1984 = vmatprep.subr.bf16.mxu0 0
    %1985 = vmatpush1.bf16.msra.mxu0 %v1481
    %1986 = vmatprep.subr.bf16.mxu0 0
    %1987 = vmatpush1.bf16.msra.mxu0 %v1480
    %1988 = vmatprep.subr.bf16.mxu0 0
    %1989 = vmatpush1.bf16.msra.mxu0 %v1479
    %1990 = vmatprep.subr.bf16.mxu0 0
    %1991 = vmatpush1.bf16.msra.mxu0 %v1478
    %1992 = vmatprep.subr.bf16.mxu0 0
    %1993 = vmatpush1.bf16.msra.mxu0 %v1477
    %1994 = vmatprep.subr.bf16.mxu0 0
    %1995 = vmatpush1.bf16.msra.mxu0 %v1476
    %1996 = vmatprep.subr.bf16.mxu0 0
    %1997 = vmatpush2.bf16.msra.mxu0 %v1491
    %1998 = vmatprep.subr.bf16.mxu0 0
    %1999 = vmatpush2.bf16.msra.mxu0 %v1490
    %2000 = vmatprep.subr.bf16.mxu0 0
    %2001 = vmatpush2.bf16.msra.mxu0 %v1489
    %2002 = vmatprep.subr.bf16.mxu0 0
    %2003 = vmatpush2.bf16.msra.mxu0 %v1488
    %2004 = vmatprep.subr.bf16.mxu0 0
    %2005 = vmatpush2.bf16.msra.mxu0 %v1487
    %2006 = vmatprep.subr.bf16.mxu0 0
    %2007 = vmatpush2.bf16.msra.mxu0 %v1486
    %2008 = vmatprep.subr.bf16.mxu0 0
    %2009 = vmatpush2.bf16.msra.mxu0 %v1485
    %2010 = vmatprep.subr.bf16.mxu0 0
    %2011 = vmatpush2.bf16.msra.mxu0 %v1484
    %2012 = vmatprep.mubr.bf16.mxu0 %v224
    %2013 = vmatmul.mubr.bf16.gmra.mxu0 %v223
    %v2014 = vpop.f32.mrf.mxu0
    %v2015 = vadd.f32 %v1975, %v2014
    %v2016 = vpop.f32.mrf.mxu0
    %v2017 = vpop.f32.mrf.mxu0
    %v2018 = vpop.f32.mrf.mxu0
    %2019 = vdwg.mxu0
    %2020 = vmatprep.subr.bf16.mxu0 0
    %2021 = vmatpush1.bf16.msra.mxu0 %v1499
    %2022 = vmatprep.subr.bf16.mxu0 0
    %2023 = vmatpush1.bf16.msra.mxu0 %v1498
    %2024 = vmatprep.subr.bf16.mxu0 0
    %2025 = vmatpush1.bf16.msra.mxu0 %v1497
    %2026 = vmatprep.subr.bf16.mxu0 0
    %2027 = vmatpush1.bf16.msra.mxu0 %v1496
    %2028 = vmatprep.subr.bf16.mxu0 0
    %2029 = vmatpush1.bf16.msra.mxu0 %v1495
    %2030 = vmatprep.subr.bf16.mxu0 0
    %2031 = vmatpush1.bf16.msra.mxu0 %v1494
    %2032 = vmatprep.subr.bf16.mxu0 0
    %2033 = vmatpush1.bf16.msra.mxu0 %v1493
    %2034 = vmatprep.subr.bf16.mxu0 0
    %2035 = vmatpush1.bf16.msra.mxu0 %v1492
    %2036 = vmatprep.subr.bf16.mxu0 0
    %2037 = vmatpush2.bf16.msra.mxu0 %v1507
    %2038 = vmatprep.subr.bf16.mxu0 0
    %2039 = vmatpush2.bf16.msra.mxu0 %v1506
    %2040 = vmatprep.subr.bf16.mxu0 0
    %2041 = vmatpush2.bf16.msra.mxu0 %v1505
    %2042 = vmatprep.subr.bf16.mxu0 0
    %2043 = vmatpush2.bf16.msra.mxu0 %v1504
    %2044 = vmatprep.subr.bf16.mxu0 0
    %2045 = vmatpush2.bf16.msra.mxu0 %v1503
    %2046 = vmatprep.subr.bf16.mxu0 0
    %2047 = vmatpush2.bf16.msra.mxu0 %v1502
    %2048 = vmatprep.subr.bf16.mxu0 0
    %2049 = vmatpush2.bf16.msra.mxu0 %v1501
    %2050 = vmatprep.subr.bf16.mxu0 0
    %2051 = vmatpush2.bf16.msra.mxu0 %v1500
    %2052 = vmatprep.mubr.bf16.mxu0 %v226
    %2053 = vmatmul.mubr.bf16.gmra.mxu0 %v225
    %v2054 = vpop.f32.mrf.mxu0
    %v2055 = vadd.f32 %v2015, %v2054
    %v2056 = vpop.f32.mrf.mxu0
    %v2057 = vpop.f32.mrf.mxu0
    %v2058 = vpop.f32.mrf.mxu0
    %2059 = vdwg.mxu0
    %2060 = vmatprep.subr.bf16.mxu0 0
    %2061 = vmatpush1.bf16.msra.mxu0 %v1515
    %2062 = vmatprep.subr.bf16.mxu0 0
    %2063 = vmatpush1.bf16.msra.mxu0 %v1514
    %2064 = vmatprep.subr.bf16.mxu0 0
    %2065 = vmatpush1.bf16.msra.mxu0 %v1513
    %2066 = vmatprep.subr.bf16.mxu0 0
    %2067 = vmatpush1.bf16.msra.mxu0 %v1512
    %2068 = vmatprep.subr.bf16.mxu0 0
    %2069 = vmatpush1.bf16.msra.mxu0 %v1511
    %2070 = vmatprep.subr.bf16.mxu0 0
    %2071 = vmatpush1.bf16.msra.mxu0 %v1510
    %2072 = vmatprep.subr.bf16.mxu0 0
    %2073 = vmatpush1.bf16.msra.mxu0 %v1509
    %2074 = vmatprep.subr.bf16.mxu0 0
    %2075 = vmatpush1.bf16.msra.mxu0 %v1508
    %2076 = vmatprep.subr.bf16.mxu0 0
    %2077 = vmatpush2.bf16.msra.mxu0 %v1523
    %2078 = vmatprep.subr.bf16.mxu0 0
    %2079 = vmatpush2.bf16.msra.mxu0 %v1522
    %2080 = vmatprep.subr.bf16.mxu0 0
    %2081 = vmatpush2.bf16.msra.mxu0 %v1521
    %2082 = vmatprep.subr.bf16.mxu0 0
    %2083 = vmatpush2.bf16.msra.mxu0 %v1520
    %2084 = vmatprep.subr.bf16.mxu0 0
    %2085 = vmatpush2.bf16.msra.mxu0 %v1519
    %2086 = vmatprep.subr.bf16.mxu0 0
    %2087 = vmatpush2.bf16.msra.mxu0 %v1518
    %2088 = vmatprep.subr.bf16.mxu0 0
    %2089 = vmatpush2.bf16.msra.mxu0 %v1517
    %2090 = vmatprep.subr.bf16.mxu0 0
    %2091 = vmatpush2.bf16.msra.mxu0 %v1516
    %2092 = vmatprep.mubr.bf16.mxu0 %v228
    %2093 = vmatmul.mubr.bf16.gmra.mxu0 %v227
    %v2094 = vpop.f32.mrf.mxu0
    %v2095 = vadd.f32 %v2055, %v2094
    %v2096 = vpop.f32.mrf.mxu0
    %v2097 = vpop.f32.mrf.mxu0
    %v2098 = vpop.f32.mrf.mxu0
    %2099 = vdwg.mxu0
    %2100 = vmatprep.subr.bf16.mxu0 0
    %2101 = vmatpush1.bf16.msra.mxu0 %v1531
    %2102 = vmatprep.subr.bf16.mxu0 0
    %2103 = vmatpush1.bf16.msra.mxu0 %v1530
    %2104 = vmatprep.subr.bf16.mxu0 0
    %2105 = vmatpush1.bf16.msra.mxu0 %v1529
    %2106 = vmatprep.subr.bf16.mxu0 0
    %2107 = vmatpush1.bf16.msra.mxu0 %v1528
    %2108 = vmatprep.subr.bf16.mxu0 0
    %2109 = vmatpush1.bf16.msra.mxu0 %v1527
    %2110 = vmatprep.subr.bf16.mxu0 0
    %2111 = vmatpush1.bf16.msra.mxu0 %v1526
    %2112 = vmatprep.subr.bf16.mxu0 0
    %2113 = vmatpush1.bf16.msra.mxu0 %v1525
    %2114 = vmatprep.subr.bf16.mxu0 0
    %2115 = vmatpush1.bf16.msra.mxu0 %v1524
    %2116 = vmatprep.subr.bf16.mxu0 0
    %2117 = vmatpush2.bf16.msra.mxu0 %v1539
    %2118 = vmatprep.subr.bf16.mxu0 0
    %2119 = vmatpush2.bf16.msra.mxu0 %v1538
    %2120 = vmatprep.subr.bf16.mxu0 0
    %2121 = vmatpush2.bf16.msra.mxu0 %v1537
    %2122 = vmatprep.subr.bf16.mxu0 0
    %2123 = vmatpush2.bf16.msra.mxu0 %v1536
    %2124 = vmatprep.subr.bf16.mxu0 0
    %2125 = vmatpush2.bf16.msra.mxu0 %v1535
    %2126 = vmatprep.subr.bf16.mxu0 0
    %2127 = vmatpush2.bf16.msra.mxu0 %v1534
    %2128 = vmatprep.subr.bf16.mxu0 0
    %2129 = vmatpush2.bf16.msra.mxu0 %v1533
    %2130 = vmatprep.subr.bf16.mxu0 0
    %2131 = vmatpush2.bf16.msra.mxu0 %v1532
    %2132 = vmatprep.mubr.bf16.mxu0 %v230
    %2133 = vmatmul.mubr.bf16.gmra.mxu0 %v229
    %v2134 = vpop.f32.mrf.mxu0
    %v2135 = vadd.f32 %v2095, %v2134
    %v2136 = vpop.f32.mrf.mxu0
    %v2137 = vpop.f32.mrf.mxu0
    %v2138 = vpop.f32.mrf.mxu0
    %2139 = vdwg.mxu0
    %2140 = vmatprep.subr.bf16.mxu0 0
    %2141 = vmatpush1.bf16.msra.mxu0 %v1547
    %2142 = vmatprep.subr.bf16.mxu0 0
    %2143 = vmatpush1.bf16.msra.mxu0 %v1546
    %2144 = vmatprep.subr.bf16.mxu0 0
    %2145 = vmatpush1.bf16.msra.mxu0 %v1545
    %2146 = vmatprep.subr.bf16.mxu0 0
    %2147 = vmatpush1.bf16.msra.mxu0 %v1544
    %2148 = vmatprep.subr.bf16.mxu0 0
    %2149 = vmatpush1.bf16.msra.mxu0 %v1543
    %2150 = vmatprep.subr.bf16.mxu0 0
    %2151 = vmatpush1.bf16.msra.mxu0 %v1542
    %2152 = vmatprep.subr.bf16.mxu0 0
    %2153 = vmatpush1.bf16.msra.mxu0 %v1541
    %2154 = vmatprep.subr.bf16.mxu0 0
    %2155 = vmatpush1.bf16.msra.mxu0 %v1540
    %2156 = vmatprep.subr.bf16.mxu0 0
    %2157 = vmatpush2.bf16.msra.mxu0 %v1555
    %2158 = vmatprep.subr.bf16.mxu0 0
    %2159 = vmatpush2.bf16.msra.mxu0 %v1554
    %2160 = vmatprep.subr.bf16.mxu0 0
    %2161 = vmatpush2.bf16.msra.mxu0 %v1553
    %2162 = vmatprep.subr.bf16.mxu0 0
    %2163 = vmatpush2.bf16.msra.mxu0 %v1552
    %2164 = vmatprep.subr.bf16.mxu0 0
    %2165 = vmatpush2.bf16.msra.mxu0 %v1551
    %2166 = vmatprep.subr.bf16.mxu0 0
    %2167 = vmatpush2.bf16.msra.mxu0 %v1550
    %2168 = vmatprep.subr.bf16.mxu0 0
    %2169 = vmatpush2.bf16.msra.mxu0 %v1549
    %2170 = vmatprep.subr.bf16.mxu0 0
    %2171 = vmatpush2.bf16.msra.mxu0 %v1548
    %2172 = vmatprep.mubr.bf16.mxu0 %v232
    %2173 = vmatmul.mubr.bf16.gmra.mxu0 %v231
    %v2174 = vpop.f32.mrf.mxu0
    %v2175 = vadd.f32 %v2135, %v2174
    %v2176 = vpop.f32.mrf.mxu0
    %v2177 = vpop.f32.mrf.mxu0
    %v2178 = vpop.f32.mrf.mxu0
    %2179 = vdwg.mxu0
    %2180 = vmatprep.subr.bf16.mxu0 0
    %2181 = vmatpush1.bf16.msra.mxu0 %v1563
    %2182 = vmatprep.subr.bf16.mxu0 0
    %2183 = vmatpush1.bf16.msra.mxu0 %v1562
    %2184 = vmatprep.subr.bf16.mxu0 0
    %2185 = vmatpush1.bf16.msra.mxu0 %v1561
    %2186 = vmatprep.subr.bf16.mxu0 0
    %2187 = vmatpush1.bf16.msra.mxu0 %v1560
    %2188 = vmatprep.subr.bf16.mxu0 0
    %2189 = vmatpush1.bf16.msra.mxu0 %v1559
    %2190 = vmatprep.subr.bf16.mxu0 0
    %2191 = vmatpush1.bf16.msra.mxu0 %v1558
    %2192 = vmatprep.subr.bf16.mxu0 0
    %2193 = vmatpush1.bf16.msra.mxu0 %v1557
    %2194 = vmatprep.subr.bf16.mxu0 0
    %2195 = vmatpush1.bf16.msra.mxu0 %v1556
    %2196 = vmatprep.subr.bf16.mxu0 0
    %2197 = vmatpush2.bf16.msra.mxu0 %v1571
    %2198 = vmatprep.subr.bf16.mxu0 0
    %2199 = vmatpush2.bf16.msra.mxu0 %v1570
    %2200 = vmatprep.subr.bf16.mxu0 0
    %2201 = vmatpush2.bf16.msra.mxu0 %v1569
    %2202 = vmatprep.subr.bf16.mxu0 0
    %2203 = vmatpush2.bf16.msra.mxu0 %v1568
    %2204 = vmatprep.subr.bf16.mxu0 0
    %2205 = vmatpush2.bf16.msra.mxu0 %v1567
    %2206 = vmatprep.subr.bf16.mxu0 0
    %2207 = vmatpush2.bf16.msra.mxu0 %v1566
    %2208 = vmatprep.subr.bf16.mxu0 0
    %2209 = vmatpush2.bf16.msra.mxu0 %v1565
    %2210 = vmatprep.subr.bf16.mxu0 0
    %2211 = vmatpush2.bf16.msra.mxu0 %v1564
    %2212 = vmatprep.mubr.bf16.mxu0 %v234
    %2213 = vmatmul.mubr.bf16.gmra.mxu0 %v233
    %v2214 = vpop.f32.mrf.mxu0
    %v2215 = vadd.f32 %v2175, %v2214
    %v2216 = vpop.f32.mrf.mxu0
    %v2217 = vpop.f32.mrf.mxu0
    %v2218 = vpop.f32.mrf.mxu0
    %2219 = vdwg.mxu0
    %2220 = vmatprep.subr.bf16.mxu0 0
    %2221 = vmatpush1.bf16.msra.mxu0 %v1579
    %2222 = vmatprep.subr.bf16.mxu0 0
    %2223 = vmatpush1.bf16.msra.mxu0 %v1578
    %2224 = vmatprep.subr.bf16.mxu0 0
    %2225 = vmatpush1.bf16.msra.mxu0 %v1577
    %2226 = vmatprep.subr.bf16.mxu0 0
    %2227 = vmatpush1.bf16.msra.mxu0 %v1576
    %2228 = vmatprep.subr.bf16.mxu0 0
    %2229 = vmatpush1.bf16.msra.mxu0 %v1575
    %2230 = vmatprep.subr.bf16.mxu0 0
    %2231 = vmatpush1.bf16.msra.mxu0 %v1574
    %2232 = vmatprep.subr.bf16.mxu0 0
    %2233 = vmatpush1.bf16.msra.mxu0 %v1573
    %2234 = vmatprep.subr.bf16.mxu0 0
    %2235 = vmatpush1.bf16.msra.mxu0 %v1572
    %2236 = vmatprep.subr.bf16.mxu0 0
    %2237 = vmatpush2.bf16.msra.mxu0 %v1587
    %2238 = vmatprep.subr.bf16.mxu0 0
    %2239 = vmatpush2.bf16.msra.mxu0 %v1586
    %2240 = vmatprep.subr.bf16.mxu0 0
    %2241 = vmatpush2.bf16.msra.mxu0 %v1585
    %2242 = vmatprep.subr.bf16.mxu0 0
    %2243 = vmatpush2.bf16.msra.mxu0 %v1584
    %2244 = vmatprep.subr.bf16.mxu0 0
    %2245 = vmatpush2.bf16.msra.mxu0 %v1583
    %2246 = vmatprep.subr.bf16.mxu0 0
    %2247 = vmatpush2.bf16.msra.mxu0 %v1582
    %2248 = vmatprep.subr.bf16.mxu0 0
    %2249 = vmatpush2.bf16.msra.mxu0 %v1581
    %2250 = vmatprep.subr.bf16.mxu0 0
    %2251 = vmatpush2.bf16.msra.mxu0 %v1580
    %2252 = vmatprep.mubr.bf16.mxu0 %v236
    %2253 = vmatmul.mubr.bf16.gmra.mxu0 %v235
    %v2254 = vpop.f32.mrf.mxu0
    %v2255 = vadd.f32 %v2215, %v2254
    %v2256 = vpop.f32.mrf.mxu0
    %v2257 = vpop.f32.mrf.mxu0
    %v2258 = vpop.f32.mrf.mxu0
    %2259 = vdwg.mxu0
    %v2260 = vmax.f32 %v2255, 0.0
    %v2261 = vpack.c.bf16 %v2260, %v2260
    %v2262 = vld [vmem:[#allocation6] sm:$0xff]
    %v2263 = vld [vmem:[#allocation6 + $0x8] sm:$0xff]
    %v2264 = vld [vmem:[#allocation6 + $0x10] sm:$0xff]
    %v2265 = vld [vmem:[#allocation6 + $0x18] sm:$0xff]
    %v2266 = vld [vmem:[#allocation6 + $0x20] sm:$0xff]
    %v2267 = vld [vmem:[#allocation6 + $0x28] sm:$0xff]
    %v2268 = vld [vmem:[#allocation6 + $0x30] sm:$0xff]
    %v2269 = vld [vmem:[#allocation6 + $0x38] sm:$0xff]
    %v2270 = vld [vmem:[#allocation6 + $0x40] sm:$0xff]
    %v2271 = vld [vmem:[#allocation6 + $0x48] sm:$0xff]
    %v2272 = vld [vmem:[#allocation6 + $0x50] sm:$0xff]
    %v2273 = vld [vmem:[#allocation6 + $0x58] sm:$0xff]
    %v2274 = vld [vmem:[#allocation6 + $0x60] sm:$0xff]
    %v2275 = vld [vmem:[#allocation6 + $0x68] sm:$0xff]
    %v2276 = vld [vmem:[#allocation6 + $0x70] sm:$0xff]
    %v2277 = vld [vmem:[#allocation6 + $0x78] sm:$0xff]
    %v2278 = vld [vmem:[%s4] sm:$0x3]
    %v2280 = vlaneseq
    %v2281 = vshrl.u32 %v2280, 7
    %v2282 = vsub.s32 0, %v2281
    %v2283 = vrot.slane %v2278, %v2282
    %v2284 = vlaneseq
    %v2285 = vshrl.u32 %v2284, 7
    %v2286 = vsub.s32 1, %v2285
    %v2287 = vrot.slane %v2278, %v2286
    %v2306 = vunpack.c.l.b16 %v2262
    %v2307 = vunpack.c.h.b16 %v2262
    %v2308 = vunpack.c.l.b16 %v2263
    %v2309 = vunpack.c.h.b16 %v2263
    %v2310 = vunpack.c.l.b16 %v2264
    %v2311 = vunpack.c.h.b16 %v2264
    %v2312 = vunpack.c.l.b16 %v2265
    %v2313 = vunpack.c.h.b16 %v2265
    %v2314 = vunpack.c.l.b16 %v2266
    %v2315 = vunpack.c.h.b16 %v2266
    %v2316 = vunpack.c.l.b16 %v2267
    %v2317 = vunpack.c.h.b16 %v2267
    %v2318 = vunpack.c.l.b16 %v2268
    %v2319 = vunpack.c.h.b16 %v2268
    %v2320 = vunpack.c.l.b16 %v2269
    %v2321 = vunpack.c.h.b16 %v2269
    %v2322 = vunpack.c.l.b16 %v2270
    %v2323 = vunpack.c.h.b16 %v2270
    %v2324 = vunpack.c.l.b16 %v2271
    %v2325 = vunpack.c.h.b16 %v2271
    %v2326 = vunpack.c.l.b16 %v2272
    %v2327 = vunpack.c.h.b16 %v2272
    %v2328 = vunpack.c.l.b16 %v2273
    %v2329 = vunpack.c.h.b16 %v2273
    %v2330 = vunpack.c.l.b16 %v2274
    %v2331 = vunpack.c.h.b16 %v2274
    %v2332 = vunpack.c.l.b16 %v2275
    %v2333 = vunpack.c.h.b16 %v2275
    %v2334 = vunpack.c.l.b16 %v2276
    %v2335 = vunpack.c.h.b16 %v2276
    %v2336 = vunpack.c.l.b16 %v2277
    %v2337 = vunpack.c.h.b16 %v2277
    %v2338 = vpack.c.b16 %v2308, %v2306
    %v2339 = vpack.c.b16 %v2309, %v2307
    %v2340 = vpack.c.b16 %v2312, %v2310
    %v2341 = vpack.c.b16 %v2313, %v2311
    %v2342 = vpack.c.b16 %v2316, %v2314
    %v2343 = vpack.c.b16 %v2317, %v2315
    %v2344 = vpack.c.b16 %v2320, %v2318
    %v2345 = vpack.c.b16 %v2321, %v2319
    %v2346 = vpack.c.b16 %v2324, %v2322
    %v2347 = vpack.c.b16 %v2325, %v2323
    %v2348 = vpack.c.b16 %v2328, %v2326
    %v2349 = vpack.c.b16 %v2329, %v2327
    %v2350 = vpack.c.b16 %v2332, %v2330
    %v2351 = vpack.c.b16 %v2333, %v2331
    %v2352 = vpack.c.b16 %v2336, %v2334
    %v2353 = vpack.c.b16 %v2337, %v2335
    %2370 = vmatprep.subr.bf16.mxu0 %v2353
    %2371 = vmatpush1.bf16.msra.mxu0 %v2352
    %2372 = vmatprep.subr.bf16.mxu0 %v2351
    %2373 = vmatpush1.bf16.msra.mxu0 %v2350
    %2374 = vmatprep.subr.bf16.mxu0 %v2349
    %2375 = vmatpush1.bf16.msra.mxu0 %v2348
    %2376 = vmatprep.subr.bf16.mxu0 %v2347
    %2377 = vmatpush1.bf16.msra.mxu0 %v2346
    %2378 = vmatprep.subr.bf16.mxu0 %v2345
    %2379 = vmatpush1.bf16.msra.mxu0 %v2344
    %2380 = vmatprep.subr.bf16.mxu0 %v2343
    %2381 = vmatpush1.bf16.msra.mxu0 %v2342
    %2382 = vmatprep.subr.bf16.mxu0 %v2341
    %2383 = vmatpush1.bf16.msra.mxu0 %v2340
    %2384 = vmatprep.subr.bf16.mxu0 %v2339
    %2385 = vmatpush1.bf16.msra.mxu0 %v2338
    %2386 = vmatprep.subr.bf16.mxu0 0
    %2387 = vmatpush2.bf16.msra.mxu0 0
    %2388 = vmatprep.subr.bf16.mxu0 0
    %2389 = vmatpush2.bf16.msra.mxu0 0
    %2390 = vmatprep.subr.bf16.mxu0 0
    %2391 = vmatpush2.bf16.msra.mxu0 0
    %2392 = vmatprep.subr.bf16.mxu0 0
    %2393 = vmatpush2.bf16.msra.mxu0 0
    %2394 = vmatprep.subr.bf16.mxu0 0
    %2395 = vmatpush2.bf16.msra.mxu0 0
    %2396 = vmatprep.subr.bf16.mxu0 0
    %2397 = vmatpush2.bf16.msra.mxu0 0
    %2398 = vmatprep.subr.bf16.mxu0 0
    %2399 = vmatpush2.bf16.msra.mxu0 0
    %2400 = vmatprep.subr.bf16.mxu0 0
    %2401 = vmatpush2.bf16.msra.mxu0 0
    %2402 = vmatprep.mubr.bf16.mxu0 0
    %2403 = vmatmul.mubr.bf16.gmra.mxu0 %v2261
    %v2404 = vpop.f32.mrf.mxu0
    %v2405 = vadd.f32 %v2283, %v2404
    %v2406 = vpop.f32.mrf.mxu0
    %v2407 = vadd.f32 %v2287, %v2406
    %v2408 = vpop.f32.mrf.mxu0
    %v2409 = vpop.f32.mrf.mxu0
    %2410 = vdwg.mxu0
    %v2411 = vmax.f32 %v2405, 0.0
    %v2412 = vmax.f32 %v2407, 0.0
    %v2413 = vpack.c.bf16 %v2411, %v2411
    %v2414 = vpack.c.bf16 %v2412, %v2412
    %v2415 = vld [vmem:[#allocation7] sm:$0xff]
    %v2416 = vld [vmem:[#allocation7 + $0x8] sm:$0xf]
    %v2417 = vld [vmem:[#allocation7 + $0xc] sm:$0xff]
    %v2418 = vld [vmem:[#allocation7 + $0x14] sm:$0xf]
    %v2419 = vld [vmem:[#allocation7 + $0x18] sm:$0xff]
    %v2420 = vld [vmem:[#allocation7 + $0x20] sm:$0xf]
    %v2421 = vld [vmem:[#allocation7 + $0x24] sm:$0xff]
    %v2422 = vld [vmem:[#allocation7 + $0x2c] sm:$0xf]
    %v2423 = vld [vmem:[#allocation7 + $0x30] sm:$0xff]
    %v2424 = vld [vmem:[#allocation7 + $0x38] sm:$0xf]
    %v2425 = vld [vmem:[#allocation7 + $0x3c] sm:$0xff]
    %v2426 = vld [vmem:[#allocation7 + $0x44] sm:$0xf]
    %v2427 = vld [vmem:[#allocation7 + $0x48] sm:$0xff]
    %v2428 = vld [vmem:[#allocation7 + $0x50] sm:$0xf]
    %v2429 = vld [vmem:[#allocation7 + $0x54] sm:$0xff]
    %v2430 = vld [vmem:[#allocation7 + $0x5c] sm:$0xf]
    %v2431 = vld [vmem:[#allocation7 + $0x60] sm:$0xff]
    %v2432 = vld [vmem:[#allocation7 + $0x68] sm:$0xf]
    %v2433 = vld [vmem:[#allocation7 + $0x6c] sm:$0xff]
    %v2434 = vld [vmem:[#allocation7 + $0x74] sm:$0xf]
    %v2435 = vld [vmem:[#allocation7 + $0x78] sm:$0xff]
    %v2436 = vld [vmem:[#allocation7 + $0x80] sm:$0xf]
    %v2437 = vld [vmem:[#allocation7 + $0x84] sm:$0xff]
    %v2438 = vld [vmem:[#allocation7 + $0x8c] sm:$0xf]
    %v2439 = vld [vmem:[#allocation7 + $0x90] sm:$0xff]
    %v2440 = vld [vmem:[#allocation7 + $0x98] sm:$0xf]
    %v2441 = vld [vmem:[#allocation7 + $0x9c] sm:$0xff]
    %v2442 = vld [vmem:[#allocation7 + $0xa4] sm:$0xf]
    %v2443 = vld [vmem:[#allocation7 + $0xa8] sm:$0xff]
    %v2444 = vld [vmem:[#allocation7 + $0xb0] sm:$0xf]
    %v2445 = vld [vmem:[#allocation7 + $0xb4] sm:$0xff]
    %v2446 = vld [vmem:[#allocation7 + $0xbc] sm:$0xf]
    %v2447 = vld [vmem:[#allocation7 + $0xc0] sm:$0xff]
    %v2448 = vld [vmem:[#allocation7 + $0xc8] sm:$0xf]
    %v2449 = vld [vmem:[#allocation7 + $0xcc] sm:$0xff]
    %v2450 = vld [vmem:[#allocation7 + $0xd4] sm:$0xf]
    %v2451 = vld [vmem:[#allocation7 + $0xd8] sm:$0xff]
    %v2452 = vld [vmem:[#allocation7 + $0xe0] sm:$0xf]
    %v2453 = vld [vmem:[#allocation7 + $0xe4] sm:$0xff]
    %v2454 = vld [vmem:[#allocation7 + $0xec] sm:$0xf]
    %v2455 = vld [vmem:[#allocation7 + $0xf0] sm:$0xff]
    %v2456 = vld [vmem:[#allocation7 + $0xf8] sm:$0xf]
    %v2457 = vld [vmem:[#allocation7 + $0xfc] sm:$0xff]
    %v2458 = vld [vmem:[#allocation7 + $0x104] sm:$0xf]
    %v2459 = vld [vmem:[#allocation7 + $0x108] sm:$0xff]
    %v2460 = vld [vmem:[#allocation7 + $0x110] sm:$0xf]
    %v2461 = vld [vmem:[#allocation7 + $0x114] sm:$0xff]
    %v2462 = vld [vmem:[#allocation7 + $0x11c] sm:$0xf]
    %v2463 = vld [vmem:[#allocation7 + $0x120] sm:$0xff]
    %v2464 = vld [vmem:[#allocation7 + $0x128] sm:$0xf]
    %v2465 = vld [vmem:[#allocation7 + $0x12c] sm:$0xff]
    %v2466 = vld [vmem:[#allocation7 + $0x134] sm:$0xf]
    %v2467 = vld [vmem:[#allocation7 + $0x138] sm:$0xff]
    %v2468 = vld [vmem:[#allocation7 + $0x140] sm:$0xf]
    %v2469 = vld [vmem:[#allocation7 + $0x144] sm:$0xff]
    %v2470 = vld [vmem:[#allocation7 + $0x14c] sm:$0xf]
    %v2471 = vld [vmem:[#allocation7 + $0x150] sm:$0xff]
    %v2472 = vld [vmem:[#allocation7 + $0x158] sm:$0xf]
    %v2473 = vld [vmem:[#allocation7 + $0x15c] sm:$0xff]
    %v2474 = vld [vmem:[#allocation7 + $0x164] sm:$0xf]
    %v2475 = vld [vmem:[#allocation7 + $0x168] sm:$0xff]
    %v2476 = vld [vmem:[#allocation7 + $0x170] sm:$0xf]
    %v2477 = vld [vmem:[#allocation7 + $0x174] sm:$0xff]
    %v2478 = vld [vmem:[#allocation7 + $0x17c] sm:$0xf]
    %v2479 = vld [vmem:[%s6] sm:$0x7]
    %v2481 = vlaneseq
    %v2482 = vshrl.u32 %v2481, 7
    %v2483 = vsub.s32 0, %v2482
    %v2484 = vrot.slane %v2479, %v2483
    %v2485 = vlaneseq
    %v2486 = vshrl.u32 %v2485, 7
    %v2487 = vsub.s32 1, %v2486
    %v2488 = vrot.slane %v2479, %v2487
    %v2489 = vlaneseq
    %v2490 = vshrl.u32 %v2489, 7
    %v2491 = vsub.s32 2, %v2490
    %v2492 = vrot.slane %v2479, %v2491
    %v2560 = vunpack.c.l.b16 %v2415
    %v2561 = vunpack.c.h.b16 %v2415
    %v2562 = vunpack.c.l.b16 %v2416
    %v2563 = vunpack.c.l.b16 %v2417
    %v2564 = vunpack.c.h.b16 %v2417
    %v2565 = vunpack.c.l.b16 %v2418
    %v2566 = vunpack.c.l.b16 %v2419
    %v2567 = vunpack.c.h.b16 %v2419
    %v2568 = vunpack.c.l.b16 %v2420
    %v2569 = vunpack.c.l.b16 %v2421
    %v2570 = vunpack.c.h.b16 %v2421
    %v2571 = vunpack.c.l.b16 %v2422
    %v2572 = vunpack.c.l.b16 %v2423
    %v2573 = vunpack.c.h.b16 %v2423
    %v2574 = vunpack.c.l.b16 %v2424
    %v2575 = vunpack.c.l.b16 %v2425
    %v2576 = vunpack.c.h.b16 %v2425
    %v2577 = vunpack.c.l.b16 %v2426
    %v2578 = vunpack.c.l.b16 %v2427
    %v2579 = vunpack.c.h.b16 %v2427
    %v2580 = vunpack.c.l.b16 %v2428
    %v2581 = vunpack.c.l.b16 %v2429
    %v2582 = vunpack.c.h.b16 %v2429
    %v2583 = vunpack.c.l.b16 %v2430
    %v2584 = vunpack.c.l.b16 %v2431
    %v2585 = vunpack.c.h.b16 %v2431
    %v2586 = vunpack.c.l.b16 %v2432
    %v2587 = vunpack.c.l.b16 %v2433
    %v2588 = vunpack.c.h.b16 %v2433
    %v2589 = vunpack.c.l.b16 %v2434
    %v2590 = vunpack.c.l.b16 %v2435
    %v2591 = vunpack.c.h.b16 %v2435
    %v2592 = vunpack.c.l.b16 %v2436
    %v2593 = vunpack.c.l.b16 %v2437
    %v2594 = vunpack.c.h.b16 %v2437
    %v2595 = vunpack.c.l.b16 %v2438
    %v2596 = vunpack.c.l.b16 %v2439
    %v2597 = vunpack.c.h.b16 %v2439
    %v2598 = vunpack.c.l.b16 %v2440
    %v2599 = vunpack.c.l.b16 %v2441
    %v2600 = vunpack.c.h.b16 %v2441
    %v2601 = vunpack.c.l.b16 %v2442
    %v2602 = vunpack.c.l.b16 %v2443
    %v2603 = vunpack.c.h.b16 %v2443
    %v2604 = vunpack.c.l.b16 %v2444
    %v2605 = vunpack.c.l.b16 %v2445
    %v2606 = vunpack.c.h.b16 %v2445
    %v2607 = vunpack.c.l.b16 %v2446
    %v2608 = vunpack.c.l.b16 %v2447
    %v2609 = vunpack.c.h.b16 %v2447
    %v2610 = vunpack.c.l.b16 %v2448
    %v2611 = vunpack.c.l.b16 %v2449
    %v2612 = vunpack.c.h.b16 %v2449
    %v2613 = vunpack.c.l.b16 %v2450
    %v2614 = vunpack.c.l.b16 %v2451
    %v2615 = vunpack.c.h.b16 %v2451
    %v2616 = vunpack.c.l.b16 %v2452
    %v2617 = vunpack.c.l.b16 %v2453
    %v2618 = vunpack.c.h.b16 %v2453
    %v2619 = vunpack.c.l.b16 %v2454
    %v2620 = vunpack.c.l.b16 %v2455
    %v2621 = vunpack.c.h.b16 %v2455
    %v2622 = vunpack.c.l.b16 %v2456
    %v2623 = vunpack.c.l.b16 %v2457
    %v2624 = vunpack.c.h.b16 %v2457
    %v2625 = vunpack.c.l.b16 %v2458
    %v2626 = vunpack.c.l.b16 %v2459
    %v2627 = vunpack.c.h.b16 %v2459
    %v2628 = vunpack.c.l.b16 %v2460
    %v2629 = vunpack.c.l.b16 %v2461
    %v2630 = vunpack.c.h.b16 %v2461
    %v2631 = vunpack.c.l.b16 %v2462
    %v2632 = vunpack.c.l.b16 %v2463
    %v2633 = vunpack.c.h.b16 %v2463
    %v2634 = vunpack.c.l.b16 %v2464
    %v2635 = vunpack.c.l.b16 %v2465
    %v2636 = vunpack.c.h.b16 %v2465
    %v2637 = vunpack.c.l.b16 %v2466
    %v2638 = vunpack.c.l.b16 %v2467
    %v2639 = vunpack.c.h.b16 %v2467
    %v2640 = vunpack.c.l.b16 %v2468
    %v2641 = vunpack.c.l.b16 %v2469
    %v2642 = vunpack.c.h.b16 %v2469
    %v2643 = vunpack.c.l.b16 %v2470
    %v2644 = vunpack.c.l.b16 %v2471
    %v2645 = vunpack.c.h.b16 %v2471
    %v2646 = vunpack.c.l.b16 %v2472
    %v2647 = vunpack.c.l.b16 %v2473
    %v2648 = vunpack.c.h.b16 %v2473
    %v2649 = vunpack.c.l.b16 %v2474
    %v2650 = vunpack.c.l.b16 %v2475
    %v2651 = vunpack.c.h.b16 %v2475
    %v2652 = vunpack.c.l.b16 %v2476
    %v2653 = vunpack.c.l.b16 %v2477
    %v2654 = vunpack.c.h.b16 %v2477
    %v2655 = vunpack.c.l.b16 %v2478
    %v2656 = vpack.c.b16 %v2563, %v2560
    %v2657 = vpack.c.b16 %v2564, %v2561
    %v2658 = vpack.c.b16 %v2565, %v2562
    %v2659 = vpack.c.b16 %v2569, %v2566
    %v2660 = vpack.c.b16 %v2570, %v2567
    %v2661 = vpack.c.b16 %v2571, %v2568
    %v2662 = vpack.c.b16 %v2575, %v2572
    %v2663 = vpack.c.b16 %v2576, %v2573
    %v2664 = vpack.c.b16 %v2577, %v2574
    %v2665 = vpack.c.b16 %v2581, %v2578
    %v2666 = vpack.c.b16 %v2582, %v2579
    %v2667 = vpack.c.b16 %v2583, %v2580
    %v2668 = vpack.c.b16 %v2587, %v2584
    %v2669 = vpack.c.b16 %v2588, %v2585
    %v2670 = vpack.c.b16 %v2589, %v2586
    %v2671 = vpack.c.b16 %v2593, %v2590
    %v2672 = vpack.c.b16 %v2594, %v2591
    %v2673 = vpack.c.b16 %v2595, %v2592
    %v2674 = vpack.c.b16 %v2599, %v2596
    %v2675 = vpack.c.b16 %v2600, %v2597
    %v2676 = vpack.c.b16 %v2601, %v2598
    %v2677 = vpack.c.b16 %v2605, %v2602
    %v2678 = vpack.c.b16 %v2606, %v2603
    %v2679 = vpack.c.b16 %v2607, %v2604
    %v2680 = vpack.c.b16 %v2611, %v2608
    %v2681 = vpack.c.b16 %v2612, %v2609
    %v2682 = vpack.c.b16 %v2613, %v2610
    %v2683 = vpack.c.b16 %v2617, %v2614
    %v2684 = vpack.c.b16 %v2618, %v2615
    %v2685 = vpack.c.b16 %v2619, %v2616
    %v2686 = vpack.c.b16 %v2623, %v2620
    %v2687 = vpack.c.b16 %v2624, %v2621
    %v2688 = vpack.c.b16 %v2625, %v2622
    %v2689 = vpack.c.b16 %v2629, %v2626
    %v2690 = vpack.c.b16 %v2630, %v2627
    %v2691 = vpack.c.b16 %v2631, %v2628
    %v2692 = vpack.c.b16 %v2635, %v2632
    %v2693 = vpack.c.b16 %v2636, %v2633
    %v2694 = vpack.c.b16 %v2637, %v2634
    %v2695 = vpack.c.b16 %v2641, %v2638
    %v2696 = vpack.c.b16 %v2642, %v2639
    %v2697 = vpack.c.b16 %v2643, %v2640
    %v2698 = vpack.c.b16 %v2647, %v2644
    %v2699 = vpack.c.b16 %v2648, %v2645
    %v2700 = vpack.c.b16 %v2649, %v2646
    %v2701 = vpack.c.b16 %v2653, %v2650
    %v2702 = vpack.c.b16 %v2654, %v2651
    %v2703 = vpack.c.b16 %v2655, %v2652
    %2752 = vmatprep.subr.bf16.mxu0 %v2678
    %2753 = vmatpush1.bf16.msra.mxu0 %v2677
    %2754 = vmatprep.subr.bf16.mxu0 %v2675
    %2755 = vmatpush1.bf16.msra.mxu0 %v2674
    %2756 = vmatprep.subr.bf16.mxu0 %v2672
    %2757 = vmatpush1.bf16.msra.mxu0 %v2671
    %2758 = vmatprep.subr.bf16.mxu0 %v2669
    %2759 = vmatpush1.bf16.msra.mxu0 %v2668
    %2760 = vmatprep.subr.bf16.mxu0 %v2666
    %2761 = vmatpush1.bf16.msra.mxu0 %v2665
    %2762 = vmatprep.subr.bf16.mxu0 %v2663
    %2763 = vmatpush1.bf16.msra.mxu0 %v2662
    %2764 = vmatprep.subr.bf16.mxu0 %v2660
    %2765 = vmatpush1.bf16.msra.mxu0 %v2659
    %2766 = vmatprep.subr.bf16.mxu0 %v2657
    %2767 = vmatpush1.bf16.msra.mxu0 %v2656
    %2768 = vmatprep.subr.bf16.mxu0 %v2702
    %2769 = vmatpush2.bf16.msra.mxu0 %v2701
    %2770 = vmatprep.subr.bf16.mxu0 %v2699
    %2771 = vmatpush2.bf16.msra.mxu0 %v2698
    %2772 = vmatprep.subr.bf16.mxu0 %v2696
    %2773 = vmatpush2.bf16.msra.mxu0 %v2695
    %2774 = vmatprep.subr.bf16.mxu0 %v2693
    %2775 = vmatpush2.bf16.msra.mxu0 %v2692
    %2776 = vmatprep.subr.bf16.mxu0 %v2690
    %2777 = vmatpush2.bf16.msra.mxu0 %v2689
    %2778 = vmatprep.subr.bf16.mxu0 %v2687
    %2779 = vmatpush2.bf16.msra.mxu0 %v2686
    %2780 = vmatprep.subr.bf16.mxu0 %v2684
    %2781 = vmatpush2.bf16.msra.mxu0 %v2683
    %2782 = vmatprep.subr.bf16.mxu0 %v2681
    %2783 = vmatpush2.bf16.msra.mxu0 %v2680
    %2784 = vmatprep.mubr.bf16.mxu0 %v2414
    %2785 = vmatmul.mubr.bf16.gmra.mxu0 %v2413
    %v2786 = vpop.f32.mrf.mxu0
    %v2787 = vadd.f32 %v2484, %v2786
    %v2788 = vpop.f32.mrf.mxu0
    %v2789 = vadd.f32 %v2488, %v2788
    %v2790 = vpop.f32.mrf.mxu0
    %v2791 = vpop.f32.mrf.mxu0
    %2792 = vdwg.mxu0
    %2793 = vmatprep.subr.bf16.mxu0 0
    %2794 = vmatpush1.bf16.msra.mxu0 %v2679
    %2795 = vmatprep.subr.bf16.mxu0 0
    %2796 = vmatpush1.bf16.msra.mxu0 %v2676
    %2797 = vmatprep.subr.bf16.mxu0 0
    %2798 = vmatpush1.bf16.msra.mxu0 %v2673
    %2799 = vmatprep.subr.bf16.mxu0 0
    %2800 = vmatpush1.bf16.msra.mxu0 %v2670
    %2801 = vmatprep.subr.bf16.mxu0 0
    %2802 = vmatpush1.bf16.msra.mxu0 %v2667
    %2803 = vmatprep.subr.bf16.mxu0 0
    %2804 = vmatpush1.bf16.msra.mxu0 %v2664
    %2805 = vmatprep.subr.bf16.mxu0 0
    %2806 = vmatpush1.bf16.msra.mxu0 %v2661
    %2807 = vmatprep.subr.bf16.mxu0 0
    %2808 = vmatpush1.bf16.msra.mxu0 %v2658
    %2809 = vmatprep.subr.bf16.mxu0 0
    %2810 = vmatpush2.bf16.msra.mxu0 %v2703
    %2811 = vmatprep.subr.bf16.mxu0 0
    %2812 = vmatpush2.bf16.msra.mxu0 %v2700
    %2813 = vmatprep.subr.bf16.mxu0 0
    %2814 = vmatpush2.bf16.msra.mxu0 %v2697
    %2815 = vmatprep.subr.bf16.mxu0 0
    %2816 = vmatpush2.bf16.msra.mxu0 %v2694
    %2817 = vmatprep.subr.bf16.mxu0 0
    %2818 = vmatpush2.bf16.msra.mxu0 %v2691
    %2819 = vmatprep.subr.bf16.mxu0 0
    %2820 = vmatpush2.bf16.msra.mxu0 %v2688
    %2821 = vmatprep.subr.bf16.mxu0 0
    %2822 = vmatpush2.bf16.msra.mxu0 %v2685
    %2823 = vmatprep.subr.bf16.mxu0 0
    %2824 = vmatpush2.bf16.msra.mxu0 %v2682
    %2825 = vmatprep.mubr.bf16.mxu0 %v2414
    %2826 = vmatmul.mubr.bf16.gmra.mxu0 %v2413
    %v2827 = vpop.f32.mrf.mxu0
    %v2828 = vadd.f32 %v2492, %v2827
    %v2829 = vpop.f32.mrf.mxu0
    %v2830 = vpop.f32.mrf.mxu0
    %v2831 = vpop.f32.mrf.mxu0
    %2832 = vdwg.mxu0
    %v2833 = vmax.f32 %v2787, 0.0
    %v2834 = vmax.f32 %v2789, 0.0
    %v2835 = vmax.f32 %v2828, 0.0
    %v2836 = vpack.c.bf16 %v2833, %v2833
    %v2837 = vpack.c.bf16 %v2834, %v2834
    %v2838 = vpack.c.bf16 %v2835, %v2835
    %v2839 = vld [vmem:[%s7] sm:$0xff]
    %v2840 = vld [vmem:[%s7 + $0x8] sm:$0xf]
    %v2841 = vld [vmem:[%s7 + $0xc] sm:$0xff]
    %v2842 = vld [vmem:[%s7 + $0x14] sm:$0xf]
    %v2843 = vld [vmem:[%s7 + $0x18] sm:$0xff]
    %v2844 = vld [vmem:[%s7 + $0x20] sm:$0xf]
    %v2845 = vld [vmem:[%s7 + $0x24] sm:$0xff]
    %v2846 = vld [vmem:[%s7 + $0x2c] sm:$0xf]
    %v2847 = vld [vmem:[%s7 + $0x30] sm:$0xff]
    %v2848 = vld [vmem:[%s7 + $0x38] sm:$0xf]
    %v2849 = vld [vmem:[%s7 + $0x3c] sm:$0xff]
    %v2850 = vld [vmem:[%s7 + $0x44] sm:$0xf]
    %v2851 = vld [vmem:[%s7 + $0x48] sm:$0xff]
    %v2852 = vld [vmem:[%s7 + $0x50] sm:$0xf]
    %v2853 = vld [vmem:[%s7 + $0x54] sm:$0xff]
    %v2854 = vld [vmem:[%s7 + $0x5c] sm:$0xf]
    %v2855 = vld [vmem:[%s7 + $0x60] sm:$0xff]
    %v2856 = vld [vmem:[%s7 + $0x68] sm:$0xf]
    %v2857 = vld [vmem:[%s7 + $0x6c] sm:$0xff]
    %v2858 = vld [vmem:[%s7 + $0x74] sm:$0xf]
    %v2859 = vld [vmem:[%s7 + $0x78] sm:$0xff]
    %v2860 = vld [vmem:[%s7 + $0x80] sm:$0xf]
    %v2861 = vld [vmem:[%s7 + $0x84] sm:$0xff]
    %v2862 = vld [vmem:[%s7 + $0x8c] sm:$0xf]
    %v2863 = vld [vmem:[%s7 + $0x90] sm:$0xff]
    %v2864 = vld [vmem:[%s7 + $0x98] sm:$0xf]
    %v2865 = vld [vmem:[%s7 + $0x9c] sm:$0xff]
    %v2866 = vld [vmem:[%s7 + $0xa4] sm:$0xf]
    %v2867 = vld [vmem:[%s7 + $0xa8] sm:$0xff]
    %v2868 = vld [vmem:[%s7 + $0xb0] sm:$0xf]
    %v2869 = vld [vmem:[%s7 + $0xb4] sm:$0xff]
    %v2870 = vld [vmem:[%s7 + $0xbc] sm:$0xf]
    %v2871 = vld [vmem:[%s7 + $0xc0] sm:$0xff]
    %v2872 = vld [vmem:[%s7 + $0xc8] sm:$0xf]
    %v2873 = vld [vmem:[%s7 + $0xcc] sm:$0xff]
    %v2874 = vld [vmem:[%s7 + $0xd4] sm:$0xf]
    %v2875 = vld [vmem:[%s7 + $0xd8] sm:$0xff]
    %v2876 = vld [vmem:[%s7 + $0xe0] sm:$0xf]
    %v2877 = vld [vmem:[%s7 + $0xe4] sm:$0xff]
    %v2878 = vld [vmem:[%s7 + $0xec] sm:$0xf]
    %v2879 = vld [vmem:[%s7 + $0xf0] sm:$0xff]
    %v2880 = vld [vmem:[%s7 + $0xf8] sm:$0xf]
    %v2881 = vld [vmem:[%s7 + $0xfc] sm:$0xff]
    %v2882 = vld [vmem:[%s7 + $0x104] sm:$0xf]
    %v2883 = vld [vmem:[%s7 + $0x108] sm:$0xff]
    %v2884 = vld [vmem:[%s7 + $0x110] sm:$0xf]
    %v2885 = vld [vmem:[%s7 + $0x114] sm:$0xff]
    %v2886 = vld [vmem:[%s7 + $0x11c] sm:$0xf]
    %v2887 = vld [vmem:[%s7 + $0x120] sm:$0xff]
    %v2888 = vld [vmem:[%s7 + $0x128] sm:$0xf]
    %v2889 = vld [vmem:[%s7 + $0x12c] sm:$0xff]
    %v2890 = vld [vmem:[%s7 + $0x134] sm:$0xf]
    %v2891 = vld [vmem:[%s7 + $0x138] sm:$0xff]
    %v2892 = vld [vmem:[%s7 + $0x140] sm:$0xf]
    %v2893 = vld [vmem:[%s7 + $0x144] sm:$0xff]
    %v2894 = vld [vmem:[%s7 + $0x14c] sm:$0xf]
    %v2895 = vld [vmem:[%s7 + $0x150] sm:$0xff]
    %v2896 = vld [vmem:[%s7 + $0x158] sm:$0xf]
    %v2897 = vld [vmem:[%s7 + $0x15c] sm:$0xff]
    %v2898 = vld [vmem:[%s7 + $0x164] sm:$0xf]
    %v2899 = vld [vmem:[%s7 + $0x168] sm:$0xff]
    %v2900 = vld [vmem:[%s7 + $0x170] sm:$0xf]
    %v2901 = vld [vmem:[%s7 + $0x174] sm:$0xff]
    %v2902 = vld [vmem:[%s7 + $0x17c] sm:$0xf]
    %v2903 = vld [vmem:[%s7 + $0x180] sm:$0xff]
    %v2904 = vld [vmem:[%s7 + $0x188] sm:$0xf]
    %v2905 = vld [vmem:[%s7 + $0x18c] sm:$0xff]
    %v2906 = vld [vmem:[%s7 + $0x194] sm:$0xf]
    %v2907 = vld [vmem:[%s7 + $0x198] sm:$0xff]
    %v2908 = vld [vmem:[%s7 + $0x1a0] sm:$0xf]
    %v2909 = vld [vmem:[%s7 + $0x1a4] sm:$0xff]
    %v2910 = vld [vmem:[%s7 + $0x1ac] sm:$0xf]
    %v2911 = vld [vmem:[%s7 + $0x1b0] sm:$0xff]
    %v2912 = vld [vmem:[%s7 + $0x1b8] sm:$0xf]
    %v2913 = vld [vmem:[%s7 + $0x1bc] sm:$0xff]
    %v2914 = vld [vmem:[%s7 + $0x1c4] sm:$0xf]
    %v2915 = vld [vmem:[%s7 + $0x1c8] sm:$0xff]
    %v2916 = vld [vmem:[%s7 + $0x1d0] sm:$0xf]
    %v2917 = vld [vmem:[%s7 + $0x1d4] sm:$0xff]
    %v2918 = vld [vmem:[%s7 + $0x1dc] sm:$0xf]
    %v2919 = vld [vmem:[%s7 + $0x1e0] sm:$0xff]
    %v2920 = vld [vmem:[%s7 + $0x1e8] sm:$0xf]
    %v2921 = vld [vmem:[%s7 + $0x1ec] sm:$0xff]
    %v2922 = vld [vmem:[%s7 + $0x1f4] sm:$0xf]
    %v2923 = vld [vmem:[%s7 + $0x1f8] sm:$0xff]
    %v2924 = vld [vmem:[%s7 + $0x200] sm:$0xf]
    %v2925 = vld [vmem:[%s7 + $0x204] sm:$0xff]
    %v2926 = vld [vmem:[%s7 + $0x20c] sm:$0xf]
    %v2927 = vld [vmem:[%s7 + $0x210] sm:$0xff]
    %v2928 = vld [vmem:[%s7 + $0x218] sm:$0xf]
    %v2929 = vld [vmem:[%s7 + $0x21c] sm:$0xff]
    %v2930 = vld [vmem:[%s7 + $0x224] sm:$0xf]
    %v2931 = vld [vmem:[%s7 + $0x228] sm:$0xff]
    %v2932 = vld [vmem:[%s7 + $0x230] sm:$0xf]
    %v2933 = vld [vmem:[%s7 + $0x234] sm:$0xff]
    %v2934 = vld [vmem:[%s7 + $0x23c] sm:$0xf]
    %v2935 = vld [vmem:[%s8] sm:$0x7]
    %v2937 = vlaneseq
    %v2938 = vshrl.u32 %v2937, 7
    %v2939 = vsub.s32 0, %v2938
    %v2940 = vrot.slane %v2935, %v2939
    %v2941 = vlaneseq
    %v2942 = vshrl.u32 %v2941, 7
    %v2943 = vsub.s32 1, %v2942
    %v2944 = vrot.slane %v2935, %v2943
    %v2945 = vlaneseq
    %v2946 = vshrl.u32 %v2945, 7
    %v2947 = vsub.s32 2, %v2946
    %v2948 = vrot.slane %v2935, %v2947
    %v3048 = vunpack.c.l.b16 %v2839
    %v3049 = vunpack.c.h.b16 %v2839
    %v3050 = vunpack.c.l.b16 %v2840
    %v3051 = vunpack.c.l.b16 %v2841
    %v3052 = vunpack.c.h.b16 %v2841
    %v3053 = vunpack.c.l.b16 %v2842
    %v3054 = vunpack.c.l.b16 %v2843
    %v3055 = vunpack.c.h.b16 %v2843
    %v3056 = vunpack.c.l.b16 %v2844
    %v3057 = vunpack.c.l.b16 %v2845
    %v3058 = vunpack.c.h.b16 %v2845
    %v3059 = vunpack.c.l.b16 %v2846
    %v3060 = vunpack.c.l.b16 %v2847
    %v3061 = vunpack.c.h.b16 %v2847
    %v3062 = vunpack.c.l.b16 %v2848
    %v3063 = vunpack.c.l.b16 %v2849
    %v3064 = vunpack.c.h.b16 %v2849
    %v3065 = vunpack.c.l.b16 %v2850
    %v3066 = vunpack.c.l.b16 %v2851
    %v3067 = vunpack.c.h.b16 %v2851
    %v3068 = vunpack.c.l.b16 %v2852
    %v3069 = vunpack.c.l.b16 %v2853
    %v3070 = vunpack.c.h.b16 %v2853
    %v3071 = vunpack.c.l.b16 %v2854
    %v3072 = vunpack.c.l.b16 %v2855
    %v3073 = vunpack.c.h.b16 %v2855
    %v3074 = vunpack.c.l.b16 %v2856
    %v3075 = vunpack.c.l.b16 %v2857
    %v3076 = vunpack.c.h.b16 %v2857
    %v3077 = vunpack.c.l.b16 %v2858
    %v3078 = vunpack.c.l.b16 %v2859
    %v3079 = vunpack.c.h.b16 %v2859
    %v3080 = vunpack.c.l.b16 %v2860
    %v3081 = vunpack.c.l.b16 %v2861
    %v3082 = vunpack.c.h.b16 %v2861
    %v3083 = vunpack.c.l.b16 %v2862
    %v3084 = vunpack.c.l.b16 %v2863
    %v3085 = vunpack.c.h.b16 %v2863
    %v3086 = vunpack.c.l.b16 %v2864
    %v3087 = vunpack.c.l.b16 %v2865
    %v3088 = vunpack.c.h.b16 %v2865
    %v3089 = vunpack.c.l.b16 %v2866
    %v3090 = vunpack.c.l.b16 %v2867
    %v3091 = vunpack.c.h.b16 %v2867
    %v3092 = vunpack.c.l.b16 %v2868
    %v3093 = vunpack.c.l.b16 %v2869
    %v3094 = vunpack.c.h.b16 %v2869
    %v3095 = vunpack.c.l.b16 %v2870
    %v3096 = vunpack.c.l.b16 %v2871
    %v3097 = vunpack.c.h.b16 %v2871
    %v3098 = vunpack.c.l.b16 %v2872
    %v3099 = vunpack.c.l.b16 %v2873
    %v3100 = vunpack.c.h.b16 %v2873
    %v3101 = vunpack.c.l.b16 %v2874
    %v3102 = vunpack.c.l.b16 %v2875
    %v3103 = vunpack.c.h.b16 %v2875
    %v3104 = vunpack.c.l.b16 %v2876
    %v3105 = vunpack.c.l.b16 %v2877
    %v3106 = vunpack.c.h.b16 %v2877
    %v3107 = vunpack.c.l.b16 %v2878
    %v3108 = vunpack.c.l.b16 %v2879
    %v3109 = vunpack.c.h.b16 %v2879
    %v3110 = vunpack.c.l.b16 %v2880
    %v3111 = vunpack.c.l.b16 %v2881
    %v3112 = vunpack.c.h.b16 %v2881
    %v3113 = vunpack.c.l.b16 %v2882
    %v3114 = vunpack.c.l.b16 %v2883
    %v3115 = vunpack.c.h.b16 %v2883
    %v3116 = vunpack.c.l.b16 %v2884
    %v3117 = vunpack.c.l.b16 %v2885
    %v3118 = vunpack.c.h.b16 %v2885
    %v3119 = vunpack.c.l.b16 %v2886
    %v3120 = vunpack.c.l.b16 %v2887
    %v3121 = vunpack.c.h.b16 %v2887
    %v3122 = vunpack.c.l.b16 %v2888
    %v3123 = vunpack.c.l.b16 %v2889
    %v3124 = vunpack.c.h.b16 %v2889
    %v3125 = vunpack.c.l.b16 %v2890
    %v3126 = vunpack.c.l.b16 %v2891
    %v3127 = vunpack.c.h.b16 %v2891
    %v3128 = vunpack.c.l.b16 %v2892
    %v3129 = vunpack.c.l.b16 %v2893
    %v3130 = vunpack.c.h.b16 %v2893
    %v3131 = vunpack.c.l.b16 %v2894
    %v3132 = vunpack.c.l.b16 %v2895
    %v3133 = vunpack.c.h.b16 %v2895
    %v3134 = vunpack.c.l.b16 %v2896
    %v3135 = vunpack.c.l.b16 %v2897
    %v3136 = vunpack.c.h.b16 %v2897
    %v3137 = vunpack.c.l.b16 %v2898
    %v3138 = vunpack.c.l.b16 %v2899
    %v3139 = vunpack.c.h.b16 %v2899
    %v3140 = vunpack.c.l.b16 %v2900
    %v3141 = vunpack.c.l.b16 %v2901
    %v3142 = vunpack.c.h.b16 %v2901
    %v3143 = vunpack.c.l.b16 %v2902
    %v3144 = vunpack.c.l.b16 %v2903
    %v3145 = vunpack.c.h.b16 %v2903
    %v3146 = vunpack.c.l.b16 %v2904
    %v3147 = vunpack.c.l.b16 %v2905
    %v3148 = vunpack.c.h.b16 %v2905
    %v3149 = vunpack.c.l.b16 %v2906
    %v3150 = vunpack.c.l.b16 %v2907
    %v3151 = vunpack.c.h.b16 %v2907
    %v3152 = vunpack.c.l.b16 %v2908
    %v3153 = vunpack.c.l.b16 %v2909
    %v3154 = vunpack.c.h.b16 %v2909
    %v3155 = vunpack.c.l.b16 %v2910
    %v3156 = vunpack.c.l.b16 %v2911
    %v3157 = vunpack.c.h.b16 %v2911
    %v3158 = vunpack.c.l.b16 %v2912
    %v3159 = vunpack.c.l.b16 %v2913
    %v3160 = vunpack.c.h.b16 %v2913
    %v3161 = vunpack.c.l.b16 %v2914
    %v3162 = vunpack.c.l.b16 %v2915
    %v3163 = vunpack.c.h.b16 %v2915
    %v3164 = vunpack.c.l.b16 %v2916
    %v3165 = vunpack.c.l.b16 %v2917
    %v3166 = vunpack.c.h.b16 %v2917
    %v3167 = vunpack.c.l.b16 %v2918
    %v3168 = vunpack.c.l.b16 %v2919
    %v3169 = vunpack.c.h.b16 %v2919
    %v3170 = vunpack.c.l.b16 %v2920
    %v3171 = vunpack.c.l.b16 %v2921
    %v3172 = vunpack.c.h.b16 %v2921
    %v3173 = vunpack.c.l.b16 %v2922
    %v3174 = vunpack.c.l.b16 %v2923
    %v3175 = vunpack.c.h.b16 %v2923
    %v3176 = vunpack.c.l.b16 %v2924
    %v3177 = vunpack.c.l.b16 %v2925
    %v3178 = vunpack.c.h.b16 %v2925
    %v3179 = vunpack.c.l.b16 %v2926
    %v3180 = vunpack.c.l.b16 %v2927
    %v3181 = vunpack.c.h.b16 %v2927
    %v3182 = vunpack.c.l.b16 %v2928
    %v3183 = vunpack.c.l.b16 %v2929
    %v3184 = vunpack.c.h.b16 %v2929
    %v3185 = vunpack.c.l.b16 %v2930
    %v3186 = vunpack.c.l.b16 %v2931
    %v3187 = vunpack.c.h.b16 %v2931
    %v3188 = vunpack.c.l.b16 %v2932
    %v3189 = vunpack.c.l.b16 %v2933
    %v3190 = vunpack.c.h.b16 %v2933
    %v3191 = vunpack.c.l.b16 %v2934
    %v3192 = vpack.c.b16 %v3051, %v3048
    %v3193 = vpack.c.b16 %v3052, %v3049
    %v3194 = vpack.c.b16 %v3053, %v3050
    %v3195 = vpack.c.b16 %v3057, %v3054
    %v3196 = vpack.c.b16 %v3058, %v3055
    %v3197 = vpack.c.b16 %v3059, %v3056
    %v3198 = vpack.c.b16 %v3063, %v3060
    %v3199 = vpack.c.b16 %v3064, %v3061
    %v3200 = vpack.c.b16 %v3065, %v3062
    %v3201 = vpack.c.b16 %v3069, %v3066
    %v3202 = vpack.c.b16 %v3070, %v3067
    %v3203 = vpack.c.b16 %v3071, %v3068
    %v3204 = vpack.c.b16 %v3075, %v3072
    %v3205 = vpack.c.b16 %v3076, %v3073
    %v3206 = vpack.c.b16 %v3077, %v3074
    %v3207 = vpack.c.b16 %v3081, %v3078
    %v3208 = vpack.c.b16 %v3082, %v3079
    %v3209 = vpack.c.b16 %v3083, %v3080
    %v3210 = vpack.c.b16 %v3087, %v3084
    %v3211 = vpack.c.b16 %v3088, %v3085
    %v3212 = vpack.c.b16 %v3089, %v3086
    %v3213 = vpack.c.b16 %v3093, %v3090
    %v3214 = vpack.c.b16 %v3094, %v3091
    %v3215 = vpack.c.b16 %v3095, %v3092
    %v3216 = vpack.c.b16 %v3099, %v3096
    %v3217 = vpack.c.b16 %v3100, %v3097
    %v3218 = vpack.c.b16 %v3101, %v3098
    %v3219 = vpack.c.b16 %v3105, %v3102
    %v3220 = vpack.c.b16 %v3106, %v3103
    %v3221 = vpack.c.b16 %v3107, %v3104
    %v3222 = vpack.c.b16 %v3111, %v3108
    %v3223 = vpack.c.b16 %v3112, %v3109
    %v3224 = vpack.c.b16 %v3113, %v3110
    %v3225 = vpack.c.b16 %v3117, %v3114
    %v3226 = vpack.c.b16 %v3118, %v3115
    %v3227 = vpack.c.b16 %v3119, %v3116
    %v3228 = vpack.c.b16 %v3123, %v3120
    %v3229 = vpack.c.b16 %v3124, %v3121
    %v3230 = vpack.c.b16 %v3125, %v3122
    %v3231 = vpack.c.b16 %v3129, %v3126
    %v3232 = vpack.c.b16 %v3130, %v3127
    %v3233 = vpack.c.b16 %v3131, %v3128
    %v3234 = vpack.c.b16 %v3135, %v3132
    %v3235 = vpack.c.b16 %v3136, %v3133
    %v3236 = vpack.c.b16 %v3137, %v3134
    %v3237 = vpack.c.b16 %v3141, %v3138
    %v3238 = vpack.c.b16 %v3142, %v3139
    %v3239 = vpack.c.b16 %v3143, %v3140
    %v3240 = vpack.c.b16 %v3147, %v3144
    %v3241 = vpack.c.b16 %v3148, %v3145
    %v3242 = vpack.c.b16 %v3149, %v3146
    %v3243 = vpack.c.b16 %v3153, %v3150
    %v3244 = vpack.c.b16 %v3154, %v3151
    %v3245 = vpack.c.b16 %v3155, %v3152
    %v3246 = vpack.c.b16 %v3159, %v3156
    %v3247 = vpack.c.b16 %v3160, %v3157
    %v3248 = vpack.c.b16 %v3161, %v3158
    %v3249 = vpack.c.b16 %v3165, %v3162
    %v3250 = vpack.c.b16 %v3166, %v3163
    %v3251 = vpack.c.b16 %v3167, %v3164
    %v3252 = vpack.c.b16 %v3171, %v3168
    %v3253 = vpack.c.b16 %v3172, %v3169
    %v3254 = vpack.c.b16 %v3173, %v3170
    %v3255 = vpack.c.b16 %v3177, %v3174
    %v3256 = vpack.c.b16 %v3178, %v3175
    %v3257 = vpack.c.b16 %v3179, %v3176
    %v3258 = vpack.c.b16 %v3183, %v3180
    %v3259 = vpack.c.b16 %v3184, %v3181
    %v3260 = vpack.c.b16 %v3185, %v3182
    %v3261 = vpack.c.b16 %v3189, %v3186
    %v3262 = vpack.c.b16 %v3190, %v3187
    %v3263 = vpack.c.b16 %v3191, %v3188
    %3336 = vmatprep.subr.bf16.mxu0 %v3214
    %3337 = vmatpush1.bf16.msra.mxu0 %v3213
    %3338 = vmatprep.subr.bf16.mxu0 %v3211
    %3339 = vmatpush1.bf16.msra.mxu0 %v3210
    %3340 = vmatprep.subr.bf16.mxu0 %v3208
    %3341 = vmatpush1.bf16.msra.mxu0 %v3207
    %3342 = vmatprep.subr.bf16.mxu0 %v3205
    %3343 = vmatpush1.bf16.msra.mxu0 %v3204
    %3344 = vmatprep.subr.bf16.mxu0 %v3202
    %3345 = vmatpush1.bf16.msra.mxu0 %v3201
    %3346 = vmatprep.subr.bf16.mxu0 %v3199
    %3347 = vmatpush1.bf16.msra.mxu0 %v3198
    %3348 = vmatprep.subr.bf16.mxu0 %v3196
    %3349 = vmatpush1.bf16.msra.mxu0 %v3195
    %3350 = vmatprep.subr.bf16.mxu0 %v3193
    %3351 = vmatpush1.bf16.msra.mxu0 %v3192
    %3352 = vmatprep.subr.bf16.mxu0 %v3238
    %3353 = vmatpush2.bf16.msra.mxu0 %v3237
    %3354 = vmatprep.subr.bf16.mxu0 %v3235
    %3355 = vmatpush2.bf16.msra.mxu0 %v3234
    %3356 = vmatprep.subr.bf16.mxu0 %v3232
    %3357 = vmatpush2.bf16.msra.mxu0 %v3231
    %3358 = vmatprep.subr.bf16.mxu0 %v3229
    %3359 = vmatpush2.bf16.msra.mxu0 %v3228
    %3360 = vmatprep.subr.bf16.mxu0 %v3226
    %3361 = vmatpush2.bf16.msra.mxu0 %v3225
    %3362 = vmatprep.subr.bf16.mxu0 %v3223
    %3363 = vmatpush2.bf16.msra.mxu0 %v3222
    %3364 = vmatprep.subr.bf16.mxu0 %v3220
    %3365 = vmatpush2.bf16.msra.mxu0 %v3219
    %3366 = vmatprep.subr.bf16.mxu0 %v3217
    %3367 = vmatpush2.bf16.msra.mxu0 %v3216
    %3368 = vmatprep.mubr.bf16.mxu0 %v2837
    %3369 = vmatmul.mubr.bf16.gmra.mxu0 %v2836
    %v3370 = vpop.f32.mrf.mxu0
    %v3371 = vadd.f32 %v2940, %v3370
    %v3372 = vpop.f32.mrf.mxu0
    %v3373 = vadd.f32 %v2944, %v3372
    %v3374 = vpop.f32.mrf.mxu0
    %v3375 = vpop.f32.mrf.mxu0
    %3376 = vdwg.mxu0
    %3377 = vmatprep.subr.bf16.mxu0 %v3262
    %3378 = vmatpush1.bf16.msra.mxu0 %v3261
    %3379 = vmatprep.subr.bf16.mxu0 %v3259
    %3380 = vmatpush1.bf16.msra.mxu0 %v3258
    %3381 = vmatprep.subr.bf16.mxu0 %v3256
    %3382 = vmatpush1.bf16.msra.mxu0 %v3255
    %3383 = vmatprep.subr.bf16.mxu0 %v3253
    %3384 = vmatpush1.bf16.msra.mxu0 %v3252
    %3385 = vmatprep.subr.bf16.mxu0 %v3250
    %3386 = vmatpush1.bf16.msra.mxu0 %v3249
    %3387 = vmatprep.subr.bf16.mxu0 %v3247
    %3388 = vmatpush1.bf16.msra.mxu0 %v3246
    %3389 = vmatprep.subr.bf16.mxu0 %v3244
    %3390 = vmatpush1.bf16.msra.mxu0 %v3243
    %3391 = vmatprep.subr.bf16.mxu0 %v3241
    %3392 = vmatpush1.bf16.msra.mxu0 %v3240
    %3393 = vmatprep.subr.bf16.mxu0 0
    %3394 = vmatpush2.bf16.msra.mxu0 0
    %3395 = vmatprep.subr.bf16.mxu0 0
    %3396 = vmatpush2.bf16.msra.mxu0 0
    %3397 = vmatprep.subr.bf16.mxu0 0
    %3398 = vmatpush2.bf16.msra.mxu0 0
    %3399 = vmatprep.subr.bf16.mxu0 0
    %3400 = vmatpush2.bf16.msra.mxu0 0
    %3401 = vmatprep.subr.bf16.mxu0 0
    %3402 = vmatpush2.bf16.msra.mxu0 0
    %3403 = vmatprep.subr.bf16.mxu0 0
    %3404 = vmatpush2.bf16.msra.mxu0 0
    %3405 = vmatprep.subr.bf16.mxu0 0
    %3406 = vmatpush2.bf16.msra.mxu0 0
    %3407 = vmatprep.subr.bf16.mxu0 0
    %3408 = vmatpush2.bf16.msra.mxu0 0
    %3409 = vmatprep.mubr.bf16.mxu0 0
    %3410 = vmatmul.mubr.bf16.gmra.mxu0 %v2838
    %v3411 = vpop.f32.mrf.mxu0
    %v3412 = vadd.f32 %v3371, %v3411
    %v3413 = vpop.f32.mrf.mxu0
    %v3414 = vadd.f32 %v3373, %v3413
    %v3415 = vpop.f32.mrf.mxu0
    %v3416 = vpop.f32.mrf.mxu0
    %3417 = vdwg.mxu0
    %3418 = vmatprep.subr.bf16.mxu0 0
    %3419 = vmatpush1.bf16.msra.mxu0 %v3215
    %3420 = vmatprep.subr.bf16.mxu0 0
    %3421 = vmatpush1.bf16.msra.mxu0 %v3212
    %3422 = vmatprep.subr.bf16.mxu0 0
    %3423 = vmatpush1.bf16.msra.mxu0 %v3209
    %3424 = vmatprep.subr.bf16.mxu0 0
    %3425 = vmatpush1.bf16.msra.mxu0 %v3206
    %3426 = vmatprep.subr.bf16.mxu0 0
    %3427 = vmatpush1.bf16.msra.mxu0 %v3203
    %3428 = vmatprep.subr.bf16.mxu0 0
    %3429 = vmatpush1.bf16.msra.mxu0 %v3200
    %3430 = vmatprep.subr.bf16.mxu0 0
    %3431 = vmatpush1.bf16.msra.mxu0 %v3197
    %3432 = vmatprep.subr.bf16.mxu0 0
    %3433 = vmatpush1.bf16.msra.mxu0 %v3194
    %3434 = vmatprep.subr.bf16.mxu0 0
    %3435 = vmatpush2.bf16.msra.mxu0 %v3239
    %3436 = vmatprep.subr.bf16.mxu0 0
    %3437 = vmatpush2.bf16.msra.mxu0 %v3236
    %3438 = vmatprep.subr.bf16.mxu0 0
    %3439 = vmatpush2.bf16.msra.mxu0 %v3233
    %3440 = vmatprep.subr.bf16.mxu0 0
    %3441 = vmatpush2.bf16.msra.mxu0 %v3230
    %3442 = vmatprep.subr.bf16.mxu0 0
    %3443 = vmatpush2.bf16.msra.mxu0 %v3227
    %3444 = vmatprep.subr.bf16.mxu0 0
    %3445 = vmatpush2.bf16.msra.mxu0 %v3224
    %3446 = vmatprep.subr.bf16.mxu0 0
    %3447 = vmatpush2.bf16.msra.mxu0 %v3221
    %3448 = vmatprep.subr.bf16.mxu0 0
    %3449 = vmatpush2.bf16.msra.mxu0 %v3218
    %3450 = vmatprep.mubr.bf16.mxu0 %v2837
    %3451 = vmatmul.mubr.bf16.gmra.mxu0 %v2836
    %v3452 = vpop.f32.mrf.mxu0
    %v3453 = vadd.f32 %v2948, %v3452
    %v3454 = vpop.f32.mrf.mxu0
    %v3455 = vpop.f32.mrf.mxu0
    %v3456 = vpop.f32.mrf.mxu0
    %3457 = vdwg.mxu0
    %3458 = vmatprep.subr.bf16.mxu0 0
    %3459 = vmatpush1.bf16.msra.mxu0 %v3263
    %3460 = vmatprep.subr.bf16.mxu0 0
    %3461 = vmatpush1.bf16.msra.mxu0 %v3260
    %3462 = vmatprep.subr.bf16.mxu0 0
    %3463 = vmatpush1.bf16.msra.mxu0 %v3257
    %3464 = vmatprep.subr.bf16.mxu0 0
    %3465 = vmatpush1.bf16.msra.mxu0 %v3254
    %3466 = vmatprep.subr.bf16.mxu0 0
    %3467 = vmatpush1.bf16.msra.mxu0 %v3251
    %3468 = vmatprep.subr.bf16.mxu0 0
    %3469 = vmatpush1.bf16.msra.mxu0 %v3248
    %3470 = vmatprep.subr.bf16.mxu0 0
    %3471 = vmatpush1.bf16.msra.mxu0 %v3245
    %3472 = vmatprep.subr.bf16.mxu0 0
    %3473 = vmatpush1.bf16.msra.mxu0 %v3242
    %3474 = vmatprep.subr.bf16.mxu0 0
    %3475 = vmatpush2.bf16.msra.mxu0 0
    %3476 = vmatprep.subr.bf16.mxu0 0
    %3477 = vmatpush2.bf16.msra.mxu0 0
    %3478 = vmatprep.subr.bf16.mxu0 0
    %3479 = vmatpush2.bf16.msra.mxu0 0
    %3480 = vmatprep.subr.bf16.mxu0 0
    %3481 = vmatpush2.bf16.msra.mxu0 0
    %3482 = vmatprep.subr.bf16.mxu0 0
    %3483 = vmatpush2.bf16.msra.mxu0 0
    %3484 = vmatprep.subr.bf16.mxu0 0
    %3485 = vmatpush2.bf16.msra.mxu0 0
    %3486 = vmatprep.subr.bf16.mxu0 0
    %3487 = vmatpush2.bf16.msra.mxu0 0
    %3488 = vmatprep.subr.bf16.mxu0 0
    %3489 = vmatpush2.bf16.msra.mxu0 0
    %3490 = vmatprep.mubr.bf16.mxu0 0
    %3491 = vmatmul.mubr.bf16.gmra.mxu0 %v2838
    %v3492 = vpop.f32.mrf.mxu0
    %v3493 = vadd.f32 %v3453, %v3492
    %v3494 = vpop.f32.mrf.mxu0
    %v3495 = vpop.f32.mrf.mxu0
    %v3496 = vpop.f32.mrf.mxu0
    %3497 = vdwg.mxu0
    %v3498 = vmax.f32 %v3412, 0.0
    %v3499 = vmax.f32 %v3414, 0.0
    %v3500 = vmax.f32 %v3493, 0.0
    %v3501 = vpack.c.bf16 %v3498, %v3498
    %v3502 = vpack.c.bf16 %v3499, %v3499
    %v3503 = vpack.c.bf16 %v3500, %v3500
    %v3504 = vld [vmem:[#allocation9] sm:$0xff]
    %v3505 = vld [vmem:[#allocation9 + $0x8] sm:$0xff]
    %v3506 = vld [vmem:[#allocation9 + $0x10] sm:$0xff]
    %v3507 = vld [vmem:[#allocation9 + $0x18] sm:$0xff]
    %v3508 = vld [vmem:[#allocation9 + $0x20] sm:$0xff]
    %v3509 = vld [vmem:[#allocation9 + $0x28] sm:$0xff]
    %v3510 = vld [vmem:[#allocation9 + $0x30] sm:$0xff]
    %v3511 = vld [vmem:[#allocation9 + $0x38] sm:$0xff]
    %v3512 = vld [vmem:[#allocation9 + $0x40] sm:$0xff]
    %v3513 = vld [vmem:[#allocation9 + $0x48] sm:$0xff]
    %v3514 = vld [vmem:[#allocation9 + $0x50] sm:$0xff]
    %v3515 = vld [vmem:[#allocation9 + $0x58] sm:$0xff]
    %v3516 = vld [vmem:[#allocation9 + $0x60] sm:$0xff]
    %v3517 = vld [vmem:[#allocation9 + $0x68] sm:$0xff]
    %v3518 = vld [vmem:[#allocation9 + $0x70] sm:$0xff]
    %v3519 = vld [vmem:[#allocation9 + $0x78] sm:$0xff]
    %v3520 = vld [vmem:[#allocation9 + $0x80] sm:$0xff]
    %v3521 = vld [vmem:[#allocation9 + $0x88] sm:$0xff]
    %v3522 = vld [vmem:[#allocation9 + $0x90] sm:$0xff]
    %v3523 = vld [vmem:[#allocation9 + $0x98] sm:$0xff]
    %v3524 = vld [vmem:[#allocation9 + $0xa0] sm:$0xff]
    %v3525 = vld [vmem:[#allocation9 + $0xa8] sm:$0xff]
    %v3526 = vld [vmem:[#allocation9 + $0xb0] sm:$0xff]
    %v3527 = vld [vmem:[#allocation9 + $0xb8] sm:$0xff]
    %v3528 = vld [vmem:[#allocation9 + $0xc0] sm:$0xff]
    %v3529 = vld [vmem:[#allocation9 + $0xc8] sm:$0xff]
    %v3530 = vld [vmem:[#allocation9 + $0xd0] sm:$0xff]
    %v3531 = vld [vmem:[#allocation9 + $0xd8] sm:$0xff]
    %v3532 = vld [vmem:[#allocation9 + $0xe0] sm:$0xff]
    %v3533 = vld [vmem:[#allocation9 + $0xe8] sm:$0xff]
    %v3534 = vld [vmem:[#allocation9 + $0xf0] sm:$0xff]
    %v3535 = vld [vmem:[#allocation9 + $0xf8] sm:$0xff]
    %v3536 = vld [vmem:[#allocation9 + $0x100] sm:$0xff]
    %v3537 = vld [vmem:[#allocation9 + $0x108] sm:$0xff]
    %v3538 = vld [vmem:[#allocation9 + $0x110] sm:$0xff]
    %v3539 = vld [vmem:[#allocation9 + $0x118] sm:$0xff]
    %v3540 = vld [vmem:[#allocation9 + $0x120] sm:$0xff]
    %v3541 = vld [vmem:[#allocation9 + $0x128] sm:$0xff]
    %v3542 = vld [vmem:[#allocation9 + $0x130] sm:$0xff]
    %v3543 = vld [vmem:[#allocation9 + $0x138] sm:$0xff]
    %v3544 = vld [vmem:[#allocation9 + $0x140] sm:$0xff]
    %v3545 = vld [vmem:[#allocation9 + $0x148] sm:$0xff]
    %v3546 = vld [vmem:[#allocation9 + $0x150] sm:$0xff]
    %v3547 = vld [vmem:[#allocation9 + $0x158] sm:$0xff]
    %v3548 = vld [vmem:[#allocation9 + $0x160] sm:$0xff]
    %v3549 = vld [vmem:[#allocation9 + $0x168] sm:$0xff]
    %v3550 = vld [vmem:[#allocation9 + $0x170] sm:$0xff]
    %v3551 = vld [vmem:[#allocation9 + $0x178] sm:$0xff]
    %v3552 = vld [vmem:[%s10] sm:$0x3]
    %v3554 = vlaneseq
    %v3555 = vshrl.u32 %v3554, 7
    %v3556 = vsub.s32 0, %v3555
    %v3557 = vrot.slane %v3552, %v3556
    %v3558 = vlaneseq
    %v3559 = vshrl.u32 %v3558, 7
    %v3560 = vsub.s32 1, %v3559
    %v3561 = vrot.slane %v3552, %v3560
    %v3612 = vunpack.c.l.b16 %v3504
    %v3613 = vunpack.c.h.b16 %v3504
    %v3614 = vunpack.c.l.b16 %v3505
    %v3615 = vunpack.c.h.b16 %v3505
    %v3616 = vunpack.c.l.b16 %v3506
    %v3617 = vunpack.c.h.b16 %v3506
    %v3618 = vunpack.c.l.b16 %v3507
    %v3619 = vunpack.c.h.b16 %v3507
    %v3620 = vunpack.c.l.b16 %v3508
    %v3621 = vunpack.c.h.b16 %v3508
    %v3622 = vunpack.c.l.b16 %v3509
    %v3623 = vunpack.c.h.b16 %v3509
    %v3624 = vunpack.c.l.b16 %v3510
    %v3625 = vunpack.c.h.b16 %v3510
    %v3626 = vunpack.c.l.b16 %v3511
    %v3627 = vunpack.c.h.b16 %v3511
    %v3628 = vunpack.c.l.b16 %v3512
    %v3629 = vunpack.c.h.b16 %v3512
    %v3630 = vunpack.c.l.b16 %v3513
    %v3631 = vunpack.c.h.b16 %v3513
    %v3632 = vunpack.c.l.b16 %v3514
    %v3633 = vunpack.c.h.b16 %v3514
    %v3634 = vunpack.c.l.b16 %v3515
    %v3635 = vunpack.c.h.b16 %v3515
    %v3636 = vunpack.c.l.b16 %v3516
    %v3637 = vunpack.c.h.b16 %v3516
    %v3638 = vunpack.c.l.b16 %v3517
    %v3639 = vunpack.c.h.b16 %v3517
    %v3640 = vunpack.c.l.b16 %v3518
    %v3641 = vunpack.c.h.b16 %v3518
    %v3642 = vunpack.c.l.b16 %v3519
    %v3643 = vunpack.c.h.b16 %v3519
    %v3644 = vunpack.c.l.b16 %v3520
    %v3645 = vunpack.c.h.b16 %v3520
    %v3646 = vunpack.c.l.b16 %v3521
    %v3647 = vunpack.c.h.b16 %v3521
    %v3648 = vunpack.c.l.b16 %v3522
    %v3649 = vunpack.c.h.b16 %v3522
    %v3650 = vunpack.c.l.b16 %v3523
    %v3651 = vunpack.c.h.b16 %v3523
    %v3652 = vunpack.c.l.b16 %v3524
    %v3653 = vunpack.c.h.b16 %v3524
    %v3654 = vunpack.c.l.b16 %v3525
    %v3655 = vunpack.c.h.b16 %v3525
    %v3656 = vunpack.c.l.b16 %v3526
    %v3657 = vunpack.c.h.b16 %v3526
    %v3658 = vunpack.c.l.b16 %v3527
    %v3659 = vunpack.c.h.b16 %v3527
    %v3660 = vunpack.c.l.b16 %v3528
    %v3661 = vunpack.c.h.b16 %v3528
    %v3662 = vunpack.c.l.b16 %v3529
    %v3663 = vunpack.c.h.b16 %v3529
    %v3664 = vunpack.c.l.b16 %v3530
    %v3665 = vunpack.c.h.b16 %v3530
    %v3666 = vunpack.c.l.b16 %v3531
    %v3667 = vunpack.c.h.b16 %v3531
    %v3668 = vunpack.c.l.b16 %v3532
    %v3669 = vunpack.c.h.b16 %v3532
    %v3670 = vunpack.c.l.b16 %v3533
    %v3671 = vunpack.c.h.b16 %v3533
    %v3672 = vunpack.c.l.b16 %v3534
    %v3673 = vunpack.c.h.b16 %v3534
    %v3674 = vunpack.c.l.b16 %v3535
    %v3675 = vunpack.c.h.b16 %v3535
    %v3676 = vunpack.c.l.b16 %v3536
    %v3677 = vunpack.c.h.b16 %v3536
    %v3678 = vunpack.c.l.b16 %v3537
    %v3679 = vunpack.c.h.b16 %v3537
    %v3680 = vunpack.c.l.b16 %v3538
    %v3681 = vunpack.c.h.b16 %v3538
    %v3682 = vunpack.c.l.b16 %v3539
    %v3683 = vunpack.c.h.b16 %v3539
    %v3684 = vunpack.c.l.b16 %v3540
    %v3685 = vunpack.c.h.b16 %v3540
    %v3686 = vunpack.c.l.b16 %v3541
    %v3687 = vunpack.c.h.b16 %v3541
    %v3688 = vunpack.c.l.b16 %v3542
    %v3689 = vunpack.c.h.b16 %v3542
    %v3690 = vunpack.c.l.b16 %v3543
    %v3691 = vunpack.c.h.b16 %v3543
    %v3692 = vunpack.c.l.b16 %v3544
    %v3693 = vunpack.c.h.b16 %v3544
    %v3694 = vunpack.c.l.b16 %v3545
    %v3695 = vunpack.c.h.b16 %v3545
    %v3696 = vunpack.c.l.b16 %v3546
    %v3697 = vunpack.c.h.b16 %v3546
    %v3698 = vunpack.c.l.b16 %v3547
    %v3699 = vunpack.c.h.b16 %v3547
    %v3700 = vunpack.c.l.b16 %v3548
    %v3701 = vunpack.c.h.b16 %v3548
    %v3702 = vunpack.c.l.b16 %v3549
    %v3703 = vunpack.c.h.b16 %v3549
    %v3704 = vunpack.c.l.b16 %v3550
    %v3705 = vunpack.c.h.b16 %v3550
    %v3706 = vunpack.c.l.b16 %v3551
    %v3707 = vunpack.c.h.b16 %v3551
    %v3708 = vpack.c.b16 %v3614, %v3612
    %v3709 = vpack.c.b16 %v3615, %v3613
    %v3710 = vpack.c.b16 %v3618, %v3616
    %v3711 = vpack.c.b16 %v3619, %v3617
    %v3712 = vpack.c.b16 %v3622, %v3620
    %v3713 = vpack.c.b16 %v3623, %v3621
    %v3714 = vpack.c.b16 %v3626, %v3624
    %v3715 = vpack.c.b16 %v3627, %v3625
    %v3716 = vpack.c.b16 %v3630, %v3628
    %v3717 = vpack.c.b16 %v3631, %v3629
    %v3718 = vpack.c.b16 %v3634, %v3632
    %v3719 = vpack.c.b16 %v3635, %v3633
    %v3720 = vpack.c.b16 %v3638, %v3636
    %v3721 = vpack.c.b16 %v3639, %v3637
    %v3722 = vpack.c.b16 %v3642, %v3640
    %v3723 = vpack.c.b16 %v3643, %v3641
    %v3724 = vpack.c.b16 %v3646, %v3644
    %v3725 = vpack.c.b16 %v3647, %v3645
    %v3726 = vpack.c.b16 %v3650, %v3648
    %v3727 = vpack.c.b16 %v3651, %v3649
    %v3728 = vpack.c.b16 %v3654, %v3652
    %v3729 = vpack.c.b16 %v3655, %v3653
    %v3730 = vpack.c.b16 %v3658, %v3656
    %v3731 = vpack.c.b16 %v3659, %v3657
    %v3732 = vpack.c.b16 %v3662, %v3660
    %v3733 = vpack.c.b16 %v3663, %v3661
    %v3734 = vpack.c.b16 %v3666, %v3664
    %v3735 = vpack.c.b16 %v3667, %v3665
    %v3736 = vpack.c.b16 %v3670, %v3668
    %v3737 = vpack.c.b16 %v3671, %v3669
    %v3738 = vpack.c.b16 %v3674, %v3672
    %v3739 = vpack.c.b16 %v3675, %v3673
    %v3740 = vpack.c.b16 %v3678, %v3676
    %v3741 = vpack.c.b16 %v3679, %v3677
    %v3742 = vpack.c.b16 %v3682, %v3680
    %v3743 = vpack.c.b16 %v3683, %v3681
    %v3744 = vpack.c.b16 %v3686, %v3684
    %v3745 = vpack.c.b16 %v3687, %v3685
    %v3746 = vpack.c.b16 %v3690, %v3688
    %v3747 = vpack.c.b16 %v3691, %v3689
    %v3748 = vpack.c.b16 %v3694, %v3692
    %v3749 = vpack.c.b16 %v3695, %v3693
    %v3750 = vpack.c.b16 %v3698, %v3696
    %v3751 = vpack.c.b16 %v3699, %v3697
    %v3752 = vpack.c.b16 %v3702, %v3700
    %v3753 = vpack.c.b16 %v3703, %v3701
    %v3754 = vpack.c.b16 %v3706, %v3704
    %v3755 = vpack.c.b16 %v3707, %v3705
    %3804 = vmatprep.subr.bf16.mxu0 %v3723
    %3805 = vmatpush1.bf16.msra.mxu0 %v3722
    %3806 = vmatprep.subr.bf16.mxu0 %v3721
    %3807 = vmatpush1.bf16.msra.mxu0 %v3720
    %3808 = vmatprep.subr.bf16.mxu0 %v3719
    %3809 = vmatpush1.bf16.msra.mxu0 %v3718
    %3810 = vmatprep.subr.bf16.mxu0 %v3717
    %3811 = vmatpush1.bf16.msra.mxu0 %v3716
    %3812 = vmatprep.subr.bf16.mxu0 %v3715
    %3813 = vmatpush1.bf16.msra.mxu0 %v3714
    %3814 = vmatprep.subr.bf16.mxu0 %v3713
    %3815 = vmatpush1.bf16.msra.mxu0 %v3712
    %3816 = vmatprep.subr.bf16.mxu0 %v3711
    %3817 = vmatpush1.bf16.msra.mxu0 %v3710
    %3818 = vmatprep.subr.bf16.mxu0 %v3709
    %3819 = vmatpush1.bf16.msra.mxu0 %v3708
    %3820 = vmatprep.subr.bf16.mxu0 %v3739
    %3821 = vmatpush2.bf16.msra.mxu0 %v3738
    %3822 = vmatprep.subr.bf16.mxu0 %v3737
    %3823 = vmatpush2.bf16.msra.mxu0 %v3736
    %3824 = vmatprep.subr.bf16.mxu0 %v3735
    %3825 = vmatpush2.bf16.msra.mxu0 %v3734
    %3826 = vmatprep.subr.bf16.mxu0 %v3733
    %3827 = vmatpush2.bf16.msra.mxu0 %v3732
    %3828 = vmatprep.subr.bf16.mxu0 %v3731
    %3829 = vmatpush2.bf16.msra.mxu0 %v3730
    %3830 = vmatprep.subr.bf16.mxu0 %v3729
    %3831 = vmatpush2.bf16.msra.mxu0 %v3728
    %3832 = vmatprep.subr.bf16.mxu0 %v3727
    %3833 = vmatpush2.bf16.msra.mxu0 %v3726
    %3834 = vmatprep.subr.bf16.mxu0 %v3725
    %3835 = vmatpush2.bf16.msra.mxu0 %v3724
    %3836 = vmatprep.mubr.bf16.mxu0 %v3502
    %3837 = vmatmul.mubr.bf16.gmra.mxu0 %v3501
    %v3838 = vpop.f32.mrf.mxu0
    %v3839 = vadd.f32 %v3557, %v3838
    %v3840 = vpop.f32.mrf.mxu0
    %v3841 = vadd.f32 %v3561, %v3840
    %v3842 = vpop.f32.mrf.mxu0
    %v3843 = vpop.f32.mrf.mxu0
    %3844 = vdwg.mxu0
    %3845 = vmatprep.subr.bf16.mxu0 %v3755
    %3846 = vmatpush1.bf16.msra.mxu0 %v3754
    %3847 = vmatprep.subr.bf16.mxu0 %v3753
    %3848 = vmatpush1.bf16.msra.mxu0 %v3752
    %3849 = vmatprep.subr.bf16.mxu0 %v3751
    %3850 = vmatpush1.bf16.msra.mxu0 %v3750
    %3851 = vmatprep.subr.bf16.mxu0 %v3749
    %3852 = vmatpush1.bf16.msra.mxu0 %v3748
    %3853 = vmatprep.subr.bf16.mxu0 %v3747
    %3854 = vmatpush1.bf16.msra.mxu0 %v3746
    %3855 = vmatprep.subr.bf16.mxu0 %v3745
    %3856 = vmatpush1.bf16.msra.mxu0 %v3744
    %3857 = vmatprep.subr.bf16.mxu0 %v3743
    %3858 = vmatpush1.bf16.msra.mxu0 %v3742
    %3859 = vmatprep.subr.bf16.mxu0 %v3741
    %3860 = vmatpush1.bf16.msra.mxu0 %v3740
    %3861 = vmatprep.subr.bf16.mxu0 0
    %3862 = vmatpush2.bf16.msra.mxu0 0
    %3863 = vmatprep.subr.bf16.mxu0 0
    %3864 = vmatpush2.bf16.msra.mxu0 0
    %3865 = vmatprep.subr.bf16.mxu0 0
    %3866 = vmatpush2.bf16.msra.mxu0 0
    %3867 = vmatprep.subr.bf16.mxu0 0
    %3868 = vmatpush2.bf16.msra.mxu0 0
    %3869 = vmatprep.subr.bf16.mxu0 0
    %3870 = vmatpush2.bf16.msra.mxu0 0
    %3871 = vmatprep.subr.bf16.mxu0 0
    %3872 = vmatpush2.bf16.msra.mxu0 0
    %3873 = vmatprep.subr.bf16.mxu0 0
    %3874 = vmatpush2.bf16.msra.mxu0 0
    %3875 = vmatprep.subr.bf16.mxu0 0
    %3876 = vmatpush2.bf16.msra.mxu0 0
    %3877 = vmatprep.mubr.bf16.mxu0 0
    %3878 = vmatmul.mubr.bf16.gmra.mxu0 %v3503
    %v3879 = vpop.f32.mrf.mxu0
    %v3880 = vadd.f32 %v3839, %v3879
    %v3881 = vpop.f32.mrf.mxu0
    %v3882 = vadd.f32 %v3841, %v3881
    %v3883 = vpop.f32.mrf.mxu0
    %v3884 = vpop.f32.mrf.mxu0
    %3885 = vdwg.mxu0
    %v3886 = vmax.f32 %v3880, 0.0
    %v3887 = vmax.f32 %v3882, 0.0
    %v3888 = vpack.c.bf16 %v3886, %v3886
    %v3889 = vpack.c.bf16 %v3887, %v3887
    %v3890 = vld [vmem:[#allocation10] sm:$0xff]
    %v3891 = vld [vmem:[#allocation10 + $0x8] sm:$0xf]
    %v3892 = vld [vmem:[#allocation10 + $0xc] sm:$0xff]
    %v3893 = vld [vmem:[#allocation10 + $0x14] sm:$0xf]
    %v3894 = vld [vmem:[#allocation10 + $0x18] sm:$0xff]
    %v3895 = vld [vmem:[#allocation10 + $0x20] sm:$0xf]
    %v3896 = vld [vmem:[#allocation10 + $0x24] sm:$0xff]
    %v3897 = vld [vmem:[#allocation10 + $0x2c] sm:$0xf]
    %v3898 = vld [vmem:[#allocation10 + $0x30] sm:$0xff]
    %v3899 = vld [vmem:[#allocation10 + $0x38] sm:$0xf]
    %v3900 = vld [vmem:[#allocation10 + $0x3c] sm:$0xff]
    %v3901 = vld [vmem:[#allocation10 + $0x44] sm:$0xf]
    %v3902 = vld [vmem:[#allocation10 + $0x48] sm:$0xff]
    %v3903 = vld [vmem:[#allocation10 + $0x50] sm:$0xf]
    %v3904 = vld [vmem:[#allocation10 + $0x54] sm:$0xff]
    %v3905 = vld [vmem:[#allocation10 + $0x5c] sm:$0xf]
    %v3906 = vld [vmem:[#allocation10 + $0x60] sm:$0xff]
    %v3907 = vld [vmem:[#allocation10 + $0x68] sm:$0xf]
    %v3908 = vld [vmem:[#allocation10 + $0x6c] sm:$0xff]
    %v3909 = vld [vmem:[#allocation10 + $0x74] sm:$0xf]
    %v3910 = vld [vmem:[#allocation10 + $0x78] sm:$0xff]
    %v3911 = vld [vmem:[#allocation10 + $0x80] sm:$0xf]
    %v3912 = vld [vmem:[#allocation10 + $0x84] sm:$0xff]
    %v3913 = vld [vmem:[#allocation10 + $0x8c] sm:$0xf]
    %v3914 = vld [vmem:[#allocation10 + $0x90] sm:$0xff]
    %v3915 = vld [vmem:[#allocation10 + $0x98] sm:$0xf]
    %v3916 = vld [vmem:[#allocation10 + $0x9c] sm:$0xff]
    %v3917 = vld [vmem:[#allocation10 + $0xa4] sm:$0xf]
    %v3918 = vld [vmem:[#allocation10 + $0xa8] sm:$0xff]
    %v3919 = vld [vmem:[#allocation10 + $0xb0] sm:$0xf]
    %v3920 = vld [vmem:[#allocation10 + $0xb4] sm:$0xff]
    %v3921 = vld [vmem:[#allocation10 + $0xbc] sm:$0xf]
    %v3922 = vld [vmem:[#allocation10 + $0xc0] sm:$0xff]
    %v3923 = vld [vmem:[#allocation10 + $0xc8] sm:$0xf]
    %v3924 = vld [vmem:[#allocation10 + $0xcc] sm:$0xff]
    %v3925 = vld [vmem:[#allocation10 + $0xd4] sm:$0xf]
    %v3926 = vld [vmem:[#allocation10 + $0xd8] sm:$0xff]
    %v3927 = vld [vmem:[#allocation10 + $0xe0] sm:$0xf]
    %v3928 = vld [vmem:[#allocation10 + $0xe4] sm:$0xff]
    %v3929 = vld [vmem:[#allocation10 + $0xec] sm:$0xf]
    %v3930 = vld [vmem:[#allocation10 + $0xf0] sm:$0xff]
    %v3931 = vld [vmem:[#allocation10 + $0xf8] sm:$0xf]
    %v3932 = vld [vmem:[#allocation10 + $0xfc] sm:$0xff]
    %v3933 = vld [vmem:[#allocation10 + $0x104] sm:$0xf]
    %v3934 = vld [vmem:[#allocation10 + $0x108] sm:$0xff]
    %v3935 = vld [vmem:[#allocation10 + $0x110] sm:$0xf]
    %v3936 = vld [vmem:[#allocation10 + $0x114] sm:$0xff]
    %v3937 = vld [vmem:[#allocation10 + $0x11c] sm:$0xf]
    %v3938 = vld [vmem:[#allocation10 + $0x120] sm:$0xff]
    %v3939 = vld [vmem:[#allocation10 + $0x128] sm:$0xf]
    %v3940 = vld [vmem:[#allocation10 + $0x12c] sm:$0xff]
    %v3941 = vld [vmem:[#allocation10 + $0x134] sm:$0xf]
    %v3942 = vld [vmem:[#allocation10 + $0x138] sm:$0xff]
    %v3943 = vld [vmem:[#allocation10 + $0x140] sm:$0xf]
    %v3944 = vld [vmem:[#allocation10 + $0x144] sm:$0xff]
    %v3945 = vld [vmem:[#allocation10 + $0x14c] sm:$0xf]
    %v3946 = vld [vmem:[#allocation10 + $0x150] sm:$0xff]
    %v3947 = vld [vmem:[#allocation10 + $0x158] sm:$0xf]
    %v3948 = vld [vmem:[#allocation10 + $0x15c] sm:$0xff]
    %v3949 = vld [vmem:[#allocation10 + $0x164] sm:$0xf]
    %v3950 = vld [vmem:[#allocation10 + $0x168] sm:$0xff]
    %v3951 = vld [vmem:[#allocation10 + $0x170] sm:$0xf]
    %v3952 = vld [vmem:[#allocation10 + $0x174] sm:$0xff]
    %v3953 = vld [vmem:[#allocation10 + $0x17c] sm:$0xf]
    %v3954 = vld [vmem:[%s12] sm:$0x7]
    %v3956 = vlaneseq
    %v3957 = vshrl.u32 %v3956, 7
    %v3958 = vsub.s32 0, %v3957
    %v3959 = vrot.slane %v3954, %v3958
    %v3960 = vlaneseq
    %v3961 = vshrl.u32 %v3960, 7
    %v3962 = vsub.s32 1, %v3961
    %v3963 = vrot.slane %v3954, %v3962
    %v3964 = vlaneseq
    %v3965 = vshrl.u32 %v3964, 7
    %v3966 = vsub.s32 2, %v3965
    %v3967 = vrot.slane %v3954, %v3966
    %v4035 = vunpack.c.l.b16 %v3890
    %v4036 = vunpack.c.h.b16 %v3890
    %v4037 = vunpack.c.l.b16 %v3891
    %v4038 = vunpack.c.l.b16 %v3892
    %v4039 = vunpack.c.h.b16 %v3892
    %v4040 = vunpack.c.l.b16 %v3893
    %v4041 = vunpack.c.l.b16 %v3894
    %v4042 = vunpack.c.h.b16 %v3894
    %v4043 = vunpack.c.l.b16 %v3895
    %v4044 = vunpack.c.l.b16 %v3896
    %v4045 = vunpack.c.h.b16 %v3896
    %v4046 = vunpack.c.l.b16 %v3897
    %v4047 = vunpack.c.l.b16 %v3898
    %v4048 = vunpack.c.h.b16 %v3898
    %v4049 = vunpack.c.l.b16 %v3899
    %v4050 = vunpack.c.l.b16 %v3900
    %v4051 = vunpack.c.h.b16 %v3900
    %v4052 = vunpack.c.l.b16 %v3901
    %v4053 = vunpack.c.l.b16 %v3902
    %v4054 = vunpack.c.h.b16 %v3902
    %v4055 = vunpack.c.l.b16 %v3903
    %v4056 = vunpack.c.l.b16 %v3904
    %v4057 = vunpack.c.h.b16 %v3904
    %v4058 = vunpack.c.l.b16 %v3905
    %v4059 = vunpack.c.l.b16 %v3906
    %v4060 = vunpack.c.h.b16 %v3906
    %v4061 = vunpack.c.l.b16 %v3907
    %v4062 = vunpack.c.l.b16 %v3908
    %v4063 = vunpack.c.h.b16 %v3908
    %v4064 = vunpack.c.l.b16 %v3909
    %v4065 = vunpack.c.l.b16 %v3910
    %v4066 = vunpack.c.h.b16 %v3910
    %v4067 = vunpack.c.l.b16 %v3911
    %v4068 = vunpack.c.l.b16 %v3912
    %v4069 = vunpack.c.h.b16 %v3912
    %v4070 = vunpack.c.l.b16 %v3913
    %v4071 = vunpack.c.l.b16 %v3914
    %v4072 = vunpack.c.h.b16 %v3914
    %v4073 = vunpack.c.l.b16 %v3915
    %v4074 = vunpack.c.l.b16 %v3916
    %v4075 = vunpack.c.h.b16 %v3916
    %v4076 = vunpack.c.l.b16 %v3917
    %v4077 = vunpack.c.l.b16 %v3918
    %v4078 = vunpack.c.h.b16 %v3918
    %v4079 = vunpack.c.l.b16 %v3919
    %v4080 = vunpack.c.l.b16 %v3920
    %v4081 = vunpack.c.h.b16 %v3920
    %v4082 = vunpack.c.l.b16 %v3921
    %v4083 = vunpack.c.l.b16 %v3922
    %v4084 = vunpack.c.h.b16 %v3922
    %v4085 = vunpack.c.l.b16 %v3923
    %v4086 = vunpack.c.l.b16 %v3924
    %v4087 = vunpack.c.h.b16 %v3924
    %v4088 = vunpack.c.l.b16 %v3925
    %v4089 = vunpack.c.l.b16 %v3926
    %v4090 = vunpack.c.h.b16 %v3926
    %v4091 = vunpack.c.l.b16 %v3927
    %v4092 = vunpack.c.l.b16 %v3928
    %v4093 = vunpack.c.h.b16 %v3928
    %v4094 = vunpack.c.l.b16 %v3929
    %v4095 = vunpack.c.l.b16 %v3930
    %v4096 = vunpack.c.h.b16 %v3930
    %v4097 = vunpack.c.l.b16 %v3931
    %v4098 = vunpack.c.l.b16 %v3932
    %v4099 = vunpack.c.h.b16 %v3932
    %v4100 = vunpack.c.l.b16 %v3933
    %v4101 = vunpack.c.l.b16 %v3934
    %v4102 = vunpack.c.h.b16 %v3934
    %v4103 = vunpack.c.l.b16 %v3935
    %v4104 = vunpack.c.l.b16 %v3936
    %v4105 = vunpack.c.h.b16 %v3936
    %v4106 = vunpack.c.l.b16 %v3937
    %v4107 = vunpack.c.l.b16 %v3938
    %v4108 = vunpack.c.h.b16 %v3938
    %v4109 = vunpack.c.l.b16 %v3939
    %v4110 = vunpack.c.l.b16 %v3940
    %v4111 = vunpack.c.h.b16 %v3940
    %v4112 = vunpack.c.l.b16 %v3941
    %v4113 = vunpack.c.l.b16 %v3942
    %v4114 = vunpack.c.h.b16 %v3942
    %v4115 = vunpack.c.l.b16 %v3943
    %v4116 = vunpack.c.l.b16 %v3944
    %v4117 = vunpack.c.h.b16 %v3944
    %v4118 = vunpack.c.l.b16 %v3945
    %v4119 = vunpack.c.l.b16 %v3946
    %v4120 = vunpack.c.h.b16 %v3946
    %v4121 = vunpack.c.l.b16 %v3947
    %v4122 = vunpack.c.l.b16 %v3948
    %v4123 = vunpack.c.h.b16 %v3948
    %v4124 = vunpack.c.l.b16 %v3949
    %v4125 = vunpack.c.l.b16 %v3950
    %v4126 = vunpack.c.h.b16 %v3950
    %v4127 = vunpack.c.l.b16 %v3951
    %v4128 = vunpack.c.l.b16 %v3952
    %v4129 = vunpack.c.h.b16 %v3952
    %v4130 = vunpack.c.l.b16 %v3953
    %v4131 = vpack.c.b16 %v4038, %v4035
    %v4132 = vpack.c.b16 %v4039, %v4036
    %v4133 = vpack.c.b16 %v4040, %v4037
    %v4134 = vpack.c.b16 %v4044, %v4041
    %v4135 = vpack.c.b16 %v4045, %v4042
    %v4136 = vpack.c.b16 %v4046, %v4043
    %v4137 = vpack.c.b16 %v4050, %v4047
    %v4138 = vpack.c.b16 %v4051, %v4048
    %v4139 = vpack.c.b16 %v4052, %v4049
    %v4140 = vpack.c.b16 %v4056, %v4053
    %v4141 = vpack.c.b16 %v4057, %v4054
    %v4142 = vpack.c.b16 %v4058, %v4055
    %v4143 = vpack.c.b16 %v4062, %v4059
    %v4144 = vpack.c.b16 %v4063, %v4060
    %v4145 = vpack.c.b16 %v4064, %v4061
    %v4146 = vpack.c.b16 %v4068, %v4065
    %v4147 = vpack.c.b16 %v4069, %v4066
    %v4148 = vpack.c.b16 %v4070, %v4067
    %v4149 = vpack.c.b16 %v4074, %v4071
    %v4150 = vpack.c.b16 %v4075, %v4072
    %v4151 = vpack.c.b16 %v4076, %v4073
    %v4152 = vpack.c.b16 %v4080, %v4077
    %v4153 = vpack.c.b16 %v4081, %v4078
    %v4154 = vpack.c.b16 %v4082, %v4079
    %v4155 = vpack.c.b16 %v4086, %v4083
    %v4156 = vpack.c.b16 %v4087, %v4084
    %v4157 = vpack.c.b16 %v4088, %v4085
    %v4158 = vpack.c.b16 %v4092, %v4089
    %v4159 = vpack.c.b16 %v4093, %v4090
    %v4160 = vpack.c.b16 %v4094, %v4091
    %v4161 = vpack.c.b16 %v4098, %v4095
    %v4162 = vpack.c.b16 %v4099, %v4096
    %v4163 = vpack.c.b16 %v4100, %v4097
    %v4164 = vpack.c.b16 %v4104, %v4101
    %v4165 = vpack.c.b16 %v4105, %v4102
    %v4166 = vpack.c.b16 %v4106, %v4103
    %v4167 = vpack.c.b16 %v4110, %v4107
    %v4168 = vpack.c.b16 %v4111, %v4108
    %v4169 = vpack.c.b16 %v4112, %v4109
    %v4170 = vpack.c.b16 %v4116, %v4113
    %v4171 = vpack.c.b16 %v4117, %v4114
    %v4172 = vpack.c.b16 %v4118, %v4115
    %v4173 = vpack.c.b16 %v4122, %v4119
    %v4174 = vpack.c.b16 %v4123, %v4120
    %v4175 = vpack.c.b16 %v4124, %v4121
    %v4176 = vpack.c.b16 %v4128, %v4125
    %v4177 = vpack.c.b16 %v4129, %v4126
    %v4178 = vpack.c.b16 %v4130, %v4127
    %4227 = vmatprep.subr.bf16.mxu0 %v4153
    %4228 = vmatpush1.bf16.msra.mxu0 %v4152
    %4229 = vmatprep.subr.bf16.mxu0 %v4150
    %4230 = vmatpush1.bf16.msra.mxu0 %v4149
    %4231 = vmatprep.subr.bf16.mxu0 %v4147
    %4232 = vmatpush1.bf16.msra.mxu0 %v4146
    %4233 = vmatprep.subr.bf16.mxu0 %v4144
    %4234 = vmatpush1.bf16.msra.mxu0 %v4143
    %4235 = vmatprep.subr.bf16.mxu0 %v4141
    %4236 = vmatpush1.bf16.msra.mxu0 %v4140
    %4237 = vmatprep.subr.bf16.mxu0 %v4138
    %4238 = vmatpush1.bf16.msra.mxu0 %v4137
    %4239 = vmatprep.subr.bf16.mxu0 %v4135
    %4240 = vmatpush1.bf16.msra.mxu0 %v4134
    %4241 = vmatprep.subr.bf16.mxu0 %v4132
    %4242 = vmatpush1.bf16.msra.mxu0 %v4131
    %4243 = vmatprep.subr.bf16.mxu0 %v4177
    %4244 = vmatpush2.bf16.msra.mxu0 %v4176
    %4245 = vmatprep.subr.bf16.mxu0 %v4174
    %4246 = vmatpush2.bf16.msra.mxu0 %v4173
    %4247 = vmatprep.subr.bf16.mxu0 %v4171
    %4248 = vmatpush2.bf16.msra.mxu0 %v4170
    %4249 = vmatprep.subr.bf16.mxu0 %v4168
    %4250 = vmatpush2.bf16.msra.mxu0 %v4167
    %4251 = vmatprep.subr.bf16.mxu0 %v4165
    %4252 = vmatpush2.bf16.msra.mxu0 %v4164
    %4253 = vmatprep.subr.bf16.mxu0 %v4162
    %4254 = vmatpush2.bf16.msra.mxu0 %v4161
    %4255 = vmatprep.subr.bf16.mxu0 %v4159
    %4256 = vmatpush2.bf16.msra.mxu0 %v4158
    %4257 = vmatprep.subr.bf16.mxu0 %v4156
    %4258 = vmatpush2.bf16.msra.mxu0 %v4155
    %4259 = vmatprep.mubr.bf16.mxu0 %v3889
    %4260 = vmatmul.mubr.bf16.gmra.mxu0 %v3888
    %v4261 = vpop.f32.mrf.mxu0
    %v4262 = vadd.f32 %v3959, %v4261
    %v4263 = vpop.f32.mrf.mxu0
    %v4264 = vadd.f32 %v3963, %v4263
    %v4265 = vpop.f32.mrf.mxu0
    %v4266 = vpop.f32.mrf.mxu0
    %4267 = vdwg.mxu0
    %4268 = vmatprep.subr.bf16.mxu0 0
    %4269 = vmatpush1.bf16.msra.mxu0 %v4154
    %4270 = vmatprep.subr.bf16.mxu0 0
    %4271 = vmatpush1.bf16.msra.mxu0 %v4151
    %4272 = vmatprep.subr.bf16.mxu0 0
    %4273 = vmatpush1.bf16.msra.mxu0 %v4148
    %4274 = vmatprep.subr.bf16.mxu0 0
    %4275 = vmatpush1.bf16.msra.mxu0 %v4145
    %4276 = vmatprep.subr.bf16.mxu0 0
    %4277 = vmatpush1.bf16.msra.mxu0 %v4142
    %4278 = vmatprep.subr.bf16.mxu0 0
    %4279 = vmatpush1.bf16.msra.mxu0 %v4139
    %4280 = vmatprep.subr.bf16.mxu0 0
    %4281 = vmatpush1.bf16.msra.mxu0 %v4136
    %4282 = vmatprep.subr.bf16.mxu0 0
    %4283 = vmatpush1.bf16.msra.mxu0 %v4133
    %4284 = vmatprep.subr.bf16.mxu0 0
    %4285 = vmatpush2.bf16.msra.mxu0 %v4178
    %4286 = vmatprep.subr.bf16.mxu0 0
    %4287 = vmatpush2.bf16.msra.mxu0 %v4175
    %4288 = vmatprep.subr.bf16.mxu0 0
    %4289 = vmatpush2.bf16.msra.mxu0 %v4172
    %4290 = vmatprep.subr.bf16.mxu0 0
    %4291 = vmatpush2.bf16.msra.mxu0 %v4169
    %4292 = vmatprep.subr.bf16.mxu0 0
    %4293 = vmatpush2.bf16.msra.mxu0 %v4166
    %4294 = vmatprep.subr.bf16.mxu0 0
    %4295 = vmatpush2.bf16.msra.mxu0 %v4163
    %4296 = vmatprep.subr.bf16.mxu0 0
    %4297 = vmatpush2.bf16.msra.mxu0 %v4160
    %4298 = vmatprep.subr.bf16.mxu0 0
    %4299 = vmatpush2.bf16.msra.mxu0 %v4157
    %4300 = vmatprep.mubr.bf16.mxu0 %v3889
    %4301 = vmatmul.mubr.bf16.gmra.mxu0 %v3888
    %v4302 = vpop.f32.mrf.mxu0
    %v4303 = vadd.f32 %v3967, %v4302
    %v4304 = vpop.f32.mrf.mxu0
    %v4305 = vpop.f32.mrf.mxu0
    %v4306 = vpop.f32.mrf.mxu0
    %4307 = vdwg.mxu0
    %v4308 = vmax.f32 %v4262, 0.0
    %v4309 = vmax.f32 %v4264, 0.0
    %v4310 = vmax.f32 %v4303, 0.0
    %v4311 = vpack.c.bf16 %v4308, %v4308
    %v4312 = vpack.c.bf16 %v4309, %v4309
    %v4313 = vpack.c.bf16 %v4310, %v4310
    %v4314 = vld [vmem:[%s13] sm:$0xf]
    %v4315 = vld [vmem:[%s13 + $0x4] sm:$0xf]
    %v4316 = vld [vmem:[%s13 + $0x8] sm:$0xf]
    %v4317 = vld [vmem:[%s13 + $0xc] sm:$0xf]
    %v4318 = vld [vmem:[%s13 + $0x10] sm:$0xf]
    %v4319 = vld [vmem:[%s13 + $0x14] sm:$0xf]
    %v4320 = vld [vmem:[%s13 + $0x18] sm:$0xf]
    %v4321 = vld [vmem:[%s13 + $0x1c] sm:$0xf]
    %v4322 = vld [vmem:[%s13 + $0x20] sm:$0xf]
    %v4323 = vld [vmem:[%s13 + $0x24] sm:$0xf]
    %v4324 = vld [vmem:[%s13 + $0x28] sm:$0xf]
    %v4325 = vld [vmem:[%s13 + $0x2c] sm:$0xf]
    %v4326 = vld [vmem:[%s13 + $0x30] sm:$0xf]
    %v4327 = vld [vmem:[%s13 + $0x34] sm:$0xf]
    %v4328 = vld [vmem:[%s13 + $0x38] sm:$0xf]
    %v4329 = vld [vmem:[%s13 + $0x3c] sm:$0xf]
    %v4330 = vld [vmem:[%s13 + $0x40] sm:$0xf]
    %v4331 = vld [vmem:[%s13 + $0x44] sm:$0xf]
    %v4332 = vld [vmem:[%s13 + $0x48] sm:$0xf]
    %v4333 = vld [vmem:[%s13 + $0x4c] sm:$0xf]
    %v4334 = vld [vmem:[%s13 + $0x50] sm:$0xf]
    %v4335 = vld [vmem:[%s13 + $0x54] sm:$0xf]
    %v4336 = vld [vmem:[%s13 + $0x58] sm:$0xf]
    %v4337 = vld [vmem:[%s13 + $0x5c] sm:$0xf]
    %v4338 = vld [vmem:[%s13 + $0x60] sm:$0xf]
    %v4339 = vld [vmem:[%s13 + $0x64] sm:$0xf]
    %v4340 = vld [vmem:[%s13 + $0x68] sm:$0xf]
    %v4341 = vld [vmem:[%s13 + $0x6c] sm:$0xf]
    %v4342 = vld [vmem:[%s13 + $0x70] sm:$0xf]
    %v4343 = vld [vmem:[%s13 + $0x74] sm:$0xf]
    %v4344 = vld [vmem:[%s13 + $0x78] sm:$0xf]
    %v4345 = vld [vmem:[%s13 + $0x7c] sm:$0xf]
    %v4346 = vld [vmem:[%s13 + $0x80] sm:$0xf]
    %v4347 = vld [vmem:[%s13 + $0x84] sm:$0xf]
    %v4348 = vld [vmem:[%s13 + $0x88] sm:$0xf]
    %v4349 = vld [vmem:[%s13 + $0x8c] sm:$0xf]
    %v4350 = vld [vmem:[%s13 + $0x90] sm:$0xf]
    %v4351 = vld [vmem:[%s13 + $0x94] sm:$0xf]
    %v4352 = vld [vmem:[%s13 + $0x98] sm:$0xf]
    %v4353 = vld [vmem:[%s13 + $0x9c] sm:$0xf]
    %v4354 = vld [vmem:[%s13 + $0xa0] sm:$0xf]
    %v4355 = vld [vmem:[%s13 + $0xa4] sm:$0xf]
    %v4356 = vld [vmem:[%s13 + $0xa8] sm:$0xf]
    %v4357 = vld [vmem:[%s13 + $0xac] sm:$0xf]
    %v4358 = vld [vmem:[%s13 + $0xb0] sm:$0xf]
    %v4359 = vld [vmem:[%s13 + $0xb4] sm:$0xf]
    %v4360 = vld [vmem:[%s13 + $0xb8] sm:$0xf]
    %v4361 = vld [vmem:[%s13 + $0xbc] sm:$0xf]
    %v4362 = vld [vmem:[%s14] sm:$0x1]
    %v4364 = vlaneseq
    %v4365 = vshrl.u32 %v4364, 7
    %v4366 = vsub.s32 0, %v4365
    %v4367 = vrot.slane %v4362, %v4366
    %v4417 = vunpack.c.l.b16 %v4314
    %v4418 = vunpack.c.l.b16 %v4315
    %v4419 = vunpack.c.l.b16 %v4316
    %v4420 = vunpack.c.l.b16 %v4317
    %v4421 = vunpack.c.l.b16 %v4318
    %v4422 = vunpack.c.l.b16 %v4319
    %v4423 = vunpack.c.l.b16 %v4320
    %v4424 = vunpack.c.l.b16 %v4321
    %v4425 = vunpack.c.l.b16 %v4322
    %v4426 = vunpack.c.l.b16 %v4323
    %v4427 = vunpack.c.l.b16 %v4324
    %v4428 = vunpack.c.l.b16 %v4325
    %v4429 = vunpack.c.l.b16 %v4326
    %v4430 = vunpack.c.l.b16 %v4327
    %v4431 = vunpack.c.l.b16 %v4328
    %v4432 = vunpack.c.l.b16 %v4329
    %v4433 = vunpack.c.l.b16 %v4330
    %v4434 = vunpack.c.l.b16 %v4331
    %v4435 = vunpack.c.l.b16 %v4332
    %v4436 = vunpack.c.l.b16 %v4333
    %v4437 = vunpack.c.l.b16 %v4334
    %v4438 = vunpack.c.l.b16 %v4335
    %v4439 = vunpack.c.l.b16 %v4336
    %v4440 = vunpack.c.l.b16 %v4337
    %v4441 = vunpack.c.l.b16 %v4338
    %v4442 = vunpack.c.l.b16 %v4339
    %v4443 = vunpack.c.l.b16 %v4340
    %v4444 = vunpack.c.l.b16 %v4341
    %v4445 = vunpack.c.l.b16 %v4342
    %v4446 = vunpack.c.l.b16 %v4343
    %v4447 = vunpack.c.l.b16 %v4344
    %v4448 = vunpack.c.l.b16 %v4345
    %v4449 = vunpack.c.l.b16 %v4346
    %v4450 = vunpack.c.l.b16 %v4347
    %v4451 = vunpack.c.l.b16 %v4348
    %v4452 = vunpack.c.l.b16 %v4349
    %v4453 = vunpack.c.l.b16 %v4350
    %v4454 = vunpack.c.l.b16 %v4351
    %v4455 = vunpack.c.l.b16 %v4352
    %v4456 = vunpack.c.l.b16 %v4353
    %v4457 = vunpack.c.l.b16 %v4354
    %v4458 = vunpack.c.l.b16 %v4355
    %v4459 = vunpack.c.l.b16 %v4356
    %v4460 = vunpack.c.l.b16 %v4357
    %v4461 = vunpack.c.l.b16 %v4358
    %v4462 = vunpack.c.l.b16 %v4359
    %v4463 = vunpack.c.l.b16 %v4360
    %v4464 = vunpack.c.l.b16 %v4361
    %v4465 = vpack.c.b16 %v4418, %v4417
    %v4466 = vpack.c.b16 %v4420, %v4419
    %v4467 = vpack.c.b16 %v4422, %v4421
    %v4468 = vpack.c.b16 %v4424, %v4423
    %v4469 = vpack.c.b16 %v4426, %v4425
    %v4470 = vpack.c.b16 %v4428, %v4427
    %v4471 = vpack.c.b16 %v4430, %v4429
    %v4472 = vpack.c.b16 %v4432, %v4431
    %v4473 = vpack.c.b16 %v4434, %v4433
    %v4474 = vpack.c.b16 %v4436, %v4435
    %v4475 = vpack.c.b16 %v4438, %v4437
    %v4476 = vpack.c.b16 %v4440, %v4439
    %v4477 = vpack.c.b16 %v4442, %v4441
    %v4478 = vpack.c.b16 %v4444, %v4443
    %v4479 = vpack.c.b16 %v4446, %v4445
    %v4480 = vpack.c.b16 %v4448, %v4447
    %v4481 = vpack.c.b16 %v4450, %v4449
    %v4482 = vpack.c.b16 %v4452, %v4451
    %v4483 = vpack.c.b16 %v4454, %v4453
    %v4484 = vpack.c.b16 %v4456, %v4455
    %v4485 = vpack.c.b16 %v4458, %v4457
    %v4486 = vpack.c.b16 %v4460, %v4459
    %v4487 = vpack.c.b16 %v4462, %v4461
    %v4488 = vpack.c.b16 %v4464, %v4463
    %4513 = vmatprep.subr.bf16.mxu0 0
    %4514 = vmatpush1.bf16.msra.mxu0 %v4472
    %4515 = vmatprep.subr.bf16.mxu0 0
    %4516 = vmatpush1.bf16.msra.mxu0 %v4471
    %4517 = vmatprep.subr.bf16.mxu0 0
    %4518 = vmatpush1.bf16.msra.mxu0 %v4470
    %4519 = vmatprep.subr.bf16.mxu0 0
    %4520 = vmatpush1.bf16.msra.mxu0 %v4469
    %4521 = vmatprep.subr.bf16.mxu0 0
    %4522 = vmatpush1.bf16.msra.mxu0 %v4468
    %4523 = vmatprep.subr.bf16.mxu0 0
    %4524 = vmatpush1.bf16.msra.mxu0 %v4467
    %4525 = vmatprep.subr.bf16.mxu0 0
    %4526 = vmatpush1.bf16.msra.mxu0 %v4466
    %4527 = vmatprep.subr.bf16.mxu0 0
    %4528 = vmatpush1.bf16.msra.mxu0 %v4465
    %4529 = vmatprep.subr.bf16.mxu0 0
    %4530 = vmatpush2.bf16.msra.mxu0 %v4480
    %4531 = vmatprep.subr.bf16.mxu0 0
    %4532 = vmatpush2.bf16.msra.mxu0 %v4479
    %4533 = vmatprep.subr.bf16.mxu0 0
    %4534 = vmatpush2.bf16.msra.mxu0 %v4478
    %4535 = vmatprep.subr.bf16.mxu0 0
    %4536 = vmatpush2.bf16.msra.mxu0 %v4477
    %4537 = vmatprep.subr.bf16.mxu0 0
    %4538 = vmatpush2.bf16.msra.mxu0 %v4476
    %4539 = vmatprep.subr.bf16.mxu0 0
    %4540 = vmatpush2.bf16.msra.mxu0 %v4475
    %4541 = vmatprep.subr.bf16.mxu0 0
    %4542 = vmatpush2.bf16.msra.mxu0 %v4474
    %4543 = vmatprep.subr.bf16.mxu0 0
    %4544 = vmatpush2.bf16.msra.mxu0 %v4473
    %4545 = vmatprep.mubr.bf16.mxu0 %v4312
    %4546 = vmatmul.mubr.bf16.gmra.mxu0 %v4311
    %v4547 = vpop.f32.mrf.mxu0
    %v4548 = vadd.f32 %v4367, %v4547
    %v4549 = vpop.f32.mrf.mxu0
    %v4550 = vpop.f32.mrf.mxu0
    %v4551 = vpop.f32.mrf.mxu0
    %4552 = vdwg.mxu0
    %4553 = vmatprep.subr.bf16.mxu0 0
    %4554 = vmatpush1.bf16.msra.mxu0 %v4488
    %4555 = vmatprep.subr.bf16.mxu0 0
    %4556 = vmatpush1.bf16.msra.mxu0 %v4487
    %4557 = vmatprep.subr.bf16.mxu0 0
    %4558 = vmatpush1.bf16.msra.mxu0 %v4486
    %4559 = vmatprep.subr.bf16.mxu0 0
    %4560 = vmatpush1.bf16.msra.mxu0 %v4485
    %4561 = vmatprep.subr.bf16.mxu0 0
    %4562 = vmatpush1.bf16.msra.mxu0 %v4484
    %4563 = vmatprep.subr.bf16.mxu0 0
    %4564 = vmatpush1.bf16.msra.mxu0 %v4483
    %4565 = vmatprep.subr.bf16.mxu0 0
    %4566 = vmatpush1.bf16.msra.mxu0 %v4482
    %4567 = vmatprep.subr.bf16.mxu0 0
    %4568 = vmatpush1.bf16.msra.mxu0 %v4481
    %4569 = vmatprep.subr.bf16.mxu0 0
    %4570 = vmatpush2.bf16.msra.mxu0 0
    %4571 = vmatprep.subr.bf16.mxu0 0
    %4572 = vmatpush2.bf16.msra.mxu0 0
    %4573 = vmatprep.subr.bf16.mxu0 0
    %4574 = vmatpush2.bf16.msra.mxu0 0
    %4575 = vmatprep.subr.bf16.mxu0 0
    %4576 = vmatpush2.bf16.msra.mxu0 0
    %4577 = vmatprep.subr.bf16.mxu0 0
    %4578 = vmatpush2.bf16.msra.mxu0 0
    %4579 = vmatprep.subr.bf16.mxu0 0
    %4580 = vmatpush2.bf16.msra.mxu0 0
    %4581 = vmatprep.subr.bf16.mxu0 0
    %4582 = vmatpush2.bf16.msra.mxu0 0
    %4583 = vmatprep.subr.bf16.mxu0 0
    %4584 = vmatpush2.bf16.msra.mxu0 0
    %4585 = vmatprep.mubr.bf16.mxu0 0
    %4586 = vmatmul.mubr.bf16.gmra.mxu0 %v4313
    %v4587 = vpop.f32.mrf.mxu0
    %v4588 = vadd.f32 %v4548, %v4587
    %v4589 = vpop.f32.mrf.mxu0
    %v4590 = vpop.f32.mrf.mxu0
    %v4591 = vpop.f32.mrf.mxu0
    %4592 = vdwg.mxu0
    %v4593 = vmax.f32 %v4588, 0.0
    %v4594 = vpack.c.bf16 %v4593, %v4593
    %v4595 = vld [vmem:[#allocation12] sm:$0xf]
    %v4596 = vld [vmem:[#allocation12 + $0x4] sm:$0xf]
    %v4597 = vld [vmem:[#allocation12 + $0x8] sm:$0xf]
    %v4598 = vld [vmem:[#allocation12 + $0xc] sm:$0xf]
    %v4599 = vld [vmem:[#allocation12 + $0x10] sm:$0xf]
    %v4600 = vld [vmem:[#allocation12 + $0x14] sm:$0xf]
    %v4601 = vld [vmem:[#allocation12 + $0x18] sm:$0xf]
    %v4602 = vld [vmem:[#allocation12 + $0x1c] sm:$0xf]
    %v4603 = vld [vmem:[#allocation12 + $0x20] sm:$0xf]
    %v4604 = vld [vmem:[#allocation12 + $0x24] sm:$0xf]
    %v4605 = vld [vmem:[#allocation12 + $0x28] sm:$0xf]
    %v4606 = vld [vmem:[#allocation12 + $0x2c] sm:$0xf]
    %v4607 = vld [vmem:[#allocation12 + $0x30] sm:$0xf]
    %v4608 = vld [vmem:[#allocation12 + $0x34] sm:$0xf]
    %v4609 = vld [vmem:[#allocation12 + $0x38] sm:$0xf]
    %v4610 = vld [vmem:[#allocation12 + $0x3c] sm:$0xf]
    %v4611 = vld [vmem:[%s16] sm:$0x1]
    %v4613 = vlaneseq
    %v4614 = vshrl.u32 %v4613, 7
    %v4615 = vsub.s32 0, %v4614
    %v4616 = vrot.slane %v4611, %v4615
    %v4634 = vunpack.c.l.b16 %v4595
    %v4635 = vunpack.c.l.b16 %v4596
    %v4636 = vunpack.c.l.b16 %v4597
    %v4637 = vunpack.c.l.b16 %v4598
    %v4638 = vunpack.c.l.b16 %v4599
    %v4639 = vunpack.c.l.b16 %v4600
    %v4640 = vunpack.c.l.b16 %v4601
    %v4641 = vunpack.c.l.b16 %v4602
    %v4642 = vunpack.c.l.b16 %v4603
    %v4643 = vunpack.c.l.b16 %v4604
    %v4644 = vunpack.c.l.b16 %v4605
    %v4645 = vunpack.c.l.b16 %v4606
    %v4646 = vunpack.c.l.b16 %v4607
    %v4647 = vunpack.c.l.b16 %v4608
    %v4648 = vunpack.c.l.b16 %v4609
    %v4649 = vunpack.c.l.b16 %v4610
    %v4650 = vpack.c.b16 %v4635, %v4634
    %v4651 = vpack.c.b16 %v4637, %v4636
    %v4652 = vpack.c.b16 %v4639, %v4638
    %v4653 = vpack.c.b16 %v4641, %v4640
    %v4654 = vpack.c.b16 %v4643, %v4642
    %v4655 = vpack.c.b16 %v4645, %v4644
    %v4656 = vpack.c.b16 %v4647, %v4646
    %v4657 = vpack.c.b16 %v4649, %v4648
    %4666 = vmatprep.subr.bf16.mxu0 0
    %4667 = vmatpush1.bf16.msra.mxu0 %v4657
    %4668 = vmatprep.subr.bf16.mxu0 0
    %4669 = vmatpush1.bf16.msra.mxu0 %v4656
    %4670 = vmatprep.subr.bf16.mxu0 0
    %4671 = vmatpush1.bf16.msra.mxu0 %v4655
    %4672 = vmatprep.subr.bf16.mxu0 0
    %4673 = vmatpush1.bf16.msra.mxu0 %v4654
    %4674 = vmatprep.subr.bf16.mxu0 0
    %4675 = vmatpush1.bf16.msra.mxu0 %v4653
    %4676 = vmatprep.subr.bf16.mxu0 0
    %4677 = vmatpush1.bf16.msra.mxu0 %v4652
    %4678 = vmatprep.subr.bf16.mxu0 0
    %4679 = vmatpush1.bf16.msra.mxu0 %v4651
    %4680 = vmatprep.subr.bf16.mxu0 0
    %4681 = vmatpush1.bf16.msra.mxu0 %v4650
    %4682 = vmatprep.subr.bf16.mxu0 0
    %4683 = vmatpush2.bf16.msra.mxu0 0
    %4684 = vmatprep.subr.bf16.mxu0 0
    %4685 = vmatpush2.bf16.msra.mxu0 0
    %4686 = vmatprep.subr.bf16.mxu0 0
    %4687 = vmatpush2.bf16.msra.mxu0 0
    %4688 = vmatprep.subr.bf16.mxu0 0
    %4689 = vmatpush2.bf16.msra.mxu0 0
    %4690 = vmatprep.subr.bf16.mxu0 0
    %4691 = vmatpush2.bf16.msra.mxu0 0
    %4692 = vmatprep.subr.bf16.mxu0 0
    %4693 = vmatpush2.bf16.msra.mxu0 0
    %4694 = vmatprep.subr.bf16.mxu0 0
    %4695 = vmatpush2.bf16.msra.mxu0 0
    %4696 = vmatprep.subr.bf16.mxu0 0
    %4697 = vmatpush2.bf16.msra.mxu0 0
    %4698 = vmatprep.mubr.bf16.mxu0 0
    %4699 = vmatmul.mubr.bf16.gmra.mxu0 %v4594
    %v4700 = vpop.f32.mrf.mxu0
    %v4701 = vadd.f32 %v4616, %v4700
    %v4702 = vpop.f32.mrf.mxu0
    %v4703 = vpop.f32.mrf.mxu0
    %v4704 = vpop.f32.mrf.mxu0
    %4705 = vdwg.mxu0
    %v4706 = vmax.f32 %v4701, 0.0
    %v4707 = vpack.c.bf16 %v4706, %v4706
    %v4708 = vld [vmem:[#allocation13] sm:$0xf]
    %v4709 = vld [vmem:[#allocation13 + $0x4] sm:$0xf]
    %v4710 = vld [vmem:[#allocation13 + $0x8] sm:$0xf]
    %v4711 = vld [vmem:[#allocation13 + $0xc] sm:$0xf]
    %v4712 = vld [vmem:[#allocation13 + $0x10] sm:$0xf]
    %v4713 = vld [vmem:[#allocation13 + $0x14] sm:$0xf]
    %v4714 = vld [vmem:[#allocation13 + $0x18] sm:$0xf]
    %v4715 = vld [vmem:[#allocation13 + $0x1c] sm:$0xf]
    %v4716 = vld [vmem:[#allocation13 + $0x20] sm:$0xf]
    %v4717 = vld [vmem:[#allocation13 + $0x24] sm:$0xf]
    %v4718 = vld [vmem:[#allocation13 + $0x28] sm:$0xf]
    %v4719 = vld [vmem:[#allocation13 + $0x2c] sm:$0xf]
    %v4720 = vld [vmem:[#allocation13 + $0x30] sm:$0xf]
    %v4721 = vld [vmem:[#allocation13 + $0x34] sm:$0xf]
    %v4722 = vld [vmem:[#allocation13 + $0x38] sm:$0xf]
    %v4723 = vld [vmem:[#allocation13 + $0x3c] sm:$0xf]
    %v4724 = vld [vmem:[%s18] sm:$0x1]
    %v4726 = vlaneseq
    %v4727 = vshrl.u32 %v4726, 7
    %v4728 = vsub.s32 0, %v4727
    %v4729 = vrot.slane %v4724, %v4728
    %v4747 = vunpack.c.l.b16 %v4708
    %v4748 = vunpack.c.l.b16 %v4709
    %v4749 = vunpack.c.l.b16 %v4710
    %v4750 = vunpack.c.l.b16 %v4711
    %v4751 = vunpack.c.l.b16 %v4712
    %v4752 = vunpack.c.l.b16 %v4713
    %v4753 = vunpack.c.l.b16 %v4714
    %v4754 = vunpack.c.l.b16 %v4715
    %v4755 = vunpack.c.l.b16 %v4716
    %v4756 = vunpack.c.l.b16 %v4717
    %v4757 = vunpack.c.l.b16 %v4718
    %v4758 = vunpack.c.l.b16 %v4719
    %v4759 = vunpack.c.l.b16 %v4720
    %v4760 = vunpack.c.l.b16 %v4721
    %v4761 = vunpack.c.l.b16 %v4722
    %v4762 = vunpack.c.l.b16 %v4723
    %v4763 = vpack.c.b16 %v4748, %v4747
    %v4764 = vpack.c.b16 %v4750, %v4749
    %v4765 = vpack.c.b16 %v4752, %v4751
    %v4766 = vpack.c.b16 %v4754, %v4753
    %v4767 = vpack.c.b16 %v4756, %v4755
    %v4768 = vpack.c.b16 %v4758, %v4757
    %v4769 = vpack.c.b16 %v4760, %v4759
    %v4770 = vpack.c.b16 %v4762, %v4761
    %4779 = vmatprep.subr.bf16.mxu0 0
    %4780 = vmatpush1.bf16.msra.mxu0 %v4770
    %4781 = vmatprep.subr.bf16.mxu0 0
    %4782 = vmatpush1.bf16.msra.mxu0 %v4769
    %4783 = vmatprep.subr.bf16.mxu0 0
    %4784 = vmatpush1.bf16.msra.mxu0 %v4768
    %4785 = vmatprep.subr.bf16.mxu0 0
    %4786 = vmatpush1.bf16.msra.mxu0 %v4767
    %4787 = vmatprep.subr.bf16.mxu0 0
    %4788 = vmatpush1.bf16.msra.mxu0 %v4766
    %4789 = vmatprep.subr.bf16.mxu0 0
    %4790 = vmatpush1.bf16.msra.mxu0 %v4765
    %4791 = vmatprep.subr.bf16.mxu0 0
    %4792 = vmatpush1.bf16.msra.mxu0 %v4764
    %4793 = vmatprep.subr.bf16.mxu0 0
    %4794 = vmatpush1.bf16.msra.mxu0 %v4763
    %4795 = vmatprep.subr.bf16.mxu0 0
    %4796 = vmatpush2.bf16.msra.mxu0 0
    %4797 = vmatprep.subr.bf16.mxu0 0
    %4798 = vmatpush2.bf16.msra.mxu0 0
    %4799 = vmatprep.subr.bf16.mxu0 0
    %4800 = vmatpush2.bf16.msra.mxu0 0
    %4801 = vmatprep.subr.bf16.mxu0 0
    %4802 = vmatpush2.bf16.msra.mxu0 0
    %4803 = vmatprep.subr.bf16.mxu0 0
    %4804 = vmatpush2.bf16.msra.mxu0 0
    %4805 = vmatprep.subr.bf16.mxu0 0
    %4806 = vmatpush2.bf16.msra.mxu0 0
    %4807 = vmatprep.subr.bf16.mxu0 0
    %4808 = vmatpush2.bf16.msra.mxu0 0
    %4809 = vmatprep.subr.bf16.mxu0 0
    %4810 = vmatpush2.bf16.msra.mxu0 0
    %4811 = vmatprep.mubr.bf16.mxu0 0
    %4812 = vmatmul.mubr.bf16.gmra.mxu0 %v4707
    %v4813 = vpop.f32.mrf.mxu0
    %v4814 = vadd.f32 %v4729, %v4813
    %v4815 = vpop.f32.mrf.mxu0
    %v4816 = vpop.f32.mrf.mxu0
    %v4817 = vpop.f32.mrf.mxu0
    %4818 = vdwg.mxu0
    %v4819 = vmax.f32 %v4814, 0.0
    %v4820 = vpack.c.bf16 %v4819, %v4819
    %v4821 = vld [vmem:[#allocation15] sm:$0xf]
    %v4822 = vld [vmem:[#allocation15 + $0x4] sm:$0xf]
    %v4823 = vld [vmem:[#allocation15 + $0x8] sm:$0xf]
    %v4824 = vld [vmem:[#allocation15 + $0xc] sm:$0xf]
    %v4825 = vld [vmem:[#allocation15 + $0x10] sm:$0xf]
    %v4826 = vld [vmem:[#allocation15 + $0x14] sm:$0xf]
    %v4827 = vld [vmem:[#allocation15 + $0x18] sm:$0xf]
    %v4828 = vld [vmem:[#allocation15 + $0x1c] sm:$0xf]
    %v4829 = vld [vmem:[#allocation15 + $0x20] sm:$0xf]
    %v4830 = vld [vmem:[#allocation15 + $0x24] sm:$0xf]
    %v4831 = vld [vmem:[#allocation15 + $0x28] sm:$0xf]
    %v4832 = vld [vmem:[#allocation15 + $0x2c] sm:$0xf]
    %v4833 = vld [vmem:[#allocation15 + $0x30] sm:$0xf]
    %v4834 = vld [vmem:[#allocation15 + $0x34] sm:$0xf]
    %v4835 = vld [vmem:[#allocation15 + $0x38] sm:$0xf]
    %v4836 = vld [vmem:[#allocation15 + $0x3c] sm:$0xf]
    %v4837 = vld [vmem:[%s20] sm:$0x1]
    %v4839 = vlaneseq
    %v4840 = vshrl.u32 %v4839, 7
    %v4841 = vsub.s32 0, %v4840
    %v4842 = vrot.slane %v4837, %v4841
    %v4860 = vunpack.c.l.b16 %v4821
    %v4861 = vunpack.c.l.b16 %v4822
    %v4862 = vunpack.c.l.b16 %v4823
    %v4863 = vunpack.c.l.b16 %v4824
    %v4864 = vunpack.c.l.b16 %v4825
    %v4865 = vunpack.c.l.b16 %v4826
    %v4866 = vunpack.c.l.b16 %v4827
    %v4867 = vunpack.c.l.b16 %v4828
    %v4868 = vunpack.c.l.b16 %v4829
    %v4869 = vunpack.c.l.b16 %v4830
    %v4870 = vunpack.c.l.b16 %v4831
    %v4871 = vunpack.c.l.b16 %v4832
    %v4872 = vunpack.c.l.b16 %v4833
    %v4873 = vunpack.c.l.b16 %v4834
    %v4874 = vunpack.c.l.b16 %v4835
    %v4875 = vunpack.c.l.b16 %v4836
    %v4876 = vpack.c.b16 %v4861, %v4860
    %v4877 = vpack.c.b16 %v4863, %v4862
    %v4878 = vpack.c.b16 %v4865, %v4864
    %v4879 = vpack.c.b16 %v4867, %v4866
    %v4880 = vpack.c.b16 %v4869, %v4868
    %v4881 = vpack.c.b16 %v4871, %v4870
    %v4882 = vpack.c.b16 %v4873, %v4872
    %v4883 = vpack.c.b16 %v4875, %v4874
    %4892 = vmatprep.subr.bf16.mxu0 0
    %4893 = vmatpush1.bf16.msra.mxu0 %v4883
    %4894 = vmatprep.subr.bf16.mxu0 0
    %4895 = vmatpush1.bf16.msra.mxu0 %v4882
    %4896 = vmatprep.subr.bf16.mxu0 0
    %4897 = vmatpush1.bf16.msra.mxu0 %v4881
    %4898 = vmatprep.subr.bf16.mxu0 0
    %4899 = vmatpush1.bf16.msra.mxu0 %v4880
    %4900 = vmatprep.subr.bf16.mxu0 0
    %4901 = vmatpush1.bf16.msra.mxu0 %v4879
    %4902 = vmatprep.subr.bf16.mxu0 0
    %4903 = vmatpush1.bf16.msra.mxu0 %v4878
    %4904 = vmatprep.subr.bf16.mxu0 0
    %4905 = vmatpush1.bf16.msra.mxu0 %v4877
    %4906 = vmatprep.subr.bf16.mxu0 0
    %4907 = vmatpush1.bf16.msra.mxu0 %v4876
    %4908 = vmatprep.subr.bf16.mxu0 0
    %4909 = vmatpush2.bf16.msra.mxu0 0
    %4910 = vmatprep.subr.bf16.mxu0 0
    %4911 = vmatpush2.bf16.msra.mxu0 0
    %4912 = vmatprep.subr.bf16.mxu0 0
    %4913 = vmatpush2.bf16.msra.mxu0 0
    %4914 = vmatprep.subr.bf16.mxu0 0
    %4915 = vmatpush2.bf16.msra.mxu0 0
    %4916 = vmatprep.subr.bf16.mxu0 0
    %4917 = vmatpush2.bf16.msra.mxu0 0
    %4918 = vmatprep.subr.bf16.mxu0 0
    %4919 = vmatpush2.bf16.msra.mxu0 0
    %4920 = vmatprep.subr.bf16.mxu0 0
    %4921 = vmatpush2.bf16.msra.mxu0 0
    %4922 = vmatprep.subr.bf16.mxu0 0
    %4923 = vmatpush2.bf16.msra.mxu0 0
    %4924 = vmatprep.mubr.bf16.mxu0 0
    %4925 = vmatmul.mubr.bf16.gmra.mxu0 %v4820
    %v4926 = vpop.f32.mrf.mxu0
    %v4927 = vadd.f32 %v4842, %v4926
    %v4928 = vpop.f32.mrf.mxu0
    %v4929 = vpop.f32.mrf.mxu0
    %v4930 = vpop.f32.mrf.mxu0
    %4931 = vdwg.mxu0
    %4932 = vst [vmem:[%s21] sm:$0xff] %v4927
    // Predicated region
    $region122: #{dnn2_forward.1} parent=1 // pred_check
      _
    $region123: #{dnn2_forward.1} parent=1 // pred_check_branch
      %4934 = sbr.rel (0) target = $region125
    $region124: #{dnn2_forward.1} parent=1 // pred_region
      _
    $region125: #{dnn2_forward.1} parent=1 // pred_fallthru
      _
    // Predicated region
    $region126: #{dnn2_forward.1} parent=1 // pred_check
      _
    $region127: #{dnn2_forward.1} parent=1 // pred_check_branch
      %4936 = sbr.rel (0) target = $region129
    $region128: #{dnn2_forward.1} parent=1 // pred_region
      _
    $region129: #{dnn2_forward.1} parent=1 // pred_fallthru
      _
    %4937 = vsyncpa [#allocation3], 1
    %4938 = vsyncpa [#allocation5], 1
    %4939 = vsyncpa [#allocation8], 1
    %4940 = vsyncpa [#allocation11], 1
    %4941 = vsyncpa [#allocation14], 1

</llo_original>
